<compile_context>
chip_gen: v6e
topology: v6e:2x2x1
jax: 0.10.0
libtpu: 0.0.40
codegen_flags: <defaults>
</compile_context>

<pallas_src>
import functools

import jax
import jax.numpy as jnp
from jax.experimental import pallas as pl
from jax.experimental.pallas import tpu as pltpu


PARAM_ORDER = ("w_pos", "b_pos", "w0s", "b0s", "w1s", "b1s", "wss", "w_c", "b_c")
BLOCKS = ("b0", "b1", "b3", "b4")


def _mm(x, w):
    """bf16 x bf16 matmul on the MXU with fp32 accumulation."""
    return jnp.dot(x.astype(jnp.bfloat16), w.astype(jnp.bfloat16),
                   preferred_element_type=jnp.float32)


def _pointnet_kernel(p_ref, w_pos, b_pos, w0s, b0s, w1s, b1s, wss, w_c, b_c,
                     out_ref, *, bt, t):
    H = w_c.shape[0]
    M = bt * t
    relu = lambda v: jnp.maximum(v, 0.0)

    x = p_ref[...]                                   # (M, dim)  fp32
    net = _mm(x, w_pos[...]) + b_pos[...]            # (M, 2H)

    # ---- block 0: plain ResnetBlockFC(2H -> H), no preceding pool-cat ----
    n = _mm(relu(net), w0s[0]) + b0s[0]              # (M, H)
    dx = _mm(relu(n), w1s[0]) + b1s[0]               # (M, H)
    net = _mm(net, wss[0]) + dx                      # (M, H)

    # ---- blocks 1, 3, 4: pool-cat fused via split weights ----
    for i in (1, 2, 3):
        pooled = jnp.max(net.reshape(bt, t, H), axis=1)          # (bt, H)
        w0 = w0s[i]                                              # (2H, H)
        ws = wss[i]                                              # (2H, H)
        # fc_0(relu(cat([h, pooled]))) = relu(h)@w0_top + relu(pooled)@w0_bot + b0
        n_h = _mm(relu(net), w0[:H])                             # (M, H)
        n_p = _mm(relu(pooled), w0[H:])                          # (bt, H)
        n = (n_h.reshape(bt, t, H) + n_p.reshape(bt, 1, H)).reshape(M, H) + b0s[i]
        dx = _mm(relu(n), w1s[i]) + b1s[i]                       # (M, H)
        # shortcut(cat([h, pooled])) = h@ws_top + pooled@ws_bot  (no bias)
        xs_h = _mm(net, ws[:H])                                  # (M, H)
        xs_p = _mm(pooled, ws[H:])                               # (bt, H)
        net = ((xs_h + dx).reshape(bt, t, H)
               + xs_p.reshape(bt, 1, H)).reshape(M, H)

    # ---- final max-pool over points + fc_c ----
    pooled = jnp.max(net.reshape(bt, t, H), axis=1)              # (bt, H)
    c = _mm(relu(pooled), w_c[...]) + b_c[...]                   # (bt, out_dim)
    out_ref[...] = c.astype(out_ref.dtype)


def init_params(key, dim, hidden, out_dim):
    """fp32 parameters in the PyTorch per-block layout."""
    H = hidden
    names_shapes = [("w_pos", (dim, 2 * H)), ("b_pos", (1, 2 * H))]
    for blk in BLOCKS:
        names_shapes += [
            (f"{blk}_w0", (2 * H, H)), (f"{blk}_b0", (1, H)),
            (f"{blk}_w1", (H, H)),     (f"{blk}_b1", (1, H)),
            (f"{blk}_ws", (2 * H, H)),
        ]
    names_shapes += [("w_c", (H, out_dim)), ("b_c", (1, out_dim))]
    keys = jax.random.split(key, len(names_shapes))
    return {n: 0.1 * jax.random.normal(k, s, jnp.float32)
            for k, (n, s) in zip(keys, names_shapes)}


def pack_params(params):
    """Stack per-block params and cast weights to bf16 for the MXU."""
    bf16, f32 = jnp.bfloat16, jnp.float32
    packed = {
        "w_pos": params["w_pos"].astype(bf16),
        "b_pos": params["b_pos"].astype(f32),
        "w0s": jnp.stack([params[b + "_w0"] for b in BLOCKS]).astype(bf16),  # (4,2H,H)
        "b0s": jnp.stack([params[b + "_b0"] for b in BLOCKS]).astype(f32),   # (4,1,H)
        "w1s": jnp.stack([params[b + "_w1"] for b in BLOCKS]).astype(bf16),  # (4,H,H)
        "b1s": jnp.stack([params[b + "_b1"] for b in BLOCKS]).astype(f32),   # (4,1,H)
        "wss": jnp.stack([params[b + "_ws"] for b in BLOCKS]).astype(bf16),  # (4,2H,H)
        "w_c": params["w_c"].astype(bf16),
        "b_c": params["b_c"].astype(f32),
    }
    return [packed[n] for n in PARAM_ORDER]


def resnet_pointnet_pallas(p, params, b_tile=8):
    """p: (B, dim, T) as in the PyTorch module."""
    B, dim, T = p.shape
    out_dim = params["w_c"].shape[1]

    n_steps = pl.cdiv(B, b_tile)
    B_pad = n_steps * b_tile

    # (B, dim, T) -> (B_pad*T, dim): batch folded into the matmul M dimension.
    p_btd = jnp.transpose(p, (0, 2, 1)).astype(jnp.float32)      # (B, T, dim)
    if B_pad != B:
        p_btd = jnp.pad(p_btd, ((0, B_pad - B), (0, 0), (0, 0)))
    p_flat = p_btd.reshape(B_pad * T, dim)

    flat_params = pack_params(params)

    def const_spec(a):
        return pl.BlockSpec(a.shape, lambda b, nd=a.ndim: (0,) * nd)

    in_specs = ([pl.BlockSpec((b_tile * T, dim), lambda b: (b, 0))]
                + [const_spec(a) for a in flat_params])
    out_spec = pl.BlockSpec((b_tile, out_dim), lambda b: (b, 0))

    kernel = functools.partial(_pointnet_kernel, bt=b_tile, t=T)

    out = pl.pallas_call(
        kernel,
        out_shape=jax.ShapeDtypeStruct((B_pad, out_dim), jnp.float32),
        grid_spec=pltpu.PrefetchScalarGridSpec(
            num_scalar_prefetch=0,
            grid=(n_steps,),
            in_specs=in_specs,
            out_specs=out_spec),
        compiler_params=pltpu.CompilerParams(
            dimension_semantics=("parallel",)),
        # TODO(synk): at production sizes (large T / H) set vmem_limit_bytes and
        # tile T with a running-max accumulator to fit v7x's 64 MiB VMEM.
    )(p_flat, *flat_params)
    return out[:B]


def resnet_pointnet_reference(p, params):
    """Plain-JAX reference mirroring the PyTorch forward exactly (concat/pool
    structure untouched), at the same bf16-matmul / fp32-accum precision."""
    f32, bf16 = jnp.float32, jnp.bfloat16
    x = jnp.transpose(p, (0, 2, 1)).astype(f32)                  # (B, T, dim)

    def lin(h, w, b=None):
        y = jnp.einsum("btk,kh->bth", h.astype(bf16), w.astype(bf16),
                       preferred_element_type=f32)
        return y if b is None else y + b

    def block(h, pfx):
        net = lin(jax.nn.relu(h), params[pfx + "_w0"], params[pfx + "_b0"])
        dx = lin(jax.nn.relu(net), params[pfx + "_w1"], params[pfx + "_b1"])
        return lin(h, params[pfx + "_ws"]) + dx

    def poolcat(h):
        pooled = jnp.max(h, axis=1, keepdims=True)
        return jnp.concatenate([h, jnp.broadcast_to(pooled, h.shape)], axis=2)

    net = lin(x, params["w_pos"], params["b_pos"])
    net = block(net, "b0"); net = poolcat(net)
    net = block(net, "b1"); net = poolcat(net)
    net = block(net, "b3"); net = poolcat(net)
    net = block(net, "b4")
    net = jnp.max(net, axis=1)                                   # (B, H)
    return (jnp.dot(jax.nn.relu(net).astype(bf16), params["w_c"].astype(bf16),
                    preferred_element_type=f32) + params["b_c"])


if __name__ == "__main__":
    B, DIM, T = 16, 3, 8          # batch, coord dim, num points
    HIDDEN, OUT_DIM = 32, 16
    B_TILE = 8                    # grid = (2,): keeps both v7x TensorCores busy

    key = jax.random.PRNGKey(0)
    k_p, k_w = jax.random.split(key)
    p = jax.random.normal(k_p, (B, DIM, T), jnp.float32)
    params = init_params(k_w, DIM, HIDDEN, OUT_DIM)

    out = resnet_pointnet_pallas(p, params, b_tile=B_TILE)
    out = jax.block_until_ready(out)

    ref = resnet_pointnet_reference(p, params)
    assert out.shape == (B, OUT_DIM)
    assert jnp.allclose(out, ref, rtol=1e-2, atol=1e-2), "mismatch vs reference"

    print("KERNEL_OK")
</pallas_src>

<mosaic_0001>
module attributes {stable_mosaic.version = 11 : i64} {
  func.func @_pointnet_kernel(%arg0: i32, %arg1: memref<64x3xf32, #tpu.memory_space<vmem>>, %arg2: memref<3x64xbf16, #tpu.memory_space<vmem>>, %arg3: memref<1x64xf32, #tpu.memory_space<vmem>>, %arg4: memref<4x64x32xbf16, #tpu.memory_space<vmem>>, %arg5: memref<4x1x32xf32, #tpu.memory_space<vmem>>, %arg6: memref<4x32x32xbf16, #tpu.memory_space<vmem>>, %arg7: memref<4x1x32xf32, #tpu.memory_space<vmem>>, %arg8: memref<4x64x32xbf16, #tpu.memory_space<vmem>>, %arg9: memref<32x16xbf16, #tpu.memory_space<vmem>>, %arg10: memref<1x16xf32, #tpu.memory_space<vmem>>, %arg11: memref<8x16xf32, #tpu.memory_space<vmem>>) attributes {dimension_semantics = [#tpu.dimension_semantics<parallel>], iteration_bounds = array<i64: 2>, scalar_prefetch = 0 : i64, scratch_operands = 0 : i64, tpu.core_type = #tpu.core_type<tc>, window_params = [{transform_indices = @transform_0, window_bounds = array<i64: 64, 3>}, {pipeline_mode = #tpu.pipeline_mode<synchronous>, transform_indices = @transform_1, window_bounds = array<i64: 3, 64>}, {pipeline_mode = #tpu.pipeline_mode<synchronous>, transform_indices = @transform_2, window_bounds = array<i64: 1, 64>}, {pipeline_mode = #tpu.pipeline_mode<synchronous>, transform_indices = @transform_3, window_bounds = array<i64: 4, 64, 32>}, {pipeline_mode = #tpu.pipeline_mode<synchronous>, transform_indices = @transform_4, window_bounds = array<i64: 4, 1, 32>}, {pipeline_mode = #tpu.pipeline_mode<synchronous>, transform_indices = @transform_5, window_bounds = array<i64: 4, 32, 32>}, {pipeline_mode = #tpu.pipeline_mode<synchronous>, transform_indices = @transform_6, window_bounds = array<i64: 4, 1, 32>}, {pipeline_mode = #tpu.pipeline_mode<synchronous>, transform_indices = @transform_7, window_bounds = array<i64: 4, 64, 32>}, {pipeline_mode = #tpu.pipeline_mode<synchronous>, transform_indices = @transform_8, window_bounds = array<i64: 32, 16>}, {pipeline_mode = #tpu.pipeline_mode<synchronous>, transform_indices = @transform_9, window_bounds = array<i64: 1, 16>}, {transform_indices = @transform_10, window_bounds = array<i64: 8, 16>}]} {
    %c0 = arith.constant 0 : index
    %c0_0 = arith.constant 0 : index
    %0 = vector.load %arg1[%c0, %c0_0] : memref<64x3xf32, #tpu.memory_space<vmem>>, vector<64x3xf32>
    %c0_1 = arith.constant 0 : index
    %c0_2 = arith.constant 0 : index
    %1 = vector.load %arg2[%c0_1, %c0_2] : memref<3x64xbf16, #tpu.memory_space<vmem>>, vector<3x64xbf16>
    %2 = arith.truncf %0 : vector<64x3xf32> to vector<64x3xbf16>
    %cst = arith.constant dense<0.000000e+00> : vector<64x64xf32>
    %3 = tpu.matmul %2, %1, %cst {dimension_numbers = #tpu.dot_dimension_numbers<[1], [0], [0], [1], [0, 0, 1, 1], [], []>} : vector<64x3xbf16>, vector<3x64xbf16>, vector<64x64xf32> -> vector<64x64xf32>
    %c0_3 = arith.constant 0 : index
    %c0_4 = arith.constant 0 : index
    %4 = vector.load %arg3[%c0_3, %c0_4] : memref<1x64xf32, #tpu.memory_space<vmem>>, vector<1x64xf32>
    %5 = vector.broadcast %4 : vector<1x64xf32> to vector<64x64xf32>
    %6 = arith.addf %3, %5 : vector<64x64xf32>
    %cst_5 = arith.constant 0.000000e+00 : f32
    %7 = vector.broadcast %cst_5 : f32 to vector<64x64xf32>
    %8 = arith.maximumf %6, %7 : vector<64x64xf32>
    %c0_6 = arith.constant 0 : index
    %c0_7 = arith.constant 0 : index
    %c0_8 = arith.constant 0 : index
    %9 = vector.load %arg4[%c0_6, %c0_7, %c0_8] : memref<4x64x32xbf16, #tpu.memory_space<vmem>>, vector<1x64x32xbf16>
    %10 = vector.shape_cast %9 : vector<1x64x32xbf16> to vector<64x32xbf16>
    %11 = arith.truncf %8 : vector<64x64xf32> to vector<64x64xbf16>
    %cst_9 = arith.constant dense<0.000000e+00> : vector<64x32xf32>
    %12 = tpu.matmul %11, %10, %cst_9 {dimension_numbers = #tpu.dot_dimension_numbers<[1], [0], [0], [1], [0, 0, 1, 1], [], []>} : vector<64x64xbf16>, vector<64x32xbf16>, vector<64x32xf32> -> vector<64x32xf32>
    %c0_10 = arith.constant 0 : index
    %c0_11 = arith.constant 0 : index
    %c0_12 = arith.constant 0 : index
    %13 = vector.load %arg5[%c0_10, %c0_11, %c0_12] : memref<4x1x32xf32, #tpu.memory_space<vmem>>, vector<1x1x32xf32>
    %14 = vector.shape_cast %13 : vector<1x1x32xf32> to vector<1x32xf32>
    %15 = vector.broadcast %14 : vector<1x32xf32> to vector<64x32xf32>
    %16 = arith.addf %12, %15 : vector<64x32xf32>
    %cst_13 = arith.constant 0.000000e+00 : f32
    %17 = vector.broadcast %cst_13 : f32 to vector<64x32xf32>
    %18 = arith.maximumf %16, %17 : vector<64x32xf32>
    %c0_14 = arith.constant 0 : index
    %c0_15 = arith.constant 0 : index
    %c0_16 = arith.constant 0 : index
    %19 = vector.load %arg6[%c0_14, %c0_15, %c0_16] : memref<4x32x32xbf16, #tpu.memory_space<vmem>>, vector<1x32x32xbf16>
    %20 = vector.shape_cast %19 : vector<1x32x32xbf16> to vector<32x32xbf16>
    %21 = arith.truncf %18 : vector<64x32xf32> to vector<64x32xbf16>
    %cst_17 = arith.constant dense<0.000000e+00> : vector<64x32xf32>
    %22 = tpu.matmul %21, %20, %cst_17 {dimension_numbers = #tpu.dot_dimension_numbers<[1], [0], [0], [1], [0, 0, 1, 1], [], []>} : vector<64x32xbf16>, vector<32x32xbf16>, vector<64x32xf32> -> vector<64x32xf32>
    %c0_18 = arith.constant 0 : index
    %c0_19 = arith.constant 0 : index
    %c0_20 = arith.constant 0 : index
    %23 = vector.load %arg7[%c0_18, %c0_19, %c0_20] : memref<4x1x32xf32, #tpu.memory_space<vmem>>, vector<1x1x32xf32>
    %24 = vector.shape_cast %23 : vector<1x1x32xf32> to vector<1x32xf32>
    %25 = vector.broadcast %24 : vector<1x32xf32> to vector<64x32xf32>
    %26 = arith.addf %22, %25 : vector<64x32xf32>
    %c0_21 = arith.constant 0 : index
    %c0_22 = arith.constant 0 : index
    %c0_23 = arith.constant 0 : index
    %27 = vector.load %arg8[%c0_21, %c0_22, %c0_23] : memref<4x64x32xbf16, #tpu.memory_space<vmem>>, vector<1x64x32xbf16>
    %28 = vector.shape_cast %27 : vector<1x64x32xbf16> to vector<64x32xbf16>
    %29 = arith.truncf %6 : vector<64x64xf32> to vector<64x64xbf16>
    %cst_24 = arith.constant dense<0.000000e+00> : vector<64x32xf32>
    %30 = tpu.matmul %29, %28, %cst_24 {dimension_numbers = #tpu.dot_dimension_numbers<[1], [0], [0], [1], [0, 0, 1, 1], [], []>} : vector<64x64xbf16>, vector<64x32xbf16>, vector<64x32xf32> -> vector<64x32xf32>
    %31 = arith.addf %30, %26 : vector<64x32xf32>
    %32 = vector.shape_cast %31 : vector<64x32xf32> to vector<8x8x32xf32>
    %cst_25 = arith.constant dense<0xFF800000> : vector<8x32xf32>
    %33 = vector.multi_reduction <maximumf>, %32, %cst_25 [1] : vector<8x8x32xf32> to vector<8x32xf32>
    %c1 = arith.constant 1 : index
    %c0_26 = arith.constant 0 : index
    %c0_27 = arith.constant 0 : index
    %34 = vector.load %arg4[%c1, %c0_26, %c0_27] : memref<4x64x32xbf16, #tpu.memory_space<vmem>>, vector<1x64x32xbf16>
    %35 = vector.shape_cast %34 : vector<1x64x32xbf16> to vector<64x32xbf16>
    %c1_28 = arith.constant 1 : index
    %c0_29 = arith.constant 0 : index
    %c0_30 = arith.constant 0 : index
    %36 = vector.load %arg8[%c1_28, %c0_29, %c0_30] : memref<4x64x32xbf16, #tpu.memory_space<vmem>>, vector<1x64x32xbf16>
    %37 = vector.shape_cast %36 : vector<1x64x32xbf16> to vector<64x32xbf16>
    %cst_31 = arith.constant 0.000000e+00 : f32
    %38 = vector.broadcast %cst_31 : f32 to vector<64x32xf32>
    %39 = arith.maximumf %31, %38 : vector<64x32xf32>
    %40 = vector.extract_strided_slice %35 {offsets = [0, 0], sizes = [32, 32], strides = [1, 1]} : vector<64x32xbf16> to vector<32x32xbf16>
    %41 = arith.truncf %39 : vector<64x32xf32> to vector<64x32xbf16>
    %cst_32 = arith.constant dense<0.000000e+00> : vector<64x32xf32>
    %42 = tpu.matmul %41, %40, %cst_32 {dimension_numbers = #tpu.dot_dimension_numbers<[1], [0], [0], [1], [0, 0, 1, 1], [], []>} : vector<64x32xbf16>, vector<32x32xbf16>, vector<64x32xf32> -> vector<64x32xf32>
    %cst_33 = arith.constant 0.000000e+00 : f32
    %43 = vector.broadcast %cst_33 : f32 to vector<8x32xf32>
    %44 = arith.maximumf %33, %43 : vector<8x32xf32>
    %45 = vector.extract_strided_slice %35 {offsets = [32, 0], sizes = [32, 32], strides = [1, 1]} : vector<64x32xbf16> to vector<32x32xbf16>
    %46 = arith.truncf %44 : vector<8x32xf32> to vector<8x32xbf16>
    %cst_34 = arith.constant dense<0.000000e+00> : vector<8x32xf32>
    %47 = tpu.matmul %46, %45, %cst_34 {dimension_numbers = #tpu.dot_dimension_numbers<[1], [0], [0], [1], [0, 0, 1, 1], [], []>} : vector<8x32xbf16>, vector<32x32xbf16>, vector<8x32xf32> -> vector<8x32xf32>
    %48 = vector.shape_cast %42 : vector<64x32xf32> to vector<8x8x32xf32>
    %49 = vector.shape_cast %47 : vector<8x32xf32> to vector<8x1x32xf32>
    %50 = vector.broadcast %49 : vector<8x1x32xf32> to vector<8x8x32xf32>
    %51 = arith.addf %48, %50 : vector<8x8x32xf32>
    %52 = vector.shape_cast %51 : vector<8x8x32xf32> to vector<64x32xf32>
    %c1_35 = arith.constant 1 : index
    %c0_36 = arith.constant 0 : index
    %c0_37 = arith.constant 0 : index
    %53 = vector.load %arg5[%c1_35, %c0_36, %c0_37] : memref<4x1x32xf32, #tpu.memory_space<vmem>>, vector<1x1x32xf32>
    %54 = vector.shape_cast %53 : vector<1x1x32xf32> to vector<1x32xf32>
    %55 = vector.broadcast %54 : vector<1x32xf32> to vector<64x32xf32>
    %56 = arith.addf %52, %55 : vector<64x32xf32>
    %cst_38 = arith.constant 0.000000e+00 : f32
    %57 = vector.broadcast %cst_38 : f32 to vector<64x32xf32>
    %58 = arith.maximumf %56, %57 : vector<64x32xf32>
    %c1_39 = arith.constant 1 : index
    %c0_40 = arith.constant 0 : index
    %c0_41 = arith.constant 0 : index
    %59 = vector.load %arg6[%c1_39, %c0_40, %c0_41] : memref<4x32x32xbf16, #tpu.memory_space<vmem>>, vector<1x32x32xbf16>
    %60 = vector.shape_cast %59 : vector<1x32x32xbf16> to vector<32x32xbf16>
    %61 = arith.truncf %58 : vector<64x32xf32> to vector<64x32xbf16>
    %cst_42 = arith.constant dense<0.000000e+00> : vector<64x32xf32>
    %62 = tpu.matmul %61, %60, %cst_42 {dimension_numbers = #tpu.dot_dimension_numbers<[1], [0], [0], [1], [0, 0, 1, 1], [], []>} : vector<64x32xbf16>, vector<32x32xbf16>, vector<64x32xf32> -> vector<64x32xf32>
    %c1_43 = arith.constant 1 : index
    %c0_44 = arith.constant 0 : index
    %c0_45 = arith.constant 0 : index
    %63 = vector.load %arg7[%c1_43, %c0_44, %c0_45] : memref<4x1x32xf32, #tpu.memory_space<vmem>>, vector<1x1x32xf32>
    %64 = vector.shape_cast %63 : vector<1x1x32xf32> to vector<1x32xf32>
    %65 = vector.broadcast %64 : vector<1x32xf32> to vector<64x32xf32>
    %66 = arith.addf %62, %65 : vector<64x32xf32>
    %67 = vector.extract_strided_slice %37 {offsets = [0, 0], sizes = [32, 32], strides = [1, 1]} : vector<64x32xbf16> to vector<32x32xbf16>
    %68 = arith.truncf %31 : vector<64x32xf32> to vector<64x32xbf16>
    %cst_46 = arith.constant dense<0.000000e+00> : vector<64x32xf32>
    %69 = tpu.matmul %68, %67, %cst_46 {dimension_numbers = #tpu.dot_dimension_numbers<[1], [0], [0], [1], [0, 0, 1, 1], [], []>} : vector<64x32xbf16>, vector<32x32xbf16>, vector<64x32xf32> -> vector<64x32xf32>
    %70 = vector.extract_strided_slice %37 {offsets = [32, 0], sizes = [32, 32], strides = [1, 1]} : vector<64x32xbf16> to vector<32x32xbf16>
    %71 = arith.truncf %33 : vector<8x32xf32> to vector<8x32xbf16>
    %cst_47 = arith.constant dense<0.000000e+00> : vector<8x32xf32>
    %72 = tpu.matmul %71, %70, %cst_47 {dimension_numbers = #tpu.dot_dimension_numbers<[1], [0], [0], [1], [0, 0, 1, 1], [], []>} : vector<8x32xbf16>, vector<32x32xbf16>, vector<8x32xf32> -> vector<8x32xf32>
    %73 = arith.addf %69, %66 : vector<64x32xf32>
    %74 = vector.shape_cast %73 : vector<64x32xf32> to vector<8x8x32xf32>
    %75 = vector.shape_cast %72 : vector<8x32xf32> to vector<8x1x32xf32>
    %76 = vector.broadcast %75 : vector<8x1x32xf32> to vector<8x8x32xf32>
    %77 = arith.addf %74, %76 : vector<8x8x32xf32>
    %78 = vector.shape_cast %77 : vector<8x8x32xf32> to vector<64x32xf32>
    %79 = vector.shape_cast %78 : vector<64x32xf32> to vector<8x8x32xf32>
    %cst_48 = arith.constant dense<0xFF800000> : vector<8x32xf32>
    %80 = vector.multi_reduction <maximumf>, %79, %cst_48 [1] : vector<8x8x32xf32> to vector<8x32xf32>
    %c2 = arith.constant 2 : index
    %c0_49 = arith.constant 0 : index
    %c0_50 = arith.constant 0 : index
    %81 = vector.load %arg4[%c2, %c0_49, %c0_50] : memref<4x64x32xbf16, #tpu.memory_space<vmem>>, vector<1x64x32xbf16>
    %82 = vector.shape_cast %81 : vector<1x64x32xbf16> to vector<64x32xbf16>
    %c2_51 = arith.constant 2 : index
    %c0_52 = arith.constant 0 : index
    %c0_53 = arith.constant 0 : index
    %83 = vector.load %arg8[%c2_51, %c0_52, %c0_53] : memref<4x64x32xbf16, #tpu.memory_space<vmem>>, vector<1x64x32xbf16>
    %84 = vector.shape_cast %83 : vector<1x64x32xbf16> to vector<64x32xbf16>
    %cst_54 = arith.constant 0.000000e+00 : f32
    %85 = vector.broadcast %cst_54 : f32 to vector<64x32xf32>
    %86 = arith.maximumf %78, %85 : vector<64x32xf32>
    %87 = vector.extract_strided_slice %82 {offsets = [0, 0], sizes = [32, 32], strides = [1, 1]} : vector<64x32xbf16> to vector<32x32xbf16>
    %88 = arith.truncf %86 : vector<64x32xf32> to vector<64x32xbf16>
    %cst_55 = arith.constant dense<0.000000e+00> : vector<64x32xf32>
    %89 = tpu.matmul %88, %87, %cst_55 {dimension_numbers = #tpu.dot_dimension_numbers<[1], [0], [0], [1], [0, 0, 1, 1], [], []>} : vector<64x32xbf16>, vector<32x32xbf16>, vector<64x32xf32> -> vector<64x32xf32>
    %cst_56 = arith.constant 0.000000e+00 : f32
    %90 = vector.broadcast %cst_56 : f32 to vector<8x32xf32>
    %91 = arith.maximumf %80, %90 : vector<8x32xf32>
    %92 = vector.extract_strided_slice %82 {offsets = [32, 0], sizes = [32, 32], strides = [1, 1]} : vector<64x32xbf16> to vector<32x32xbf16>
    %93 = arith.truncf %91 : vector<8x32xf32> to vector<8x32xbf16>
    %cst_57 = arith.constant dense<0.000000e+00> : vector<8x32xf32>
    %94 = tpu.matmul %93, %92, %cst_57 {dimension_numbers = #tpu.dot_dimension_numbers<[1], [0], [0], [1], [0, 0, 1, 1], [], []>} : vector<8x32xbf16>, vector<32x32xbf16>, vector<8x32xf32> -> vector<8x32xf32>
    %95 = vector.shape_cast %89 : vector<64x32xf32> to vector<8x8x32xf32>
    %96 = vector.shape_cast %94 : vector<8x32xf32> to vector<8x1x32xf32>
    %97 = vector.broadcast %96 : vector<8x1x32xf32> to vector<8x8x32xf32>
    %98 = arith.addf %95, %97 : vector<8x8x32xf32>
    %99 = vector.shape_cast %98 : vector<8x8x32xf32> to vector<64x32xf32>
    %c2_58 = arith.constant 2 : index
    %c0_59 = arith.constant 0 : index
    %c0_60 = arith.constant 0 : index
    %100 = vector.load %arg5[%c2_58, %c0_59, %c0_60] : memref<4x1x32xf32, #tpu.memory_space<vmem>>, vector<1x1x32xf32>
    %101 = vector.shape_cast %100 : vector<1x1x32xf32> to vector<1x32xf32>
    %102 = vector.broadcast %101 : vector<1x32xf32> to vector<64x32xf32>
    %103 = arith.addf %99, %102 : vector<64x32xf32>
    %cst_61 = arith.constant 0.000000e+00 : f32
    %104 = vector.broadcast %cst_61 : f32 to vector<64x32xf32>
    %105 = arith.maximumf %103, %104 : vector<64x32xf32>
    %c2_62 = arith.constant 2 : index
    %c0_63 = arith.constant 0 : index
    %c0_64 = arith.constant 0 : index
    %106 = vector.load %arg6[%c2_62, %c0_63, %c0_64] : memref<4x32x32xbf16, #tpu.memory_space<vmem>>, vector<1x32x32xbf16>
    %107 = vector.shape_cast %106 : vector<1x32x32xbf16> to vector<32x32xbf16>
    %108 = arith.truncf %105 : vector<64x32xf32> to vector<64x32xbf16>
    %cst_65 = arith.constant dense<0.000000e+00> : vector<64x32xf32>
    %109 = tpu.matmul %108, %107, %cst_65 {dimension_numbers = #tpu.dot_dimension_numbers<[1], [0], [0], [1], [0, 0, 1, 1], [], []>} : vector<64x32xbf16>, vector<32x32xbf16>, vector<64x32xf32> -> vector<64x32xf32>
    %c2_66 = arith.constant 2 : index
    %c0_67 = arith.constant 0 : index
    %c0_68 = arith.constant 0 : index
    %110 = vector.load %arg7[%c2_66, %c0_67, %c0_68] : memref<4x1x32xf32, #tpu.memory_space<vmem>>, vector<1x1x32xf32>
    %111 = vector.shape_cast %110 : vector<1x1x32xf32> to vector<1x32xf32>
    %112 = vector.broadcast %111 : vector<1x32xf32> to vector<64x32xf32>
    %113 = arith.addf %109, %112 : vector<64x32xf32>
    %114 = vector.extract_strided_slice %84 {offsets = [0, 0], sizes = [32, 32], strides = [1, 1]} : vector<64x32xbf16> to vector<32x32xbf16>
    %115 = arith.truncf %78 : vector<64x32xf32> to vector<64x32xbf16>
    %cst_69 = arith.constant dense<0.000000e+00> : vector<64x32xf32>
    %116 = tpu.matmul %115, %114, %cst_69 {dimension_numbers = #tpu.dot_dimension_numbers<[1], [0], [0], [1], [0, 0, 1, 1], [], []>} : vector<64x32xbf16>, vector<32x32xbf16>, vector<64x32xf32> -> vector<64x32xf32>
    %117 = vector.extract_strided_slice %84 {offsets = [32, 0], sizes = [32, 32], strides = [1, 1]} : vector<64x32xbf16> to vector<32x32xbf16>
    %118 = arith.truncf %80 : vector<8x32xf32> to vector<8x32xbf16>
    %cst_70 = arith.constant dense<0.000000e+00> : vector<8x32xf32>
    %119 = tpu.matmul %118, %117, %cst_70 {dimension_numbers = #tpu.dot_dimension_numbers<[1], [0], [0], [1], [0, 0, 1, 1], [], []>} : vector<8x32xbf16>, vector<32x32xbf16>, vector<8x32xf32> -> vector<8x32xf32>
    %120 = arith.addf %116, %113 : vector<64x32xf32>
    %121 = vector.shape_cast %120 : vector<64x32xf32> to vector<8x8x32xf32>
    %122 = vector.shape_cast %119 : vector<8x32xf32> to vector<8x1x32xf32>
    %123 = vector.broadcast %122 : vector<8x1x32xf32> to vector<8x8x32xf32>
    %124 = arith.addf %121, %123 : vector<8x8x32xf32>
    %125 = vector.shape_cast %124 : vector<8x8x32xf32> to vector<64x32xf32>
    %126 = vector.shape_cast %125 : vector<64x32xf32> to vector<8x8x32xf32>
    %cst_71 = arith.constant dense<0xFF800000> : vector<8x32xf32>
    %127 = vector.multi_reduction <maximumf>, %126, %cst_71 [1] : vector<8x8x32xf32> to vector<8x32xf32>
    %c3 = arith.constant 3 : index
    %c0_72 = arith.constant 0 : index
    %c0_73 = arith.constant 0 : index
    %128 = vector.load %arg4[%c3, %c0_72, %c0_73] : memref<4x64x32xbf16, #tpu.memory_space<vmem>>, vector<1x64x32xbf16>
    %129 = vector.shape_cast %128 : vector<1x64x32xbf16> to vector<64x32xbf16>
    %c3_74 = arith.constant 3 : index
    %c0_75 = arith.constant 0 : index
    %c0_76 = arith.constant 0 : index
    %130 = vector.load %arg8[%c3_74, %c0_75, %c0_76] : memref<4x64x32xbf16, #tpu.memory_space<vmem>>, vector<1x64x32xbf16>
    %131 = vector.shape_cast %130 : vector<1x64x32xbf16> to vector<64x32xbf16>
    %cst_77 = arith.constant 0.000000e+00 : f32
    %132 = vector.broadcast %cst_77 : f32 to vector<64x32xf32>
    %133 = arith.maximumf %125, %132 : vector<64x32xf32>
    %134 = vector.extract_strided_slice %129 {offsets = [0, 0], sizes = [32, 32], strides = [1, 1]} : vector<64x32xbf16> to vector<32x32xbf16>
    %135 = arith.truncf %133 : vector<64x32xf32> to vector<64x32xbf16>
    %cst_78 = arith.constant dense<0.000000e+00> : vector<64x32xf32>
    %136 = tpu.matmul %135, %134, %cst_78 {dimension_numbers = #tpu.dot_dimension_numbers<[1], [0], [0], [1], [0, 0, 1, 1], [], []>} : vector<64x32xbf16>, vector<32x32xbf16>, vector<64x32xf32> -> vector<64x32xf32>
    %cst_79 = arith.constant 0.000000e+00 : f32
    %137 = vector.broadcast %cst_79 : f32 to vector<8x32xf32>
    %138 = arith.maximumf %127, %137 : vector<8x32xf32>
    %139 = vector.extract_strided_slice %129 {offsets = [32, 0], sizes = [32, 32], strides = [1, 1]} : vector<64x32xbf16> to vector<32x32xbf16>
    %140 = arith.truncf %138 : vector<8x32xf32> to vector<8x32xbf16>
    %cst_80 = arith.constant dense<0.000000e+00> : vector<8x32xf32>
    %141 = tpu.matmul %140, %139, %cst_80 {dimension_numbers = #tpu.dot_dimension_numbers<[1], [0], [0], [1], [0, 0, 1, 1], [], []>} : vector<8x32xbf16>, vector<32x32xbf16>, vector<8x32xf32> -> vector<8x32xf32>
    %142 = vector.shape_cast %136 : vector<64x32xf32> to vector<8x8x32xf32>
    %143 = vector.shape_cast %141 : vector<8x32xf32> to vector<8x1x32xf32>
    %144 = vector.broadcast %143 : vector<8x1x32xf32> to vector<8x8x32xf32>
    %145 = arith.addf %142, %144 : vector<8x8x32xf32>
    %146 = vector.shape_cast %145 : vector<8x8x32xf32> to vector<64x32xf32>
    %c3_81 = arith.constant 3 : index
    %c0_82 = arith.constant 0 : index
    %c0_83 = arith.constant 0 : index
    %147 = vector.load %arg5[%c3_81, %c0_82, %c0_83] : memref<4x1x32xf32, #tpu.memory_space<vmem>>, vector<1x1x32xf32>
    %148 = vector.shape_cast %147 : vector<1x1x32xf32> to vector<1x32xf32>
    %149 = vector.broadcast %148 : vector<1x32xf32> to vector<64x32xf32>
    %150 = arith.addf %146, %149 : vector<64x32xf32>
    %cst_84 = arith.constant 0.000000e+00 : f32
    %151 = vector.broadcast %cst_84 : f32 to vector<64x32xf32>
    %152 = arith.maximumf %150, %151 : vector<64x32xf32>
    %c3_85 = arith.constant 3 : index
    %c0_86 = arith.constant 0 : index
    %c0_87 = arith.constant 0 : index
    %153 = vector.load %arg6[%c3_85, %c0_86, %c0_87] : memref<4x32x32xbf16, #tpu.memory_space<vmem>>, vector<1x32x32xbf16>
    %154 = vector.shape_cast %153 : vector<1x32x32xbf16> to vector<32x32xbf16>
    %155 = arith.truncf %152 : vector<64x32xf32> to vector<64x32xbf16>
    %cst_88 = arith.constant dense<0.000000e+00> : vector<64x32xf32>
    %156 = tpu.matmul %155, %154, %cst_88 {dimension_numbers = #tpu.dot_dimension_numbers<[1], [0], [0], [1], [0, 0, 1, 1], [], []>} : vector<64x32xbf16>, vector<32x32xbf16>, vector<64x32xf32> -> vector<64x32xf32>
    %c3_89 = arith.constant 3 : index
    %c0_90 = arith.constant 0 : index
    %c0_91 = arith.constant 0 : index
    %157 = vector.load %arg7[%c3_89, %c0_90, %c0_91] : memref<4x1x32xf32, #tpu.memory_space<vmem>>, vector<1x1x32xf32>
    %158 = vector.shape_cast %157 : vector<1x1x32xf32> to vector<1x32xf32>
    %159 = vector.broadcast %158 : vector<1x32xf32> to vector<64x32xf32>
    %160 = arith.addf %156, %159 : vector<64x32xf32>
    %161 = vector.extract_strided_slice %131 {offsets = [0, 0], sizes = [32, 32], strides = [1, 1]} : vector<64x32xbf16> to vector<32x32xbf16>
    %162 = arith.truncf %125 : vector<64x32xf32> to vector<64x32xbf16>
    %cst_92 = arith.constant dense<0.000000e+00> : vector<64x32xf32>
    %163 = tpu.matmul %162, %161, %cst_92 {dimension_numbers = #tpu.dot_dimension_numbers<[1], [0], [0], [1], [0, 0, 1, 1], [], []>} : vector<64x32xbf16>, vector<32x32xbf16>, vector<64x32xf32> -> vector<64x32xf32>
    %164 = vector.extract_strided_slice %131 {offsets = [32, 0], sizes = [32, 32], strides = [1, 1]} : vector<64x32xbf16> to vector<32x32xbf16>
    %165 = arith.truncf %127 : vector<8x32xf32> to vector<8x32xbf16>
    %cst_93 = arith.constant dense<0.000000e+00> : vector<8x32xf32>
    %166 = tpu.matmul %165, %164, %cst_93 {dimension_numbers = #tpu.dot_dimension_numbers<[1], [0], [0], [1], [0, 0, 1, 1], [], []>} : vector<8x32xbf16>, vector<32x32xbf16>, vector<8x32xf32> -> vector<8x32xf32>
    %167 = arith.addf %163, %160 : vector<64x32xf32>
    %168 = vector.shape_cast %167 : vector<64x32xf32> to vector<8x8x32xf32>
    %169 = vector.shape_cast %166 : vector<8x32xf32> to vector<8x1x32xf32>
    %170 = vector.broadcast %169 : vector<8x1x32xf32> to vector<8x8x32xf32>
    %171 = arith.addf %168, %170 : vector<8x8x32xf32>
    %172 = vector.shape_cast %171 : vector<8x8x32xf32> to vector<64x32xf32>
    %173 = vector.shape_cast %172 : vector<64x32xf32> to vector<8x8x32xf32>
    %cst_94 = arith.constant dense<0xFF800000> : vector<8x32xf32>
    %174 = vector.multi_reduction <maximumf>, %173, %cst_94 [1] : vector<8x8x32xf32> to vector<8x32xf32>
    %cst_95 = arith.constant 0.000000e+00 : f32
    %175 = vector.broadcast %cst_95 : f32 to vector<8x32xf32>
    %176 = arith.maximumf %174, %175 : vector<8x32xf32>
    %c0_96 = arith.constant 0 : index
    %c0_97 = arith.constant 0 : index
    %177 = vector.load %arg9[%c0_96, %c0_97] : memref<32x16xbf16, #tpu.memory_space<vmem>>, vector<32x16xbf16>
    %178 = arith.truncf %176 : vector<8x32xf32> to vector<8x32xbf16>
    %cst_98 = arith.constant dense<0.000000e+00> : vector<8x16xf32>
    %179 = tpu.matmul %178, %177, %cst_98 {dimension_numbers = #tpu.dot_dimension_numbers<[1], [0], [0], [1], [0, 0, 1, 1], [], []>} : vector<8x32xbf16>, vector<32x16xbf16>, vector<8x16xf32> -> vector<8x16xf32>
    %c0_99 = arith.constant 0 : index
    %c0_100 = arith.constant 0 : index
    %180 = vector.load %arg10[%c0_99, %c0_100] : memref<1x16xf32, #tpu.memory_space<vmem>>, vector<1x16xf32>
    %181 = vector.broadcast %180 : vector<1x16xf32> to vector<8x16xf32>
    %182 = arith.addf %179, %181 : vector<8x16xf32>
    %c0_101 = arith.constant 0 : index
    %c0_102 = arith.constant 0 : index
    %183 = vector.load %arg11[%c0_101, %c0_102] : memref<8x16xf32, #tpu.memory_space<vmem>>, vector<8x16xf32>
    tpu.vector_store %arg11[%c0_101, %c0_102], %182 {strides = array<i32>} : memref<8x16xf32, #tpu.memory_space<vmem>>, vector<8x16xf32>,
    return
  }
  func.func @transform_0(%arg0: i32) -> (i32, i32) {
    %c0_i32 = arith.constant 0 : i32
    %c0_i32_0 = arith.constant 0 : i32
    return %arg0, %c0_i32 : i32, i32
  }
  func.func @transform_1(%arg0: i32) -> (i32, i32) {
    %c0_i32 = arith.constant 0 : i32
    %c0_i32_0 = arith.constant 0 : i32
    %c0_i32_1 = arith.constant 0 : i32
    return %c0_i32, %c0_i32_0 : i32, i32
  }
  func.func @transform_2(%arg0: i32) -> (i32, i32) {
    %c0_i32 = arith.constant 0 : i32
    %c0_i32_0 = arith.constant 0 : i32
    %c0_i32_1 = arith.constant 0 : i32
    return %c0_i32, %c0_i32_0 : i32, i32
  }
  func.func @transform_3(%arg0: i32) -> (i32, i32, i32) {
    %c0_i32 = arith.constant 0 : i32
    %c0_i32_0 = arith.constant 0 : i32
    %c0_i32_1 = arith.constant 0 : i32
    %c0_i32_2 = arith.constant 0 : i32
    return %c0_i32, %c0_i32_0, %c0_i32_1 : i32, i32, i32
  }
  func.func @transform_4(%arg0: i32) -> (i32, i32, i32) {
    %c0_i32 = arith.constant 0 : i32
    %c0_i32_0 = arith.constant 0 : i32
    %c0_i32_1 = arith.constant 0 : i32
    %c0_i32_2 = arith.constant 0 : i32
    return %c0_i32, %c0_i32_0, %c0_i32_1 : i32, i32, i32
  }
  func.func @transform_5(%arg0: i32) -> (i32, i32, i32) {
    %c0_i32 = arith.constant 0 : i32
    %c0_i32_0 = arith.constant 0 : i32
    %c0_i32_1 = arith.constant 0 : i32
    %c0_i32_2 = arith.constant 0 : i32
    return %c0_i32, %c0_i32_0, %c0_i32_1 : i32, i32, i32
  }
  func.func @transform_6(%arg0: i32) -> (i32, i32, i32) {
    %c0_i32 = arith.constant 0 : i32
    %c0_i32_0 = arith.constant 0 : i32
    %c0_i32_1 = arith.constant 0 : i32
    %c0_i32_2 = arith.constant 0 : i32
    return %c0_i32, %c0_i32_0, %c0_i32_1 : i32, i32, i32
  }
  func.func @transform_7(%arg0: i32) -> (i32, i32, i32) {
    %c0_i32 = arith.constant 0 : i32
    %c0_i32_0 = arith.constant 0 : i32
    %c0_i32_1 = arith.constant 0 : i32
    %c0_i32_2 = arith.constant 0 : i32
    return %c0_i32, %c0_i32_0, %c0_i32_1 : i32, i32, i32
  }
  func.func @transform_8(%arg0: i32) -> (i32, i32) {
    %c0_i32 = arith.constant 0 : i32
    %c0_i32_0 = arith.constant 0 : i32
    %c0_i32_1 = arith.constant 0 : i32
    return %c0_i32, %c0_i32_0 : i32, i32
  }
  func.func @transform_9(%arg0: i32) -> (i32, i32) {
    %c0_i32 = arith.constant 0 : i32
    %c0_i32_0 = arith.constant 0 : i32
    %c0_i32_1 = arith.constant 0 : i32
    return %c0_i32, %c0_i32_0 : i32, i32
  }
  func.func @transform_10(%arg0: i32) -> (i32, i32) {
    %c0_i32 = arith.constant 0 : i32
    %c0_i32_0 = arith.constant 0 : i32
    return %arg0, %c0_i32 : i32, i32
  }
}

</mosaic_0001>

<llo_original>
// kernel: tpu_custom_call.1
$region0: #{tpu_custom_call.1}
  #allocation0 [shape = 'u32[]', space=smem, size = 0x4, offset = 0x4, fixed_abs, tag = 'smem constant byte address 0x4 - core index']
  #allocation1 [shape = 'u32[144,128]{1,0:T(1,128)}', space=vmem, size = 0x12000, scoped, tag = 'internal scratch']
  %s0 = inlined_call_operand.vmem [shape: f32[128,3], index: 0, kind: input, shape index: {}]
  %s1 = inlined_call_operand.vmem [shape: bf16[3,64], index: 1, kind: input, shape index: {}]
  %s2 = inlined_call_operand.vmem [shape: f32[1,64], index: 2, kind: input, shape index: {}]
  %s3 = inlined_call_operand.vmem [shape: bf16[4,64,32], index: 3, kind: input, shape index: {}]
  %s4 = inlined_call_operand.vmem [shape: f32[4,1,32], index: 4, kind: input, shape index: {}]
  %s5 = inlined_call_operand.vmem [shape: bf16[4,32,32], index: 5, kind: input, shape index: {}]
  %s6 = inlined_call_operand.vmem [shape: f32[4,1,32], index: 6, kind: input, shape index: {}]
  %s7 = inlined_call_operand.vmem [shape: bf16[4,64,32], index: 7, kind: input, shape index: {}]
  %s8 = inlined_call_operand.vmem [shape: bf16[32,16], index: 8, kind: input, shape index: {}]
  %s9 = inlined_call_operand.vmem [shape: f32[1,16], index: 9, kind: input, shape index: {}]
  %s10 = inlined_call_operand.hbm [shape: f32[16,16], index: 10, kind: output, shape index: {}]
  %s11 = sld [smem:[#allocation0]]
  $region73: #{tpu_custom_call.1} parent=0
    _
  %s13 = ssub.s32 1, %s11
  %s14 = scalar_select 0, %s13, %s11
  $region1: #{tpu_custom_call.1} parent=0
    #allocation2 [shape = 'u8[8192]{0}', space=vmem, size = 0x2000, scoped, tag = 'output window, operand 0']
    #allocation3 [shape = 's32[2]{0}', space=sflag, size = 0x8, scoped, tag = 'scoped memory for tpu_custom_call.1']
    %15 = vsyncpa [#allocation3], 0
    %s16 = scalar_lea.sflag [#allocation3], 1
    %17 = vsyncpa %s16, 0
    loop: start=0, step=1, limit=4
    $region2: #{tpu_custom_call.1} parent=1 // loop_pre_header
      _
    $region3: #{tpu_custom_call.1} parent=1 // loop_header
      %s19 = sphi 0, %s23
      %p20 = scmp.ge.s32.totalorder %s19, 4
      %s29 = sphi 0, %s31
      %s32 = sphi 0, %s29
      %s33 = sphi 0, %s32
      %s49 = sphi 0, %s33
      %s53 = sphi 0, %s53
      %s55 = sphi 0, %s53
      %s56 = sphi 0, %s55
      %s70 = sphi 0, %s56
      %s74 = sphi 0, %s74
      %s76 = sphi 0, %s74
      %s77 = sphi 0, %s76
      %s91 = sphi 0, %s77
      %s95 = sphi 0, %s95
      %s97 = sphi 0, %s95
      %s98 = sphi 0, %s97
      %s112 = sphi 0, %s98
      %s116 = sphi 0, %s116
      %s118 = sphi 0, %s116
      %s119 = sphi 0, %s118
      %s133 = sphi 0, %s119
      %s137 = sphi 0, %s137
      %s139 = sphi 0, %s137
      %s140 = sphi 0, %s139
      %s154 = sphi 0, %s140
      %s158 = sphi 0, %s158
      %s160 = sphi 0, %s158
      %s161 = sphi 0, %s160
      %s175 = sphi 0, %s161
      %s179 = sphi 0, %s179
      %s181 = sphi 0, %s179
      %s182 = sphi 0, %s181
      %s196 = sphi 0, %s182
      %s200 = sphi 0, %s200
      %s202 = sphi 0, %s200
      %s203 = sphi 0, %s202
      %s217 = sphi 0, %s203
      %s221 = sphi 0, %s221
      %s223 = sphi 0, %s221
      %s224 = sphi 0, %s223
      %s238 = sphi 0, %s224
      %s244 = sphi 0, %s246
      %s247 = sphi 0, %s244
      %s248 = sphi 0, %s247
      %s264 = sphi 0, %s248
    $region4: #{tpu_custom_call.1} parent=1 // loop_header_branch
      %22 = sbr.rel (%p20) target = $region8
    $region5: #{tpu_custom_call.1} parent=1 // loop_body
      %s24 = ssub.s32 %s19, 1
      %s25 = ssub.s32 %s19, 2
      %s26 = sadd.s32 %s19, 1
      %s27 = ssub.s32 %s19, %s26
      %p28 = scmp.eq.s32.totalorder %s27, 0
      %s30 = sadd.s32 %s29, 1
      %s31 = scalar_select %p28, %s29, %s30
      %p34 = pneg %p28
      %p35 = scmp.eq.s32.totalorder %s19, 1
      %p36 = por %p34, %p35
      %p37 = scmp.ne.s32.totalorder %s29, %s32
      %p38 = scmp.eq.s32.totalorder %s19, 0
      %p39 = por %p37, %p38
      %p40 = scmp.ne.s32.totalorder %s29, %s32
      %p41 = scmp.eq.s32.totalorder %s24, 1
      %p42 = por %p40, %p41
      %p43 = scmp.ne.s32.totalorder %s32, %s33
      %p44 = scmp.eq.s32.totalorder %s24, 0
      %p45 = por %p43, %p44
      %p46 = scmp.ne.s32.totalorder %s32, %s33
      %p47 = scmp.eq.s32.totalorder %s25, 1
      %p48 = por %p46, %p47
      %p50 = scmp.ne.s32.totalorder %s33, %s49
      %p51 = scmp.eq.s32.totalorder %s25, 0
      %p52 = por %p50, %p51
      %s54 = sadd.s32 %s53, 1
      %p57 = scmp.eq.s32.totalorder %s19, 1
      %p58 = scmp.ne.s32.totalorder %s53, %s55
      %p59 = scmp.eq.s32.totalorder %s19, 0
      %p60 = por %p58, %p59
      %p61 = scmp.ne.s32.totalorder %s53, %s55
      %p62 = scmp.eq.s32.totalorder %s24, 1
      %p63 = por %p61, %p62
      %p64 = scmp.ne.s32.totalorder %s55, %s56
      %p65 = scmp.eq.s32.totalorder %s24, 0
      %p66 = por %p64, %p65
      %p67 = scmp.ne.s32.totalorder %s55, %s56
      %p68 = scmp.eq.s32.totalorder %s25, 1
      %p69 = por %p67, %p68
      %p71 = scmp.ne.s32.totalorder %s56, %s70
      %p72 = scmp.eq.s32.totalorder %s25, 0
      %p73 = por %p71, %p72
      %s75 = sadd.s32 %s74, 1
      %p78 = scmp.eq.s32.totalorder %s19, 1
      %p79 = scmp.ne.s32.totalorder %s74, %s76
      %p80 = scmp.eq.s32.totalorder %s19, 0
      %p81 = por %p79, %p80
      %p82 = scmp.ne.s32.totalorder %s74, %s76
      %p83 = scmp.eq.s32.totalorder %s24, 1
      %p84 = por %p82, %p83
      %p85 = scmp.ne.s32.totalorder %s76, %s77
      %p86 = scmp.eq.s32.totalorder %s24, 0
      %p87 = por %p85, %p86
      %p88 = scmp.ne.s32.totalorder %s76, %s77
      %p89 = scmp.eq.s32.totalorder %s25, 1
      %p90 = por %p88, %p89
      %p92 = scmp.ne.s32.totalorder %s77, %s91
      %p93 = scmp.eq.s32.totalorder %s25, 0
      %p94 = por %p92, %p93
      %s96 = sadd.s32 %s95, 1
      %p99 = scmp.eq.s32.totalorder %s19, 1
      %p100 = scmp.ne.s32.totalorder %s95, %s97
      %p101 = scmp.eq.s32.totalorder %s19, 0
      %p102 = por %p100, %p101
      %p103 = scmp.ne.s32.totalorder %s95, %s97
      %p104 = scmp.eq.s32.totalorder %s24, 1
      %p105 = por %p103, %p104
      %p106 = scmp.ne.s32.totalorder %s97, %s98
      %p107 = scmp.eq.s32.totalorder %s24, 0
      %p108 = por %p106, %p107
      %p109 = scmp.ne.s32.totalorder %s97, %s98
      %p110 = scmp.eq.s32.totalorder %s25, 1
      %p111 = por %p109, %p110
      %p113 = scmp.ne.s32.totalorder %s98, %s112
      %p114 = scmp.eq.s32.totalorder %s25, 0
      %p115 = por %p113, %p114
      %s117 = sadd.s32 %s116, 1
      %p120 = scmp.eq.s32.totalorder %s19, 1
      %p121 = scmp.ne.s32.totalorder %s116, %s118
      %p122 = scmp.eq.s32.totalorder %s19, 0
      %p123 = por %p121, %p122
      %p124 = scmp.ne.s32.totalorder %s116, %s118
      %p125 = scmp.eq.s32.totalorder %s24, 1
      %p126 = por %p124, %p125
      %p127 = scmp.ne.s32.totalorder %s118, %s119
      %p128 = scmp.eq.s32.totalorder %s24, 0
      %p129 = por %p127, %p128
      %p130 = scmp.ne.s32.totalorder %s118, %s119
      %p131 = scmp.eq.s32.totalorder %s25, 1
      %p132 = por %p130, %p131
      %p134 = scmp.ne.s32.totalorder %s119, %s133
      %p135 = scmp.eq.s32.totalorder %s25, 0
      %p136 = por %p134, %p135
      %s138 = sadd.s32 %s137, 1
      %p141 = scmp.eq.s32.totalorder %s19, 1
      %p142 = scmp.ne.s32.totalorder %s137, %s139
      %p143 = scmp.eq.s32.totalorder %s19, 0
      %p144 = por %p142, %p143
      %p145 = scmp.ne.s32.totalorder %s137, %s139
      %p146 = scmp.eq.s32.totalorder %s24, 1
      %p147 = por %p145, %p146
      %p148 = scmp.ne.s32.totalorder %s139, %s140
      %p149 = scmp.eq.s32.totalorder %s24, 0
      %p150 = por %p148, %p149
      %p151 = scmp.ne.s32.totalorder %s139, %s140
      %p152 = scmp.eq.s32.totalorder %s25, 1
      %p153 = por %p151, %p152
      %p155 = scmp.ne.s32.totalorder %s140, %s154
      %p156 = scmp.eq.s32.totalorder %s25, 0
      %p157 = por %p155, %p156
      %s159 = sadd.s32 %s158, 1
      %p162 = scmp.eq.s32.totalorder %s19, 1
      %p163 = scmp.ne.s32.totalorder %s158, %s160
      %p164 = scmp.eq.s32.totalorder %s19, 0
      %p165 = por %p163, %p164
      %p166 = scmp.ne.s32.totalorder %s158, %s160
      %p167 = scmp.eq.s32.totalorder %s24, 1
      %p168 = por %p166, %p167
      %p169 = scmp.ne.s32.totalorder %s160, %s161
      %p170 = scmp.eq.s32.totalorder %s24, 0
      %p171 = por %p169, %p170
      %p172 = scmp.ne.s32.totalorder %s160, %s161
      %p173 = scmp.eq.s32.totalorder %s25, 1
      %p174 = por %p172, %p173
      %p176 = scmp.ne.s32.totalorder %s161, %s175
      %p177 = scmp.eq.s32.totalorder %s25, 0
      %p178 = por %p176, %p177
      %s180 = sadd.s32 %s179, 1
      %p183 = scmp.eq.s32.totalorder %s19, 1
      %p184 = scmp.ne.s32.totalorder %s179, %s181
      %p185 = scmp.eq.s32.totalorder %s19, 0
      %p186 = por %p184, %p185
      %p187 = scmp.ne.s32.totalorder %s179, %s181
      %p188 = scmp.eq.s32.totalorder %s24, 1
      %p189 = por %p187, %p188
      %p190 = scmp.ne.s32.totalorder %s181, %s182
      %p191 = scmp.eq.s32.totalorder %s24, 0
      %p192 = por %p190, %p191
      %p193 = scmp.ne.s32.totalorder %s181, %s182
      %p194 = scmp.eq.s32.totalorder %s25, 1
      %p195 = por %p193, %p194
      %p197 = scmp.ne.s32.totalorder %s182, %s196
      %p198 = scmp.eq.s32.totalorder %s25, 0
      %p199 = por %p197, %p198
      %s201 = sadd.s32 %s200, 1
      %p204 = scmp.eq.s32.totalorder %s19, 1
      %p205 = scmp.ne.s32.totalorder %s200, %s202
      %p206 = scmp.eq.s32.totalorder %s19, 0
      %p207 = por %p205, %p206
      %p208 = scmp.ne.s32.totalorder %s200, %s202
      %p209 = scmp.eq.s32.totalorder %s24, 1
      %p210 = por %p208, %p209
      %p211 = scmp.ne.s32.totalorder %s202, %s203
      %p212 = scmp.eq.s32.totalorder %s24, 0
      %p213 = por %p211, %p212
      %p214 = scmp.ne.s32.totalorder %s202, %s203
      %p215 = scmp.eq.s32.totalorder %s25, 1
      %p216 = por %p214, %p215
      %p218 = scmp.ne.s32.totalorder %s203, %s217
      %p219 = scmp.eq.s32.totalorder %s25, 0
      %p220 = por %p218, %p219
      %s222 = sadd.s32 %s221, 1
      %p225 = scmp.eq.s32.totalorder %s19, 1
      %p226 = scmp.ne.s32.totalorder %s221, %s223
      %p227 = scmp.eq.s32.totalorder %s19, 0
      %p228 = por %p226, %p227
      %p229 = scmp.ne.s32.totalorder %s221, %s223
      %p230 = scmp.eq.s32.totalorder %s24, 1
      %p231 = por %p229, %p230
      %p232 = scmp.ne.s32.totalorder %s223, %s224
      %p233 = scmp.eq.s32.totalorder %s24, 0
      %p234 = por %p232, %p233
      %p235 = scmp.ne.s32.totalorder %s223, %s224
      %p236 = scmp.eq.s32.totalorder %s25, 1
      %p237 = por %p235, %p236
      %p239 = scmp.ne.s32.totalorder %s224, %s238
      %p240 = scmp.eq.s32.totalorder %s25, 0
      %p241 = por %p239, %p240
      %s242 = ssub.s32 %s19, %s26
      %p243 = scmp.eq.s32.totalorder %s242, 0
      %s245 = sadd.s32 %s244, 1
      %s246 = scalar_select %p243, %s244, %s245
      %p249 = pneg %p243
      %p250 = scmp.eq.s32.totalorder %s19, 1
      %p251 = por %p249, %p250
      %p252 = scmp.ne.s32.totalorder %s244, %s247
      %p253 = scmp.eq.s32.totalorder %s19, 0
      %p254 = por %p252, %p253
      %p255 = scmp.ne.s32.totalorder %s244, %s247
      %p256 = scmp.eq.s32.totalorder %s24, 1
      %p257 = por %p255, %p256
      %p258 = scmp.ne.s32.totalorder %s247, %s248
      %p259 = scmp.eq.s32.totalorder %s24, 0
      %p260 = por %p258, %p259
      %p261 = scmp.ne.s32.totalorder %s247, %s248
      %p262 = scmp.eq.s32.totalorder %s25, 1
      %p263 = por %p261, %p262
      %p265 = scmp.ne.s32.totalorder %s248, %s264
      %p266 = scmp.eq.s32.totalorder %s25, 0
      %p267 = por %p265, %p266
      %p268 = scmp.le.s32.totalorder 1, %s19
      %p269 = scmp.lt.s32.totalorder %s19, 3
      %p270 = pnand %p268, %p269
      %p271 = pneg %p270
      // Predicated region
      $region9: #{tpu_custom_call.1} parent=5 // pred_check
        _
      $region10: #{tpu_custom_call.1} parent=5 // pred_check_branch
        %273 = sbr.rel (%p270) target = $region12
      $region11: #{tpu_custom_call.1} parent=5 // pred_region
        %s274 = ssub.s32 %s19, 1
        // Predicated region
        $region13: #{tpu_custom_call.1} parent=11 // pred_check
          %p275 = pneg %p66
        $region14: #{tpu_custom_call.1} parent=11 // pred_check_branch
          %277 = sbr.rel (%p275) target = $region16
        $region15: #{tpu_custom_call.1} parent=11 // pred_region
          _
        $region16: #{tpu_custom_call.1} parent=11 // pred_fallthru
          _
        // Predicated region
        $region17: #{tpu_custom_call.1} parent=11 // pred_check
          %p278 = pneg %p87
        $region18: #{tpu_custom_call.1} parent=11 // pred_check_branch
          %280 = sbr.rel (%p278) target = $region20
        $region19: #{tpu_custom_call.1} parent=11 // pred_region
          _
        $region20: #{tpu_custom_call.1} parent=11 // pred_fallthru
          _
        // Predicated region
        $region21: #{tpu_custom_call.1} parent=11 // pred_check
          %p281 = pneg %p108
        $region22: #{tpu_custom_call.1} parent=11 // pred_check_branch
          %283 = sbr.rel (%p281) target = $region24
        $region23: #{tpu_custom_call.1} parent=11 // pred_region
          _
        $region24: #{tpu_custom_call.1} parent=11 // pred_fallthru
          _
        // Predicated region
        $region25: #{tpu_custom_call.1} parent=11 // pred_check
          %p284 = pneg %p129
        $region26: #{tpu_custom_call.1} parent=11 // pred_check_branch
          %286 = sbr.rel (%p284) target = $region28
        $region27: #{tpu_custom_call.1} parent=11 // pred_region
          _
        $region28: #{tpu_custom_call.1} parent=11 // pred_fallthru
          _
        // Predicated region
        $region29: #{tpu_custom_call.1} parent=11 // pred_check
          %p287 = pneg %p150
        $region30: #{tpu_custom_call.1} parent=11 // pred_check_branch
          %289 = sbr.rel (%p287) target = $region32
        $region31: #{tpu_custom_call.1} parent=11 // pred_region
          _
        $region32: #{tpu_custom_call.1} parent=11 // pred_fallthru
          _
        // Predicated region
        $region33: #{tpu_custom_call.1} parent=11 // pred_check
          %p290 = pneg %p171
        $region34: #{tpu_custom_call.1} parent=11 // pred_check_branch
          %292 = sbr.rel (%p290) target = $region36
        $region35: #{tpu_custom_call.1} parent=11 // pred_region
          _
        $region36: #{tpu_custom_call.1} parent=11 // pred_fallthru
          _
        // Predicated region
        $region37: #{tpu_custom_call.1} parent=11 // pred_check
          %p293 = pneg %p192
        $region38: #{tpu_custom_call.1} parent=11 // pred_check_branch
          %295 = sbr.rel (%p293) target = $region40
        $region39: #{tpu_custom_call.1} parent=11 // pred_region
          _
        $region40: #{tpu_custom_call.1} parent=11 // pred_fallthru
          _
        // Predicated region
        $region41: #{tpu_custom_call.1} parent=11 // pred_check
          %p296 = pneg %p213
        $region42: #{tpu_custom_call.1} parent=11 // pred_check_branch
          %298 = sbr.rel (%p296) target = $region44
        $region43: #{tpu_custom_call.1} parent=11 // pred_region
          _
        $region44: #{tpu_custom_call.1} parent=11 // pred_fallthru
          _
        // Predicated region
        $region45: #{tpu_custom_call.1} parent=11 // pred_check
          %p299 = pneg %p234
        $region46: #{tpu_custom_call.1} parent=11 // pred_check_branch
          %301 = sbr.rel (%p299) target = $region48
        $region47: #{tpu_custom_call.1} parent=11 // pred_region
          _
        $region48: #{tpu_custom_call.1} parent=11 // pred_fallthru
          _
      $region12: #{tpu_custom_call.1} parent=5 // pred_fallthru
        _
      %p302 = scmp.lt.s32.totalorder %s19, 2
      // Predicated region
      $region49: #{tpu_custom_call.1} parent=5 // pred_check
        %p303 = pneg %p302
      $region50: #{tpu_custom_call.1} parent=5 // pred_check_branch
        %305 = sbr.rel (%p303) target = $region52
      $region51: #{tpu_custom_call.1} parent=5 // pred_region
        // Predicated region
        $region53: #{tpu_custom_call.1} parent=51 // pred_check
          %p306 = pneg %p39
        $region54: #{tpu_custom_call.1} parent=51 // pred_check_branch
          %308 = sbr.rel (%p306) target = $region56
        $region55: #{tpu_custom_call.1} parent=51 // pred_region
          %s309 = smul.u32 8, %s19
          %p310 = scmp.lt.s32.totalorder %s309, 15
          %s311 = scalar_select %p310, %s309, 15
          %s312 = smul.addr %s311, 8
          %s313 = scalar_lea.vmem %s0, %s312
          %s314 = smul.u32 8, %s19
        $region56: #{tpu_custom_call.1} parent=51 // pred_fallthru
          _
      $region52: #{tpu_custom_call.1} parent=5 // pred_fallthru
        _
      %p315 = scmp.le.s32.totalorder 1, %s19
      %p316 = scmp.lt.s32.totalorder %s19, 3
      %p317 = pnand %p315, %p316
      %p318 = pneg %p317
      // Predicated region
      $region57: #{tpu_custom_call.1} parent=5 // pred_check
        _
      $region58: #{tpu_custom_call.1} parent=5 // pred_check_branch
        %320 = sbr.rel (%p317) target = $region60
      $region59: #{tpu_custom_call.1} parent=5 // pred_region
        %s321 = ssub.s32 %s19, 1
        %s322 = smul.u32 8, %s24
        %p323 = scmp.lt.s32.totalorder %s322, 15
        %s324 = scalar_select %p323, %s322, 15
        %s325 = smul.addr %s324, 8
        %s326 = scalar_lea.vmem %s0, %s325
        %p327 = pneg %p45
        %p328 = pneg %p42
        %p329 = pneg %p66
        %p330 = pneg %p63
        %p331 = pneg %p87
        %p332 = pneg %p84
        %p333 = pneg %p108
        %p334 = pneg %p105
        %p335 = pneg %p129
        %p336 = pneg %p126
        %p337 = pneg %p150
        %p338 = pneg %p147
        %p339 = pneg %p171
        %p340 = pneg %p168
        %p341 = pneg %p192
        %p342 = pneg %p189
        %p343 = pneg %p213
        %p344 = pneg %p210
        %p345 = pneg %p234
        %p346 = pneg %p231
        %p347 = pneg %p260
        %p348 = pneg %p257
        %s349 = sand.u32 %s247, 1
        %s350 = scalar_lea.sflag [#allocation3], %s349
        %s351 = sand.u32 %s247, 1
        %s352 = smul.addr %s351, 8
        %s353 = scalar_lea.vmem [#allocation2], %s352
        %s354 = smul.u32 8, %s24
        %p355 = scmp.lt.s32.totalorder %s354, 15
        %s356 = scalar_select %p355, %s354, 15
        %s357 = smul.addr %s356, 8
        %s358 = scalar_lea.vmem %s0, %s357
        %s359 = smul.u32 8, %s24
        %v361 = vld [vmem:[%s358] sm:$0xff]
        %v362 = vld [vmem:[%s358 + $0x8] sm:$0xff]
        %v363 = vld [vmem:[%s358 + $0x10] sm:$0xff]
        %v364 = vld [vmem:[%s358 + $0x18] sm:$0xff]
        %v365 = vld [vmem:[%s358 + $0x20] sm:$0xff]
        %v366 = vld [vmem:[%s358 + $0x28] sm:$0xff]
        %v367 = vld [vmem:[%s358 + $0x30] sm:$0xff]
        %v368 = vld [vmem:[%s358 + $0x38] sm:$0xff]
        %v369 = vld [vmem:[%s1] sm:$0x3]
        %v370 = vpack.c.bf16 %v362, %v361
        %v371 = vpack.c.bf16 %v364, %v363
        %v372 = vpack.c.bf16 %v366, %v365
        %v373 = vpack.c.bf16 %v368, %v367
        %v374 = vld [vmem:[%s2] sm:$0x1]
        %v376 = vlaneseq
        %v377 = vshrl.u32 %v376, 7
        %v378 = vsub.s32 0, %v377
        %v379 = vrot.slane %v374, %v378
        %vm381 = vcmask 23552
        %v383 = vsel %vm381, %v370, 0
        %v386 = vsel %vm381, %v371, 0
        %v389 = vsel %vm381, %v372, 0
        %v392 = vsel %vm381, %v373, 0
        %vm394 = vcmask 1040384
        %vm395 = vcmask 1041408
        %v396 = vsel %vm394, 4294967295, 65535
        %v397 = vsel %vm395, %v396, 0
        %v399 = vand.u32 %v369, %v397
        %401 = vmatprep.subr.bf16.mxu0 0
        %402 = vmatpush1.bf16.msra.mxu0 0
        %403 = vmatprep.subr.bf16.mxu0 0
        %404 = vmatpush1.bf16.msra.mxu0 0
        %405 = vmatprep.subr.bf16.mxu0 0
        %406 = vmatpush1.bf16.msra.mxu0 0
        %407 = vmatprep.subr.bf16.mxu0 0
        %408 = vmatpush1.bf16.msra.mxu0 0
        %409 = vmatprep.subr.bf16.mxu0 0
        %410 = vmatpush1.bf16.msra.mxu0 0
        %411 = vmatprep.subr.bf16.mxu0 0
        %412 = vmatpush1.bf16.msra.mxu0 0
        %413 = vmatprep.subr.bf16.mxu0 0
        %414 = vmatpush1.bf16.msra.mxu0 0
        %415 = vmatprep.subr.bf16.mxu0 0
        %416 = vmatpush1.bf16.msra.mxu0 %v399
        %417 = vmatprep.subr.bf16.mxu0 0
        %418 = vmatpush2.bf16.msra.mxu0 0
        %419 = vmatprep.subr.bf16.mxu0 0
        %420 = vmatpush2.bf16.msra.mxu0 0
        %421 = vmatprep.subr.bf16.mxu0 0
        %422 = vmatpush2.bf16.msra.mxu0 0
        %423 = vmatprep.subr.bf16.mxu0 0
        %424 = vmatpush2.bf16.msra.mxu0 0
        %425 = vmatprep.subr.bf16.mxu0 0
        %426 = vmatpush2.bf16.msra.mxu0 0
        %427 = vmatprep.subr.bf16.mxu0 0
        %428 = vmatpush2.bf16.msra.mxu0 0
        %429 = vmatprep.subr.bf16.mxu0 0
        %430 = vmatpush2.bf16.msra.mxu0 0
        %431 = vmatprep.subr.bf16.mxu0 0
        %432 = vmatpush2.bf16.msra.mxu0 0
        %433 = vmatprep.mubr.bf16.mxu0 0
        %434 = vmatmul.mubr.bf16.gmra.mxu0 %v383
        %v435 = vpop.f32.mrf.mxu0
        %v436 = vadd.f32 %v379, %v435
        %v437 = vpop.f32.mrf.mxu0
        %v438 = vpop.f32.mrf.mxu0
        %v439 = vadd.f32 %v379, %v438
        %v440 = vpop.f32.mrf.mxu0
        %441 = vmatprep.mubr.bf16.mxu0 0
        %442 = vmatmul.mubr.bf16.gmra.mxu0 %v386
        %v443 = vpop.f32.mrf.mxu0
        %v444 = vadd.f32 %v379, %v443
        %v445 = vpop.f32.mrf.mxu0
        %v446 = vpop.f32.mrf.mxu0
        %v447 = vadd.f32 %v379, %v446
        %v448 = vpop.f32.mrf.mxu0
        %449 = vmatprep.mubr.bf16.mxu0 0
        %450 = vmatmul.mubr.bf16.gmra.mxu0 %v389
        %v451 = vpop.f32.mrf.mxu0
        %v452 = vadd.f32 %v379, %v451
        %v453 = vpop.f32.mrf.mxu0
        %v454 = vpop.f32.mrf.mxu0
        %v455 = vadd.f32 %v379, %v454
        %v456 = vpop.f32.mrf.mxu0
        %457 = vmatprep.mubr.bf16.mxu0 0
        %458 = vmatmul.mubr.bf16.gmra.mxu0 %v392
        %v459 = vpop.f32.mrf.mxu0
        %v460 = vadd.f32 %v379, %v459
        %v461 = vpop.f32.mrf.mxu0
        %v462 = vpop.f32.mrf.mxu0
        %v463 = vadd.f32 %v379, %v462
        %v464 = vpop.f32.mrf.mxu0
        %465 = vdwg.mxu0
        %v466 = vmax.f32 %v436, 0.0
        %v467 = vmax.f32 %v439, 0.0
        %v468 = vmax.f32 %v444, 0.0
        %v469 = vmax.f32 %v447, 0.0
        %v470 = vmax.f32 %v452, 0.0
        %v471 = vmax.f32 %v455, 0.0
        %v472 = vmax.f32 %v460, 0.0
        %v473 = vmax.f32 %v463, 0.0
        %v474 = vld [vmem:[%s3] sm:$0xf]
        %v475 = vld [vmem:[%s3 + $0x4] sm:$0xf]
        %v476 = vld [vmem:[%s3 + $0x8] sm:$0xf]
        %v477 = vld [vmem:[%s3 + $0xc] sm:$0xf]
        %v478 = vld [vmem:[%s3 + $0x10] sm:$0xf]
        %v479 = vld [vmem:[%s3 + $0x14] sm:$0xf]
        %v480 = vld [vmem:[%s3 + $0x18] sm:$0xf]
        %v481 = vld [vmem:[%s3 + $0x1c] sm:$0xf]
        %v482 = vpack.c.bf16 %v467, %v466
        %v483 = vpack.c.bf16 %v469, %v468
        %v484 = vpack.c.bf16 %v471, %v470
        %v485 = vpack.c.bf16 %v473, %v472
        %v486 = vld [vmem:[%s4] sm:$0x1]
        %v488 = vlaneseq
        %v489 = vshrl.u32 %v488, 7
        %v490 = vsub.s32 0, %v489
        %v491 = vrot.slane %v486, %v490
        %v501 = vunpack.c.l.b16 %v474
        %v502 = vunpack.c.l.b16 %v475
        %v503 = vunpack.c.l.b16 %v476
        %v504 = vunpack.c.l.b16 %v477
        %v505 = vunpack.c.l.b16 %v478
        %v506 = vunpack.c.l.b16 %v479
        %v507 = vunpack.c.l.b16 %v480
        %v508 = vunpack.c.l.b16 %v481
        %v509 = vpack.c.b16 %v502, %v501
        %v510 = vpack.c.b16 %v504, %v503
        %v511 = vpack.c.b16 %v506, %v505
        %v512 = vpack.c.b16 %v508, %v507
        %vm517 = vcmask 523264
        %v519 = vsel %vm517, %v482, 0
        %v522 = vsel %vm517, %v483, 0
        %v525 = vsel %vm517, %v484, 0
        %v528 = vsel %vm517, %v485, 0
        %530 = vmatprep.subr.bf16.mxu0 0
        %531 = vmatpush1.bf16.msra.mxu0 0
        %532 = vmatprep.subr.bf16.mxu0 0
        %533 = vmatpush1.bf16.msra.mxu0 0
        %534 = vmatprep.subr.bf16.mxu0 0
        %535 = vmatpush1.bf16.msra.mxu0 0
        %536 = vmatprep.subr.bf16.mxu0 0
        %537 = vmatpush1.bf16.msra.mxu0 0
        %538 = vmatprep.subr.bf16.mxu0 0
        %539 = vmatpush1.bf16.msra.mxu0 %v512
        %540 = vmatprep.subr.bf16.mxu0 0
        %541 = vmatpush1.bf16.msra.mxu0 %v511
        %542 = vmatprep.subr.bf16.mxu0 0
        %543 = vmatpush1.bf16.msra.mxu0 %v510
        %544 = vmatprep.subr.bf16.mxu0 0
        %545 = vmatpush1.bf16.msra.mxu0 %v509
        %546 = vmatprep.subr.bf16.mxu0 0
        %547 = vmatpush2.bf16.msra.mxu0 0
        %548 = vmatprep.subr.bf16.mxu0 0
        %549 = vmatpush2.bf16.msra.mxu0 0
        %550 = vmatprep.subr.bf16.mxu0 0
        %551 = vmatpush2.bf16.msra.mxu0 0
        %552 = vmatprep.subr.bf16.mxu0 0
        %553 = vmatpush2.bf16.msra.mxu0 0
        %554 = vmatprep.subr.bf16.mxu0 0
        %555 = vmatpush2.bf16.msra.mxu0 0
        %556 = vmatprep.subr.bf16.mxu0 0
        %557 = vmatpush2.bf16.msra.mxu0 0
        %558 = vmatprep.subr.bf16.mxu0 0
        %559 = vmatpush2.bf16.msra.mxu0 0
        %560 = vmatprep.subr.bf16.mxu0 0
        %561 = vmatpush2.bf16.msra.mxu0 0
        %562 = vmatprep.mubr.bf16.mxu0 0
        %563 = vmatmul.mubr.bf16.gmra.mxu0 %v519
        %v564 = vpop.f32.mrf.mxu0
        %v565 = vadd.f32 %v491, %v564
        %v566 = vpop.f32.mrf.mxu0
        %v567 = vpop.f32.mrf.mxu0
        %v568 = vadd.f32 %v491, %v567
        %v569 = vpop.f32.mrf.mxu0
        %570 = vmatprep.mubr.bf16.mxu0 0
        %571 = vmatmul.mubr.bf16.gmra.mxu0 %v522
        %v572 = vpop.f32.mrf.mxu0
        %v573 = vadd.f32 %v491, %v572
        %v574 = vpop.f32.mrf.mxu0
        %v575 = vpop.f32.mrf.mxu0
        %v576 = vadd.f32 %v491, %v575
        %v577 = vpop.f32.mrf.mxu0
        %578 = vmatprep.mubr.bf16.mxu0 0
        %579 = vmatmul.mubr.bf16.gmra.mxu0 %v525
        %v580 = vpop.f32.mrf.mxu0
        %v581 = vadd.f32 %v491, %v580
        %v582 = vpop.f32.mrf.mxu0
        %v583 = vpop.f32.mrf.mxu0
        %v584 = vadd.f32 %v491, %v583
        %v585 = vpop.f32.mrf.mxu0
        %586 = vmatprep.mubr.bf16.mxu0 0
        %587 = vmatmul.mubr.bf16.gmra.mxu0 %v528
        %v588 = vpop.f32.mrf.mxu0
        %v589 = vadd.f32 %v491, %v588
        %v590 = vpop.f32.mrf.mxu0
        %v591 = vpop.f32.mrf.mxu0
        %v592 = vadd.f32 %v491, %v591
        %v593 = vpop.f32.mrf.mxu0
        %594 = vdwg.mxu0
        %v595 = vmax.f32 %v565, 0.0
        %v596 = vmax.f32 %v568, 0.0
        %v597 = vmax.f32 %v573, 0.0
        %v598 = vmax.f32 %v576, 0.0
        %v599 = vmax.f32 %v581, 0.0
        %v600 = vmax.f32 %v584, 0.0
        %v601 = vmax.f32 %v589, 0.0
        %v602 = vmax.f32 %v592, 0.0
        %v603 = vld [vmem:[%s5] sm:$0xf]
        %v604 = vld [vmem:[%s5 + $0x4] sm:$0xf]
        %v605 = vld [vmem:[%s5 + $0x8] sm:$0xf]
        %v606 = vld [vmem:[%s5 + $0xc] sm:$0xf]
        %v607 = vpack.c.bf16 %v596, %v595
        %v608 = vpack.c.bf16 %v598, %v597
        %v609 = vpack.c.bf16 %v600, %v599
        %v610 = vpack.c.bf16 %v602, %v601
        %v611 = vld [vmem:[%s6] sm:$0x1]
        %v613 = vlaneseq
        %v614 = vshrl.u32 %v613, 7
        %v615 = vsub.s32 0, %v614
        %v616 = vrot.slane %v611, %v615
        %v622 = vunpack.c.l.b16 %v603
        %v623 = vunpack.c.l.b16 %v604
        %v624 = vunpack.c.l.b16 %v605
        %v625 = vunpack.c.l.b16 %v606
        %v626 = vpack.c.b16 %v623, %v622
        %v627 = vpack.c.b16 %v625, %v624
        %vm630 = vcmask 261120
        %v632 = vsel %vm630, %v607, 0
        %v635 = vsel %vm630, %v608, 0
        %v638 = vsel %vm630, %v609, 0
        %v641 = vsel %vm630, %v610, 0
        %643 = vmatprep.subr.bf16.mxu0 0
        %644 = vmatpush1.bf16.msra.mxu0 0
        %645 = vmatprep.subr.bf16.mxu0 0
        %646 = vmatpush1.bf16.msra.mxu0 0
        %647 = vmatprep.subr.bf16.mxu0 0
        %648 = vmatpush1.bf16.msra.mxu0 0
        %649 = vmatprep.subr.bf16.mxu0 0
        %650 = vmatpush1.bf16.msra.mxu0 0
        %651 = vmatprep.subr.bf16.mxu0 0
        %652 = vmatpush1.bf16.msra.mxu0 0
        %653 = vmatprep.subr.bf16.mxu0 0
        %654 = vmatpush1.bf16.msra.mxu0 0
        %655 = vmatprep.subr.bf16.mxu0 0
        %656 = vmatpush1.bf16.msra.mxu0 %v627
        %657 = vmatprep.subr.bf16.mxu0 0
        %658 = vmatpush1.bf16.msra.mxu0 %v626
        %659 = vmatprep.subr.bf16.mxu0 0
        %660 = vmatpush2.bf16.msra.mxu0 0
        %661 = vmatprep.subr.bf16.mxu0 0
        %662 = vmatpush2.bf16.msra.mxu0 0
        %663 = vmatprep.subr.bf16.mxu0 0
        %664 = vmatpush2.bf16.msra.mxu0 0
        %665 = vmatprep.subr.bf16.mxu0 0
        %666 = vmatpush2.bf16.msra.mxu0 0
        %667 = vmatprep.subr.bf16.mxu0 0
        %668 = vmatpush2.bf16.msra.mxu0 0
        %669 = vmatprep.subr.bf16.mxu0 0
        %670 = vmatpush2.bf16.msra.mxu0 0
        %671 = vmatprep.subr.bf16.mxu0 0
        %672 = vmatpush2.bf16.msra.mxu0 0
        %673 = vmatprep.subr.bf16.mxu0 0
        %674 = vmatpush2.bf16.msra.mxu0 0
        %675 = vmatprep.mubr.bf16.mxu0 0
        %676 = vmatmul.mubr.bf16.gmra.mxu0 %v632
        %v677 = vpop.f32.mrf.mxu0
        %v678 = vadd.f32 %v616, %v677
        %v679 = vpop.f32.mrf.mxu0
        %v680 = vpop.f32.mrf.mxu0
        %v681 = vadd.f32 %v616, %v680
        %v682 = vpop.f32.mrf.mxu0
        %683 = vmatprep.mubr.bf16.mxu0 0
        %684 = vmatmul.mubr.bf16.gmra.mxu0 %v635
        %v685 = vpop.f32.mrf.mxu0
        %v686 = vadd.f32 %v616, %v685
        %v687 = vpop.f32.mrf.mxu0
        %v688 = vpop.f32.mrf.mxu0
        %v689 = vadd.f32 %v616, %v688
        %v690 = vpop.f32.mrf.mxu0
        %691 = vmatprep.mubr.bf16.mxu0 0
        %692 = vmatmul.mubr.bf16.gmra.mxu0 %v638
        %v693 = vpop.f32.mrf.mxu0
        %v694 = vadd.f32 %v616, %v693
        %v695 = vpop.f32.mrf.mxu0
        %v696 = vpop.f32.mrf.mxu0
        %v697 = vadd.f32 %v616, %v696
        %v698 = vpop.f32.mrf.mxu0
        %699 = vmatprep.mubr.bf16.mxu0 0
        %700 = vmatmul.mubr.bf16.gmra.mxu0 %v641
        %v701 = vpop.f32.mrf.mxu0
        %v702 = vadd.f32 %v616, %v701
        %v703 = vpop.f32.mrf.mxu0
        %v704 = vpop.f32.mrf.mxu0
        %v705 = vadd.f32 %v616, %v704
        %v706 = vpop.f32.mrf.mxu0
        %707 = vdwg.mxu0
        %v708 = vld [vmem:[%s7] sm:$0xf]
        %v709 = vld [vmem:[%s7 + $0x4] sm:$0xf]
        %v710 = vld [vmem:[%s7 + $0x8] sm:$0xf]
        %v711 = vld [vmem:[%s7 + $0xc] sm:$0xf]
        %v712 = vld [vmem:[%s7 + $0x10] sm:$0xf]
        %v713 = vld [vmem:[%s7 + $0x14] sm:$0xf]
        %v714 = vld [vmem:[%s7 + $0x18] sm:$0xf]
        %v715 = vld [vmem:[%s7 + $0x1c] sm:$0xf]
        %v716 = vpack.c.bf16 %v439, %v436
        %v717 = vpack.c.bf16 %v447, %v444
        %v718 = vpack.c.bf16 %v455, %v452
        %v719 = vpack.c.bf16 %v463, %v460
        %v728 = vunpack.c.l.b16 %v708
        %v729 = vunpack.c.l.b16 %v709
        %v730 = vunpack.c.l.b16 %v710
        %v731 = vunpack.c.l.b16 %v711
        %v732 = vunpack.c.l.b16 %v712
        %v733 = vunpack.c.l.b16 %v713
        %v734 = vunpack.c.l.b16 %v714
        %v735 = vunpack.c.l.b16 %v715
        %v736 = vpack.c.b16 %v729, %v728
        %v737 = vpack.c.b16 %v731, %v730
        %v738 = vpack.c.b16 %v733, %v732
        %v739 = vpack.c.b16 %v735, %v734
        %v745 = vsel %vm517, %v716, 0
        %v748 = vsel %vm517, %v717, 0
        %v751 = vsel %vm517, %v718, 0
        %v754 = vsel %vm517, %v719, 0
        %756 = vmatprep.subr.bf16.mxu0 0
        %757 = vmatpush1.bf16.msra.mxu0 0
        %758 = vmatprep.subr.bf16.mxu0 0
        %759 = vmatpush1.bf16.msra.mxu0 0
        %760 = vmatprep.subr.bf16.mxu0 0
        %761 = vmatpush1.bf16.msra.mxu0 0
        %762 = vmatprep.subr.bf16.mxu0 0
        %763 = vmatpush1.bf16.msra.mxu0 0
        %764 = vmatprep.subr.bf16.mxu0 0
        %765 = vmatpush1.bf16.msra.mxu0 %v739
        %766 = vmatprep.subr.bf16.mxu0 0
        %767 = vmatpush1.bf16.msra.mxu0 %v738
        %768 = vmatprep.subr.bf16.mxu0 0
        %769 = vmatpush1.bf16.msra.mxu0 %v737
        %770 = vmatprep.subr.bf16.mxu0 0
        %771 = vmatpush1.bf16.msra.mxu0 %v736
        %772 = vmatprep.subr.bf16.mxu0 0
        %773 = vmatpush2.bf16.msra.mxu0 0
        %774 = vmatprep.subr.bf16.mxu0 0
        %775 = vmatpush2.bf16.msra.mxu0 0
        %776 = vmatprep.subr.bf16.mxu0 0
        %777 = vmatpush2.bf16.msra.mxu0 0
        %778 = vmatprep.subr.bf16.mxu0 0
        %779 = vmatpush2.bf16.msra.mxu0 0
        %780 = vmatprep.subr.bf16.mxu0 0
        %781 = vmatpush2.bf16.msra.mxu0 0
        %782 = vmatprep.subr.bf16.mxu0 0
        %783 = vmatpush2.bf16.msra.mxu0 0
        %784 = vmatprep.subr.bf16.mxu0 0
        %785 = vmatpush2.bf16.msra.mxu0 0
        %786 = vmatprep.subr.bf16.mxu0 0
        %787 = vmatpush2.bf16.msra.mxu0 0
        %788 = vmatprep.mubr.bf16.mxu0 0
        %789 = vmatmul.mubr.bf16.gmra.mxu0 %v745
        %v790 = vpop.f32.mrf.mxu0
        %v791 = vadd.f32 %v678, %v790
        %v792 = vpop.f32.mrf.mxu0
        %v793 = vpop.f32.mrf.mxu0
        %v794 = vadd.f32 %v681, %v793
        %v795 = vpop.f32.mrf.mxu0
        %796 = vmatprep.mubr.bf16.mxu0 0
        %797 = vmatmul.mubr.bf16.gmra.mxu0 %v748
        %v798 = vpop.f32.mrf.mxu0
        %v799 = vadd.f32 %v686, %v798
        %v800 = vpop.f32.mrf.mxu0
        %v801 = vpop.f32.mrf.mxu0
        %v802 = vadd.f32 %v689, %v801
        %v803 = vpop.f32.mrf.mxu0
        %804 = vmatprep.mubr.bf16.mxu0 0
        %805 = vmatmul.mubr.bf16.gmra.mxu0 %v751
        %v806 = vpop.f32.mrf.mxu0
        %v807 = vadd.f32 %v694, %v806
        %v808 = vpop.f32.mrf.mxu0
        %v809 = vpop.f32.mrf.mxu0
        %v810 = vadd.f32 %v697, %v809
        %v811 = vpop.f32.mrf.mxu0
        %812 = vmatprep.mubr.bf16.mxu0 0
        %813 = vmatmul.mubr.bf16.gmra.mxu0 %v754
        %v814 = vpop.f32.mrf.mxu0
        %v815 = vadd.f32 %v702, %v814
        %v816 = vpop.f32.mrf.mxu0
        %v817 = vpop.f32.mrf.mxu0
        %v818 = vadd.f32 %v705, %v817
        %v819 = vpop.f32.mrf.mxu0
        %820 = vdwg.mxu0
        %v821 = vsel %vm630, %v791, -inf
        %v822 = vrot.slane %v821, 4
        %v823 = vmax.f32 %v821, %v822
        %v824 = vrot.slane %v823, 2
        %v825 = vmax.f32 %v823, %v824
        %v826 = vrot.slane %v825, 1
        %v827 = vmax.f32 %v825, %v826
        %v828 = vsel %vm630, %v794, -inf
        %v829 = vrot.slane %v828, 4
        %v830 = vmax.f32 %v828, %v829
        %v831 = vrot.slane %v830, 2
        %v832 = vmax.f32 %v830, %v831
        %v833 = vrot.slane %v832, 1
        %v834 = vmax.f32 %v832, %v833
        %v835 = vsel %vm630, %v799, -inf
        %v836 = vrot.slane %v835, 4
        %v837 = vmax.f32 %v835, %v836
        %v838 = vrot.slane %v837, 2
        %v839 = vmax.f32 %v837, %v838
        %v840 = vrot.slane %v839, 1
        %v841 = vmax.f32 %v839, %v840
        %v842 = vsel %vm630, %v802, -inf
        %v843 = vrot.slane %v842, 4
        %v844 = vmax.f32 %v842, %v843
        %v845 = vrot.slane %v844, 2
        %v846 = vmax.f32 %v844, %v845
        %v847 = vrot.slane %v846, 1
        %v848 = vmax.f32 %v846, %v847
        %v849 = vsel %vm630, %v807, -inf
        %v850 = vrot.slane %v849, 4
        %v851 = vmax.f32 %v849, %v850
        %v852 = vrot.slane %v851, 2
        %v853 = vmax.f32 %v851, %v852
        %v854 = vrot.slane %v853, 1
        %v855 = vmax.f32 %v853, %v854
        %v856 = vsel %vm630, %v810, -inf
        %v857 = vrot.slane %v856, 4
        %v858 = vmax.f32 %v856, %v857
        %v859 = vrot.slane %v858, 2
        %v860 = vmax.f32 %v858, %v859
        %v861 = vrot.slane %v860, 1
        %v862 = vmax.f32 %v860, %v861
        %v863 = vsel %vm630, %v815, -inf
        %v864 = vrot.slane %v863, 4
        %v865 = vmax.f32 %v863, %v864
        %v866 = vrot.slane %v865, 2
        %v867 = vmax.f32 %v865, %v866
        %v868 = vrot.slane %v867, 1
        %v869 = vmax.f32 %v867, %v868
        %v870 = vsel %vm630, %v818, -inf
        %v871 = vrot.slane %v870, 4
        %v872 = vmax.f32 %v870, %v871
        %v873 = vrot.slane %v872, 2
        %v874 = vmax.f32 %v872, %v873
        %v875 = vrot.slane %v874, 1
        %v876 = vmax.f32 %v874, %v875
        %s877 = scalar_lea.vmem %s3, 32
        %v878 = vld [vmem:[%s877] sm:$0xf]
        %v879 = vld [vmem:[%s877 + $0x4] sm:$0xf]
        %v880 = vld [vmem:[%s877 + $0x8] sm:$0xf]
        %v881 = vld [vmem:[%s877 + $0xc] sm:$0xf]
        %v882 = vld [vmem:[%s877 + $0x10] sm:$0xf]
        %v883 = vld [vmem:[%s877 + $0x14] sm:$0xf]
        %v884 = vld [vmem:[%s877 + $0x18] sm:$0xf]
        %v885 = vld [vmem:[%s877 + $0x1c] sm:$0xf]
        %s886 = scalar_lea.vmem %s7, 32
        %v887 = vld [vmem:[%s886] sm:$0xf]
        %v888 = vld [vmem:[%s886 + $0x4] sm:$0xf]
        %v889 = vld [vmem:[%s886 + $0x8] sm:$0xf]
        %v890 = vld [vmem:[%s886 + $0xc] sm:$0xf]
        %v891 = vld [vmem:[%s886 + $0x10] sm:$0xf]
        %v892 = vld [vmem:[%s886 + $0x14] sm:$0xf]
        %v893 = vld [vmem:[%s886 + $0x18] sm:$0xf]
        %v894 = vld [vmem:[%s886 + $0x1c] sm:$0xf]
        %v895 = vmax.f32 %v791, 0.0
        %v896 = vmax.f32 %v794, 0.0
        %v897 = vmax.f32 %v799, 0.0
        %v898 = vmax.f32 %v802, 0.0
        %v899 = vmax.f32 %v807, 0.0
        %v900 = vmax.f32 %v810, 0.0
        %v901 = vmax.f32 %v815, 0.0
        %v902 = vmax.f32 %v818, 0.0
        %v903 = vpack.c.bf16 %v896, %v895
        %v904 = vpack.c.bf16 %v898, %v897
        %v905 = vpack.c.bf16 %v900, %v899
        %v906 = vpack.c.bf16 %v902, %v901
        %v911 = vunpack.c.l.b16 %v878
        %v912 = vunpack.c.l.b16 %v879
        %v913 = vunpack.c.l.b16 %v880
        %v914 = vunpack.c.l.b16 %v881
        %v915 = vpack.c.b16 %v912, %v911
        %v916 = vpack.c.b16 %v914, %v913
        %v920 = vsel %vm630, %v903, 0
        %v923 = vsel %vm630, %v904, 0
        %v926 = vsel %vm630, %v905, 0
        %v929 = vsel %vm630, %v906, 0
        %931 = vmatprep.subr.bf16.mxu0 0
        %932 = vmatpush1.bf16.msra.mxu0 0
        %933 = vmatprep.subr.bf16.mxu0 0
        %934 = vmatpush1.bf16.msra.mxu0 0
        %935 = vmatprep.subr.bf16.mxu0 0
        %936 = vmatpush1.bf16.msra.mxu0 0
        %937 = vmatprep.subr.bf16.mxu0 0
        %938 = vmatpush1.bf16.msra.mxu0 0
        %939 = vmatprep.subr.bf16.mxu0 0
        %940 = vmatpush1.bf16.msra.mxu0 0
        %941 = vmatprep.subr.bf16.mxu0 0
        %942 = vmatpush1.bf16.msra.mxu0 0
        %943 = vmatprep.subr.bf16.mxu0 0
        %944 = vmatpush1.bf16.msra.mxu0 %v916
        %945 = vmatprep.subr.bf16.mxu0 0
        %946 = vmatpush1.bf16.msra.mxu0 %v915
        %947 = vmatprep.subr.bf16.mxu0 0
        %948 = vmatpush2.bf16.msra.mxu0 0
        %949 = vmatprep.subr.bf16.mxu0 0
        %950 = vmatpush2.bf16.msra.mxu0 0
        %951 = vmatprep.subr.bf16.mxu0 0
        %952 = vmatpush2.bf16.msra.mxu0 0
        %953 = vmatprep.subr.bf16.mxu0 0
        %954 = vmatpush2.bf16.msra.mxu0 0
        %955 = vmatprep.subr.bf16.mxu0 0
        %956 = vmatpush2.bf16.msra.mxu0 0
        %957 = vmatprep.subr.bf16.mxu0 0
        %958 = vmatpush2.bf16.msra.mxu0 0
        %959 = vmatprep.subr.bf16.mxu0 0
        %960 = vmatpush2.bf16.msra.mxu0 0
        %961 = vmatprep.subr.bf16.mxu0 0
        %962 = vmatpush2.bf16.msra.mxu0 0
        %963 = vmatprep.mubr.bf16.mxu0 0
        %964 = vmatmul.mubr.bf16.gmra.mxu0 %v920
        %v965 = vpop.f32.mrf.mxu0
        %v966 = vadd.f32 0.0, %v965
        %v967 = vpop.f32.mrf.mxu0
        %v968 = vpop.f32.mrf.mxu0
        %v969 = vadd.f32 0.0, %v968
        %v970 = vpop.f32.mrf.mxu0
        %971 = vmatprep.mubr.bf16.mxu0 0
        %972 = vmatmul.mubr.bf16.gmra.mxu0 %v923
        %v973 = vpop.f32.mrf.mxu0
        %v974 = vadd.f32 0.0, %v973
        %v975 = vpop.f32.mrf.mxu0
        %v976 = vpop.f32.mrf.mxu0
        %v977 = vadd.f32 0.0, %v976
        %v978 = vpop.f32.mrf.mxu0
        %979 = vmatprep.mubr.bf16.mxu0 0
        %980 = vmatmul.mubr.bf16.gmra.mxu0 %v926
        %v981 = vpop.f32.mrf.mxu0
        %v982 = vadd.f32 0.0, %v981
        %v983 = vpop.f32.mrf.mxu0
        %v984 = vpop.f32.mrf.mxu0
        %v985 = vadd.f32 0.0, %v984
        %v986 = vpop.f32.mrf.mxu0
        %987 = vmatprep.mubr.bf16.mxu0 0
        %988 = vmatmul.mubr.bf16.gmra.mxu0 %v929
        %v989 = vpop.f32.mrf.mxu0
        %v990 = vadd.f32 0.0, %v989
        %v991 = vpop.f32.mrf.mxu0
        %v992 = vpop.f32.mrf.mxu0
        %v993 = vadd.f32 0.0, %v992
        %v994 = vpop.f32.mrf.mxu0
        %995 = vdwg.mxu0
        %v996 = vmax.f32 %v827, 0.0
        %v997 = vmax.f32 %v834, 0.0
        %v998 = vmax.f32 %v841, 0.0
        %v999 = vmax.f32 %v848, 0.0
        %v1000 = vmax.f32 %v855, 0.0
        %v1001 = vmax.f32 %v862, 0.0
        %v1002 = vmax.f32 %v869, 0.0
        %v1003 = vmax.f32 %v876, 0.0
        %v1004 = vpack.c.bf16 %v996, %v996
        %v1005 = vpack.c.bf16 %v997, %v997
        %v1006 = vpack.c.bf16 %v998, %v998
        %v1007 = vpack.c.bf16 %v999, %v999
        %v1008 = vpack.c.bf16 %v1000, %v1000
        %v1009 = vpack.c.bf16 %v1001, %v1001
        %v1010 = vpack.c.bf16 %v1002, %v1002
        %v1011 = vpack.c.bf16 %v1003, %v1003
        %v1020 = vunpack.c.l.b16 %v1004
        %v1021 = vunpack.c.l.b16 %v1005
        %v1022 = vunpack.c.l.b16 %v1006
        %v1023 = vunpack.c.l.b16 %v1007
        %v1024 = vunpack.c.l.b16 %v1008
        %v1025 = vunpack.c.l.b16 %v1009
        %v1026 = vunpack.c.l.b16 %v1010
        %v1027 = vunpack.c.l.b16 %v1011
        %vm1028 = vcmask 1041409
        %v1029 = vsel %vm1028, %v1021, %v1020
        %vm1030 = vcmask 1042434
        %v1031 = vsel %vm1030, %v1022, %v1029
        %vm1032 = vcmask 1043459
        %v1033 = vsel %vm1032, %v1023, %v1031
        %vm1034 = vcmask 1044484
        %v1035 = vsel %vm1034, %v1024, %v1033
        %vm1036 = vcmask 1045509
        %v1037 = vsel %vm1036, %v1025, %v1035
        %vm1038 = vcmask 1046534
        %v1039 = vsel %vm1038, %v1026, %v1037
        %vm1040 = vcmask 1047559
        %v1041 = vsel %vm1040, %v1027, %v1039
        %v1042 = vpack.c.b16 %v1041, %v1041
        %v1047 = vunpack.c.l.b16 %v882
        %v1048 = vunpack.c.l.b16 %v883
        %v1049 = vunpack.c.l.b16 %v884
        %v1050 = vunpack.c.l.b16 %v885
        %v1051 = vpack.c.b16 %v1048, %v1047
        %v1052 = vpack.c.b16 %v1050, %v1049
        %v1056 = vsel %vm630, %v1042, 0
        %1058 = vmatprep.subr.bf16.mxu0 0
        %1059 = vmatpush1.bf16.msra.mxu0 0
        %1060 = vmatprep.subr.bf16.mxu0 0
        %1061 = vmatpush1.bf16.msra.mxu0 0
        %1062 = vmatprep.subr.bf16.mxu0 0
        %1063 = vmatpush1.bf16.msra.mxu0 0
        %1064 = vmatprep.subr.bf16.mxu0 0
        %1065 = vmatpush1.bf16.msra.mxu0 0
        %1066 = vmatprep.subr.bf16.mxu0 0
        %1067 = vmatpush1.bf16.msra.mxu0 0
        %1068 = vmatprep.subr.bf16.mxu0 0
        %1069 = vmatpush1.bf16.msra.mxu0 0
        %1070 = vmatprep.subr.bf16.mxu0 0
        %1071 = vmatpush1.bf16.msra.mxu0 %v1052
        %1072 = vmatprep.subr.bf16.mxu0 0
        %1073 = vmatpush1.bf16.msra.mxu0 %v1051
        %1074 = vmatprep.subr.bf16.mxu0 0
        %1075 = vmatpush2.bf16.msra.mxu0 0
        %1076 = vmatprep.subr.bf16.mxu0 0
        %1077 = vmatpush2.bf16.msra.mxu0 0
        %1078 = vmatprep.subr.bf16.mxu0 0
        %1079 = vmatpush2.bf16.msra.mxu0 0
        %1080 = vmatprep.subr.bf16.mxu0 0
        %1081 = vmatpush2.bf16.msra.mxu0 0
        %1082 = vmatprep.subr.bf16.mxu0 0
        %1083 = vmatpush2.bf16.msra.mxu0 0
        %1084 = vmatprep.subr.bf16.mxu0 0
        %1085 = vmatpush2.bf16.msra.mxu0 0
        %1086 = vmatprep.subr.bf16.mxu0 0
        %1087 = vmatpush2.bf16.msra.mxu0 0
        %1088 = vmatprep.subr.bf16.mxu0 0
        %1089 = vmatpush2.bf16.msra.mxu0 0
        %1090 = vmatprep.mubr.bf16.mxu0 0
        %1091 = vmatmul.mubr.bf16.gmra.mxu0 %v1056
        %v1092 = vpop.f32.mrf.mxu0
        %v1093 = vadd.f32 0.0, %v1092
        %v1094 = vpop.f32.mrf.mxu0
        %v1095 = vpop.f32.mrf.mxu0
        %v1096 = vpop.f32.mrf.mxu0
        %1097 = vdwg.mxu0
        %v1099 = vcombine.high %v1093, %v1093
        %v1101 = vunpack.c.l.s4 1966171168
        %v1102 = vunpack.c.0.s8 %v1101
        %v1103 = vlaneseq
        %v1104 = vshrl.u32 %v1103, 7
        %v1105 = vsub.s32 %v1102, %v1104
        %v1106 = vrot.slane %v1093, %v1105
        %v1108 = vunpack.c.l.s4 1966171168
        %v1109 = vunpack.c.0.s8 %v1108
        %v1110 = vlaneseq
        %v1111 = vshrl.u32 %v1110, 7
        %v1112 = vsub.s32 %v1109, %v1111
        %v1113 = vrot.slane %v1099, %v1112
        %v1114 = vcombine.high %v1106, %v1106
        %v1115 = vcombine.high %v1113, %v1113
        %v1117 = vunpack.c.l.s4 1966171168
        %v1118 = vunpack.c.0.s8 %v1117
        %v1119 = vlaneseq
        %v1120 = vshrl.u32 %v1119, 7
        %v1121 = vsub.s32 %v1118, %v1120
        %v1122 = vrot.slane %v1106, %v1121
        %v1124 = vunpack.c.l.s4 1966171168
        %v1125 = vunpack.c.0.s8 %v1124
        %v1126 = vlaneseq
        %v1127 = vshrl.u32 %v1126, 7
        %v1128 = vsub.s32 %v1125, %v1127
        %v1129 = vrot.slane %v1113, %v1128
        %v1131 = vunpack.c.l.s4 1966171168
        %v1132 = vunpack.c.0.s8 %v1131
        %v1133 = vlaneseq
        %v1134 = vshrl.u32 %v1133, 7
        %v1135 = vsub.s32 %v1132, %v1134
        %v1136 = vrot.slane %v1114, %v1135
        %v1138 = vunpack.c.l.s4 1966171168
        %v1139 = vunpack.c.0.s8 %v1138
        %v1140 = vlaneseq
        %v1141 = vshrl.u32 %v1140, 7
        %v1142 = vsub.s32 %v1139, %v1141
        %v1143 = vrot.slane %v1115, %v1142
        %v1144 = vcombine.high %v1122, %v1122
        %v1145 = vcombine.high %v1129, %v1129
        %v1146 = vcombine.high %v1136, %v1136
        %v1147 = vcombine.high %v1143, %v1143
        %v1148 = vlaneseq
        %v1149 = vshrl.u32 %v1148, 7
        %v1150 = vsub.s32 0, %v1149
        %v1151 = vrot.slane %v1122, %v1150
        %v1152 = vlaneseq
        %v1153 = vshrl.u32 %v1152, 7
        %v1154 = vsub.s32 0, %v1153
        %v1155 = vrot.slane %v1136, %v1154
        %v1156 = vlaneseq
        %v1157 = vshrl.u32 %v1156, 7
        %v1158 = vsub.s32 0, %v1157
        %v1159 = vrot.slane %v1144, %v1158
        %v1160 = vlaneseq
        %v1161 = vshrl.u32 %v1160, 7
        %v1162 = vsub.s32 0, %v1161
        %v1163 = vrot.slane %v1146, %v1162
        %v1164 = vlaneseq
        %v1165 = vshrl.u32 %v1164, 7
        %v1166 = vsub.s32 0, %v1165
        %v1167 = vrot.slane %v1129, %v1166
        %v1168 = vlaneseq
        %v1169 = vshrl.u32 %v1168, 7
        %v1170 = vsub.s32 0, %v1169
        %v1171 = vrot.slane %v1143, %v1170
        %v1172 = vlaneseq
        %v1173 = vshrl.u32 %v1172, 7
        %v1174 = vsub.s32 0, %v1173
        %v1175 = vrot.slane %v1145, %v1174
        %v1176 = vlaneseq
        %v1177 = vshrl.u32 %v1176, 7
        %v1178 = vsub.s32 0, %v1177
        %v1179 = vrot.slane %v1147, %v1178
        %v1188 = vadd.f32 %v966, %v1151
        %v1189 = vadd.f32 %v969, %v1155
        %v1190 = vadd.f32 %v974, %v1159
        %v1191 = vadd.f32 %v977, %v1163
        %v1192 = vadd.f32 %v982, %v1167
        %v1193 = vadd.f32 %v985, %v1171
        %v1194 = vadd.f32 %v990, %v1175
        %v1195 = vadd.f32 %v993, %v1179
        %s1196 = scalar_lea.vmem %s4, 1
        %v1197 = vld [vmem:[%s1196] sm:$0x1]
        %v1199 = vlaneseq
        %v1200 = vshrl.u32 %v1199, 7
        %v1201 = vsub.s32 0, %v1200
        %v1202 = vrot.slane %v1197, %v1201
        %v1204 = vadd.f32 %v1188, %v1202
        %v1205 = vadd.f32 %v1189, %v1202
        %v1206 = vadd.f32 %v1190, %v1202
        %v1207 = vadd.f32 %v1191, %v1202
        %v1208 = vadd.f32 %v1192, %v1202
        %v1209 = vadd.f32 %v1193, %v1202
        %v1210 = vadd.f32 %v1194, %v1202
        %v1211 = vadd.f32 %v1195, %v1202
        %v1212 = vmax.f32 %v1204, 0.0
        %v1213 = vmax.f32 %v1205, 0.0
        %v1214 = vmax.f32 %v1206, 0.0
        %v1215 = vmax.f32 %v1207, 0.0
        %v1216 = vmax.f32 %v1208, 0.0
        %v1217 = vmax.f32 %v1209, 0.0
        %v1218 = vmax.f32 %v1210, 0.0
        %v1219 = vmax.f32 %v1211, 0.0
        %s1220 = scalar_lea.vmem %s5, 16
        %v1221 = vld [vmem:[%s1220] sm:$0xf]
        %v1222 = vld [vmem:[%s1220 + $0x4] sm:$0xf]
        %v1223 = vld [vmem:[%s1220 + $0x8] sm:$0xf]
        %v1224 = vld [vmem:[%s1220 + $0xc] sm:$0xf]
        %v1225 = vpack.c.bf16 %v1213, %v1212
        %v1226 = vpack.c.bf16 %v1215, %v1214
        %v1227 = vpack.c.bf16 %v1217, %v1216
        %v1228 = vpack.c.bf16 %v1219, %v1218
        %s1229 = scalar_lea.vmem %s6, 1
        %v1230 = vld [vmem:[%s1229] sm:$0x1]
        %v1232 = vlaneseq
        %v1233 = vshrl.u32 %v1232, 7
        %v1234 = vsub.s32 0, %v1233
        %v1235 = vrot.slane %v1230, %v1234
        %v1241 = vunpack.c.l.b16 %v1221
        %v1242 = vunpack.c.l.b16 %v1222
        %v1243 = vunpack.c.l.b16 %v1223
        %v1244 = vunpack.c.l.b16 %v1224
        %v1245 = vpack.c.b16 %v1242, %v1241
        %v1246 = vpack.c.b16 %v1244, %v1243
        %v1250 = vsel %vm630, %v1225, 0
        %v1253 = vsel %vm630, %v1226, 0
        %v1256 = vsel %vm630, %v1227, 0
        %v1259 = vsel %vm630, %v1228, 0
        %1261 = vmatprep.subr.bf16.mxu0 0
        %1262 = vmatpush1.bf16.msra.mxu0 0
        %1263 = vmatprep.subr.bf16.mxu0 0
        %1264 = vmatpush1.bf16.msra.mxu0 0
        %1265 = vmatprep.subr.bf16.mxu0 0
        %1266 = vmatpush1.bf16.msra.mxu0 0
        %1267 = vmatprep.subr.bf16.mxu0 0
        %1268 = vmatpush1.bf16.msra.mxu0 0
        %1269 = vmatprep.subr.bf16.mxu0 0
        %1270 = vmatpush1.bf16.msra.mxu0 0
        %1271 = vmatprep.subr.bf16.mxu0 0
        %1272 = vmatpush1.bf16.msra.mxu0 0
        %1273 = vmatprep.subr.bf16.mxu0 0
        %1274 = vmatpush1.bf16.msra.mxu0 %v1246
        %1275 = vmatprep.subr.bf16.mxu0 0
        %1276 = vmatpush1.bf16.msra.mxu0 %v1245
        %1277 = vmatprep.subr.bf16.mxu0 0
        %1278 = vmatpush2.bf16.msra.mxu0 0
        %1279 = vmatprep.subr.bf16.mxu0 0
        %1280 = vmatpush2.bf16.msra.mxu0 0
        %1281 = vmatprep.subr.bf16.mxu0 0
        %1282 = vmatpush2.bf16.msra.mxu0 0
        %1283 = vmatprep.subr.bf16.mxu0 0
        %1284 = vmatpush2.bf16.msra.mxu0 0
        %1285 = vmatprep.subr.bf16.mxu0 0
        %1286 = vmatpush2.bf16.msra.mxu0 0
        %1287 = vmatprep.subr.bf16.mxu0 0
        %1288 = vmatpush2.bf16.msra.mxu0 0
        %1289 = vmatprep.subr.bf16.mxu0 0
        %1290 = vmatpush2.bf16.msra.mxu0 0
        %1291 = vmatprep.subr.bf16.mxu0 0
        %1292 = vmatpush2.bf16.msra.mxu0 0
        %1293 = vmatprep.mubr.bf16.mxu0 0
        %1294 = vmatmul.mubr.bf16.gmra.mxu0 %v1250
        %v1295 = vpop.f32.mrf.mxu0
        %v1296 = vadd.f32 %v1235, %v1295
        %v1297 = vpop.f32.mrf.mxu0
        %v1298 = vpop.f32.mrf.mxu0
        %v1299 = vadd.f32 %v1235, %v1298
        %v1300 = vpop.f32.mrf.mxu0
        %1301 = vmatprep.mubr.bf16.mxu0 0
        %1302 = vmatmul.mubr.bf16.gmra.mxu0 %v1253
        %v1303 = vpop.f32.mrf.mxu0
        %v1304 = vadd.f32 %v1235, %v1303
        %v1305 = vpop.f32.mrf.mxu0
        %v1306 = vpop.f32.mrf.mxu0
        %v1307 = vadd.f32 %v1235, %v1306
        %v1308 = vpop.f32.mrf.mxu0
        %1309 = vmatprep.mubr.bf16.mxu0 0
        %1310 = vmatmul.mubr.bf16.gmra.mxu0 %v1256
        %v1311 = vpop.f32.mrf.mxu0
        %v1312 = vadd.f32 %v1235, %v1311
        %v1313 = vpop.f32.mrf.mxu0
        %v1314 = vpop.f32.mrf.mxu0
        %v1315 = vadd.f32 %v1235, %v1314
        %v1316 = vpop.f32.mrf.mxu0
        %1317 = vmatprep.mubr.bf16.mxu0 0
        %1318 = vmatmul.mubr.bf16.gmra.mxu0 %v1259
        %v1319 = vpop.f32.mrf.mxu0
        %v1320 = vadd.f32 %v1235, %v1319
        %v1321 = vpop.f32.mrf.mxu0
        %v1322 = vpop.f32.mrf.mxu0
        %v1323 = vadd.f32 %v1235, %v1322
        %v1324 = vpop.f32.mrf.mxu0
        %1325 = vdwg.mxu0
        %v1326 = vpack.c.bf16 %v794, %v791
        %v1327 = vpack.c.bf16 %v802, %v799
        %v1328 = vpack.c.bf16 %v810, %v807
        %v1329 = vpack.c.bf16 %v818, %v815
        %v1330 = vpack.c.bf16 %v827, %v827
        %v1331 = vpack.c.bf16 %v834, %v834
        %v1332 = vpack.c.bf16 %v841, %v841
        %v1333 = vpack.c.bf16 %v848, %v848
        %v1334 = vpack.c.bf16 %v855, %v855
        %v1335 = vpack.c.bf16 %v862, %v862
        %v1336 = vpack.c.bf16 %v869, %v869
        %v1337 = vpack.c.bf16 %v876, %v876
        %v1346 = vunpack.c.l.b16 %v1330
        %v1347 = vunpack.c.l.b16 %v1331
        %v1348 = vunpack.c.l.b16 %v1332
        %v1349 = vunpack.c.l.b16 %v1333
        %v1350 = vunpack.c.l.b16 %v1334
        %v1351 = vunpack.c.l.b16 %v1335
        %v1352 = vunpack.c.l.b16 %v1336
        %v1353 = vunpack.c.l.b16 %v1337
        %v1354 = vsel %vm1028, %v1347, %v1346
        %v1355 = vsel %vm1030, %v1348, %v1354
        %v1356 = vsel %vm1032, %v1349, %v1355
        %v1357 = vsel %vm1034, %v1350, %v1356
        %v1358 = vsel %vm1036, %v1351, %v1357
        %v1359 = vsel %vm1038, %v1352, %v1358
        %v1360 = vsel %vm1040, %v1353, %v1359
        %v1361 = vpack.c.b16 %v1360, %v1360
        %v1366 = vunpack.c.l.b16 %v891
        %v1367 = vunpack.c.l.b16 %v892
        %v1368 = vunpack.c.l.b16 %v893
        %v1369 = vunpack.c.l.b16 %v894
        %v1370 = vpack.c.b16 %v1367, %v1366
        %v1371 = vpack.c.b16 %v1369, %v1368
        %v1375 = vsel %vm630, %v1361, 0
        %1377 = vmatprep.subr.bf16.mxu0 0
        %1378 = vmatpush1.bf16.msra.mxu0 0
        %1379 = vmatprep.subr.bf16.mxu0 0
        %1380 = vmatpush1.bf16.msra.mxu0 0
        %1381 = vmatprep.subr.bf16.mxu0 0
        %1382 = vmatpush1.bf16.msra.mxu0 0
        %1383 = vmatprep.subr.bf16.mxu0 0
        %1384 = vmatpush1.bf16.msra.mxu0 0
        %1385 = vmatprep.subr.bf16.mxu0 0
        %1386 = vmatpush1.bf16.msra.mxu0 0
        %1387 = vmatprep.subr.bf16.mxu0 0
        %1388 = vmatpush1.bf16.msra.mxu0 0
        %1389 = vmatprep.subr.bf16.mxu0 0
        %1390 = vmatpush1.bf16.msra.mxu0 %v1371
        %1391 = vmatprep.subr.bf16.mxu0 0
        %1392 = vmatpush1.bf16.msra.mxu0 %v1370
        %1393 = vmatprep.subr.bf16.mxu0 0
        %1394 = vmatpush2.bf16.msra.mxu0 0
        %1395 = vmatprep.subr.bf16.mxu0 0
        %1396 = vmatpush2.bf16.msra.mxu0 0
        %1397 = vmatprep.subr.bf16.mxu0 0
        %1398 = vmatpush2.bf16.msra.mxu0 0
        %1399 = vmatprep.subr.bf16.mxu0 0
        %1400 = vmatpush2.bf16.msra.mxu0 0
        %1401 = vmatprep.subr.bf16.mxu0 0
        %1402 = vmatpush2.bf16.msra.mxu0 0
        %1403 = vmatprep.subr.bf16.mxu0 0
        %1404 = vmatpush2.bf16.msra.mxu0 0
        %1405 = vmatprep.subr.bf16.mxu0 0
        %1406 = vmatpush2.bf16.msra.mxu0 0
        %1407 = vmatprep.subr.bf16.mxu0 0
        %1408 = vmatpush2.bf16.msra.mxu0 0
        %1409 = vmatprep.mubr.bf16.mxu0 0
        %1410 = vmatmul.mubr.bf16.gmra.mxu0 %v1375
        %v1411 = vpop.f32.mrf.mxu0
        %v1412 = vadd.f32 0.0, %v1411
        %v1413 = vpop.f32.mrf.mxu0
        %v1414 = vpop.f32.mrf.mxu0
        %v1415 = vpop.f32.mrf.mxu0
        %1416 = vdwg.mxu0
        %v1421 = vunpack.c.l.b16 %v887
        %v1422 = vunpack.c.l.b16 %v888
        %v1423 = vunpack.c.l.b16 %v889
        %v1424 = vunpack.c.l.b16 %v890
        %v1425 = vpack.c.b16 %v1422, %v1421
        %v1426 = vpack.c.b16 %v1424, %v1423
        %v1430 = vsel %vm630, %v1326, 0
        %v1433 = vsel %vm630, %v1327, 0
        %v1436 = vsel %vm630, %v1328, 0
        %v1439 = vsel %vm630, %v1329, 0
        %1441 = vmatprep.subr.bf16.mxu0 0
        %1442 = vmatpush1.bf16.msra.mxu0 0
        %1443 = vmatprep.subr.bf16.mxu0 0
        %1444 = vmatpush1.bf16.msra.mxu0 0
        %1445 = vmatprep.subr.bf16.mxu0 0
        %1446 = vmatpush1.bf16.msra.mxu0 0
        %1447 = vmatprep.subr.bf16.mxu0 0
        %1448 = vmatpush1.bf16.msra.mxu0 0
        %1449 = vmatprep.subr.bf16.mxu0 0
        %1450 = vmatpush1.bf16.msra.mxu0 0
        %1451 = vmatprep.subr.bf16.mxu0 0
        %1452 = vmatpush1.bf16.msra.mxu0 0
        %1453 = vmatprep.subr.bf16.mxu0 0
        %1454 = vmatpush1.bf16.msra.mxu0 %v1426
        %1455 = vmatprep.subr.bf16.mxu0 0
        %1456 = vmatpush1.bf16.msra.mxu0 %v1425
        %1457 = vmatprep.subr.bf16.mxu0 0
        %1458 = vmatpush2.bf16.msra.mxu0 0
        %1459 = vmatprep.subr.bf16.mxu0 0
        %1460 = vmatpush2.bf16.msra.mxu0 0
        %1461 = vmatprep.subr.bf16.mxu0 0
        %1462 = vmatpush2.bf16.msra.mxu0 0
        %1463 = vmatprep.subr.bf16.mxu0 0
        %1464 = vmatpush2.bf16.msra.mxu0 0
        %1465 = vmatprep.subr.bf16.mxu0 0
        %1466 = vmatpush2.bf16.msra.mxu0 0
        %1467 = vmatprep.subr.bf16.mxu0 0
        %1468 = vmatpush2.bf16.msra.mxu0 0
        %1469 = vmatprep.subr.bf16.mxu0 0
        %1470 = vmatpush2.bf16.msra.mxu0 0
        %1471 = vmatprep.subr.bf16.mxu0 0
        %1472 = vmatpush2.bf16.msra.mxu0 0
        %1473 = vmatprep.mubr.bf16.mxu0 0
        %1474 = vmatmul.mubr.bf16.gmra.mxu0 %v1430
        %v1475 = vpop.f32.mrf.mxu0
        %v1476 = vadd.f32 %v1296, %v1475
        %v1477 = vpop.f32.mrf.mxu0
        %v1478 = vpop.f32.mrf.mxu0
        %v1479 = vadd.f32 %v1299, %v1478
        %v1480 = vpop.f32.mrf.mxu0
        %1481 = vmatprep.mubr.bf16.mxu0 0
        %1482 = vmatmul.mubr.bf16.gmra.mxu0 %v1433
        %v1483 = vpop.f32.mrf.mxu0
        %v1484 = vadd.f32 %v1304, %v1483
        %v1485 = vpop.f32.mrf.mxu0
        %v1486 = vpop.f32.mrf.mxu0
        %v1487 = vadd.f32 %v1307, %v1486
        %v1488 = vpop.f32.mrf.mxu0
        %1489 = vmatprep.mubr.bf16.mxu0 0
        %1490 = vmatmul.mubr.bf16.gmra.mxu0 %v1436
        %v1491 = vpop.f32.mrf.mxu0
        %v1492 = vadd.f32 %v1312, %v1491
        %v1493 = vpop.f32.mrf.mxu0
        %v1494 = vpop.f32.mrf.mxu0
        %v1495 = vadd.f32 %v1315, %v1494
        %v1496 = vpop.f32.mrf.mxu0
        %1497 = vmatprep.mubr.bf16.mxu0 0
        %1498 = vmatmul.mubr.bf16.gmra.mxu0 %v1439
        %v1499 = vpop.f32.mrf.mxu0
        %v1500 = vadd.f32 %v1320, %v1499
        %v1501 = vpop.f32.mrf.mxu0
        %v1502 = vpop.f32.mrf.mxu0
        %v1503 = vadd.f32 %v1323, %v1502
        %v1504 = vpop.f32.mrf.mxu0
        %1505 = vdwg.mxu0
        %v1507 = vcombine.high %v1412, %v1412
        %v1509 = vunpack.c.l.s4 1966171168
        %v1510 = vunpack.c.0.s8 %v1509
        %v1511 = vlaneseq
        %v1512 = vshrl.u32 %v1511, 7
        %v1513 = vsub.s32 %v1510, %v1512
        %v1514 = vrot.slane %v1412, %v1513
        %v1516 = vunpack.c.l.s4 1966171168
        %v1517 = vunpack.c.0.s8 %v1516
        %v1518 = vlaneseq
        %v1519 = vshrl.u32 %v1518, 7
        %v1520 = vsub.s32 %v1517, %v1519
        %v1521 = vrot.slane %v1507, %v1520
        %v1522 = vcombine.high %v1514, %v1514
        %v1523 = vcombine.high %v1521, %v1521
        %v1525 = vunpack.c.l.s4 1966171168
        %v1526 = vunpack.c.0.s8 %v1525
        %v1527 = vlaneseq
        %v1528 = vshrl.u32 %v1527, 7
        %v1529 = vsub.s32 %v1526, %v1528
        %v1530 = vrot.slane %v1514, %v1529
        %v1532 = vunpack.c.l.s4 1966171168
        %v1533 = vunpack.c.0.s8 %v1532
        %v1534 = vlaneseq
        %v1535 = vshrl.u32 %v1534, 7
        %v1536 = vsub.s32 %v1533, %v1535
        %v1537 = vrot.slane %v1521, %v1536
        %v1539 = vunpack.c.l.s4 1966171168
        %v1540 = vunpack.c.0.s8 %v1539
        %v1541 = vlaneseq
        %v1542 = vshrl.u32 %v1541, 7
        %v1543 = vsub.s32 %v1540, %v1542
        %v1544 = vrot.slane %v1522, %v1543
        %v1546 = vunpack.c.l.s4 1966171168
        %v1547 = vunpack.c.0.s8 %v1546
        %v1548 = vlaneseq
        %v1549 = vshrl.u32 %v1548, 7
        %v1550 = vsub.s32 %v1547, %v1549
        %v1551 = vrot.slane %v1523, %v1550
        %v1552 = vcombine.high %v1530, %v1530
        %v1553 = vcombine.high %v1537, %v1537
        %v1554 = vcombine.high %v1544, %v1544
        %v1555 = vcombine.high %v1551, %v1551
        %v1556 = vlaneseq
        %v1557 = vshrl.u32 %v1556, 7
        %v1558 = vsub.s32 0, %v1557
        %v1559 = vrot.slane %v1530, %v1558
        %v1560 = vlaneseq
        %v1561 = vshrl.u32 %v1560, 7
        %v1562 = vsub.s32 0, %v1561
        %v1563 = vrot.slane %v1544, %v1562
        %v1564 = vlaneseq
        %v1565 = vshrl.u32 %v1564, 7
        %v1566 = vsub.s32 0, %v1565
        %v1567 = vrot.slane %v1552, %v1566
        %v1568 = vlaneseq
        %v1569 = vshrl.u32 %v1568, 7
        %v1570 = vsub.s32 0, %v1569
        %v1571 = vrot.slane %v1554, %v1570
        %v1572 = vlaneseq
        %v1573 = vshrl.u32 %v1572, 7
        %v1574 = vsub.s32 0, %v1573
        %v1575 = vrot.slane %v1537, %v1574
        %v1576 = vlaneseq
        %v1577 = vshrl.u32 %v1576, 7
        %v1578 = vsub.s32 0, %v1577
        %v1579 = vrot.slane %v1551, %v1578
        %v1580 = vlaneseq
        %v1581 = vshrl.u32 %v1580, 7
        %v1582 = vsub.s32 0, %v1581
        %v1583 = vrot.slane %v1553, %v1582
        %v1584 = vlaneseq
        %v1585 = vshrl.u32 %v1584, 7
        %v1586 = vsub.s32 0, %v1585
        %v1587 = vrot.slane %v1555, %v1586
        %v1596 = vadd.f32 %v1476, %v1559
        %v1597 = vadd.f32 %v1479, %v1563
        %v1598 = vadd.f32 %v1484, %v1567
        %v1599 = vadd.f32 %v1487, %v1571
        %v1600 = vadd.f32 %v1492, %v1575
        %v1601 = vadd.f32 %v1495, %v1579
        %v1602 = vadd.f32 %v1500, %v1583
        %v1603 = vadd.f32 %v1503, %v1587
        %v1604 = vsel %vm630, %v1596, -inf
        %v1605 = vrot.slane %v1604, 4
        %v1606 = vmax.f32 %v1604, %v1605
        %v1607 = vrot.slane %v1606, 2
        %v1608 = vmax.f32 %v1606, %v1607
        %v1609 = vrot.slane %v1608, 1
        %v1610 = vmax.f32 %v1608, %v1609
        %v1611 = vsel %vm630, %v1597, -inf
        %v1612 = vrot.slane %v1611, 4
        %v1613 = vmax.f32 %v1611, %v1612
        %v1614 = vrot.slane %v1613, 2
        %v1615 = vmax.f32 %v1613, %v1614
        %v1616 = vrot.slane %v1615, 1
        %v1617 = vmax.f32 %v1615, %v1616
        %v1618 = vsel %vm630, %v1598, -inf
        %v1619 = vrot.slane %v1618, 4
        %v1620 = vmax.f32 %v1618, %v1619
        %v1621 = vrot.slane %v1620, 2
        %v1622 = vmax.f32 %v1620, %v1621
        %v1623 = vrot.slane %v1622, 1
        %v1624 = vmax.f32 %v1622, %v1623
        %v1625 = vsel %vm630, %v1599, -inf
        %v1626 = vrot.slane %v1625, 4
        %v1627 = vmax.f32 %v1625, %v1626
        %v1628 = vrot.slane %v1627, 2
        %v1629 = vmax.f32 %v1627, %v1628
        %v1630 = vrot.slane %v1629, 1
        %v1631 = vmax.f32 %v1629, %v1630
        %v1632 = vsel %vm630, %v1600, -inf
        %v1633 = vrot.slane %v1632, 4
        %v1634 = vmax.f32 %v1632, %v1633
        %v1635 = vrot.slane %v1634, 2
        %v1636 = vmax.f32 %v1634, %v1635
        %v1637 = vrot.slane %v1636, 1
        %v1638 = vmax.f32 %v1636, %v1637
        %v1639 = vsel %vm630, %v1601, -inf
        %v1640 = vrot.slane %v1639, 4
        %v1641 = vmax.f32 %v1639, %v1640
        %v1642 = vrot.slane %v1641, 2
        %v1643 = vmax.f32 %v1641, %v1642
        %v1644 = vrot.slane %v1643, 1
        %v1645 = vmax.f32 %v1643, %v1644
        %v1646 = vsel %vm630, %v1602, -inf
        %v1647 = vrot.slane %v1646, 4
        %v1648 = vmax.f32 %v1646, %v1647
        %v1649 = vrot.slane %v1648, 2
        %v1650 = vmax.f32 %v1648, %v1649
        %v1651 = vrot.slane %v1650, 1
        %v1652 = vmax.f32 %v1650, %v1651
        %v1653 = vsel %vm630, %v1603, -inf
        %v1654 = vrot.slane %v1653, 4
        %v1655 = vmax.f32 %v1653, %v1654
        %v1656 = vrot.slane %v1655, 2
        %v1657 = vmax.f32 %v1655, %v1656
        %v1658 = vrot.slane %v1657, 1
        %v1659 = vmax.f32 %v1657, %v1658
        %s1660 = scalar_lea.vmem %s3, 64
        %v1661 = vld [vmem:[%s1660] sm:$0xf]
        %v1662 = vld [vmem:[%s1660 + $0x4] sm:$0xf]
        %v1663 = vld [vmem:[%s1660 + $0x8] sm:$0xf]
        %v1664 = vld [vmem:[%s1660 + $0xc] sm:$0xf]
        %v1665 = vld [vmem:[%s1660 + $0x10] sm:$0xf]
        %v1666 = vld [vmem:[%s1660 + $0x14] sm:$0xf]
        %v1667 = vld [vmem:[%s1660 + $0x18] sm:$0xf]
        %v1668 = vld [vmem:[%s1660 + $0x1c] sm:$0xf]
        %s1669 = scalar_lea.vmem %s7, 64
        %v1670 = vld [vmem:[%s1669] sm:$0xf]
        %v1671 = vld [vmem:[%s1669 + $0x4] sm:$0xf]
        %v1672 = vld [vmem:[%s1669 + $0x8] sm:$0xf]
        %v1673 = vld [vmem:[%s1669 + $0xc] sm:$0xf]
        %v1674 = vld [vmem:[%s1669 + $0x10] sm:$0xf]
        %v1675 = vld [vmem:[%s1669 + $0x14] sm:$0xf]
        %v1676 = vld [vmem:[%s1669 + $0x18] sm:$0xf]
        %v1677 = vld [vmem:[%s1669 + $0x1c] sm:$0xf]
        %v1678 = vmax.f32 %v1596, 0.0
        %v1679 = vmax.f32 %v1597, 0.0
        %v1680 = vmax.f32 %v1598, 0.0
        %v1681 = vmax.f32 %v1599, 0.0
        %v1682 = vmax.f32 %v1600, 0.0
        %v1683 = vmax.f32 %v1601, 0.0
        %v1684 = vmax.f32 %v1602, 0.0
        %v1685 = vmax.f32 %v1603, 0.0
        %v1686 = vpack.c.bf16 %v1679, %v1678
        %v1687 = vpack.c.bf16 %v1681, %v1680
        %v1688 = vpack.c.bf16 %v1683, %v1682
        %v1689 = vpack.c.bf16 %v1685, %v1684
        %v1694 = vunpack.c.l.b16 %v1661
        %v1695 = vunpack.c.l.b16 %v1662
        %v1696 = vunpack.c.l.b16 %v1663
        %v1697 = vunpack.c.l.b16 %v1664
        %v1698 = vpack.c.b16 %v1695, %v1694
        %v1699 = vpack.c.b16 %v1697, %v1696
        %v1703 = vsel %vm630, %v1686, 0
        %v1706 = vsel %vm630, %v1687, 0
        %v1709 = vsel %vm630, %v1688, 0
        %v1712 = vsel %vm630, %v1689, 0
        %1714 = vmatprep.subr.bf16.mxu0 0
        %1715 = vmatpush1.bf16.msra.mxu0 0
        %1716 = vmatprep.subr.bf16.mxu0 0
        %1717 = vmatpush1.bf16.msra.mxu0 0
        %1718 = vmatprep.subr.bf16.mxu0 0
        %1719 = vmatpush1.bf16.msra.mxu0 0
        %1720 = vmatprep.subr.bf16.mxu0 0
        %1721 = vmatpush1.bf16.msra.mxu0 0
        %1722 = vmatprep.subr.bf16.mxu0 0
        %1723 = vmatpush1.bf16.msra.mxu0 0
        %1724 = vmatprep.subr.bf16.mxu0 0
        %1725 = vmatpush1.bf16.msra.mxu0 0
        %1726 = vmatprep.subr.bf16.mxu0 0
        %1727 = vmatpush1.bf16.msra.mxu0 %v1699
        %1728 = vmatprep.subr.bf16.mxu0 0
        %1729 = vmatpush1.bf16.msra.mxu0 %v1698
        %1730 = vmatprep.subr.bf16.mxu0 0
        %1731 = vmatpush2.bf16.msra.mxu0 0
        %1732 = vmatprep.subr.bf16.mxu0 0
        %1733 = vmatpush2.bf16.msra.mxu0 0
        %1734 = vmatprep.subr.bf16.mxu0 0
        %1735 = vmatpush2.bf16.msra.mxu0 0
        %1736 = vmatprep.subr.bf16.mxu0 0
        %1737 = vmatpush2.bf16.msra.mxu0 0
        %1738 = vmatprep.subr.bf16.mxu0 0
        %1739 = vmatpush2.bf16.msra.mxu0 0
        %1740 = vmatprep.subr.bf16.mxu0 0
        %1741 = vmatpush2.bf16.msra.mxu0 0
        %1742 = vmatprep.subr.bf16.mxu0 0
        %1743 = vmatpush2.bf16.msra.mxu0 0
        %1744 = vmatprep.subr.bf16.mxu0 0
        %1745 = vmatpush2.bf16.msra.mxu0 0
        %1746 = vmatprep.mubr.bf16.mxu0 0
        %1747 = vmatmul.mubr.bf16.gmra.mxu0 %v1703
        %v1748 = vpop.f32.mrf.mxu0
        %v1749 = vadd.f32 0.0, %v1748
        %v1750 = vpop.f32.mrf.mxu0
        %v1751 = vpop.f32.mrf.mxu0
        %v1752 = vadd.f32 0.0, %v1751
        %v1753 = vpop.f32.mrf.mxu0
        %1754 = vmatprep.mubr.bf16.mxu0 0
        %1755 = vmatmul.mubr.bf16.gmra.mxu0 %v1706
        %v1756 = vpop.f32.mrf.mxu0
        %v1757 = vadd.f32 0.0, %v1756
        %v1758 = vpop.f32.mrf.mxu0
        %v1759 = vpop.f32.mrf.mxu0
        %v1760 = vadd.f32 0.0, %v1759
        %v1761 = vpop.f32.mrf.mxu0
        %1762 = vmatprep.mubr.bf16.mxu0 0
        %1763 = vmatmul.mubr.bf16.gmra.mxu0 %v1709
        %v1764 = vpop.f32.mrf.mxu0
        %v1765 = vadd.f32 0.0, %v1764
        %v1766 = vpop.f32.mrf.mxu0
        %v1767 = vpop.f32.mrf.mxu0
        %v1768 = vadd.f32 0.0, %v1767
        %v1769 = vpop.f32.mrf.mxu0
        %1770 = vmatprep.mubr.bf16.mxu0 0
        %1771 = vmatmul.mubr.bf16.gmra.mxu0 %v1712
        %v1772 = vpop.f32.mrf.mxu0
        %v1773 = vadd.f32 0.0, %v1772
        %v1774 = vpop.f32.mrf.mxu0
        %v1775 = vpop.f32.mrf.mxu0
        %v1776 = vadd.f32 0.0, %v1775
        %v1777 = vpop.f32.mrf.mxu0
        %1778 = vdwg.mxu0
        %v1779 = vmax.f32 %v1610, 0.0
        %v1780 = vmax.f32 %v1617, 0.0
        %v1781 = vmax.f32 %v1624, 0.0
        %v1782 = vmax.f32 %v1631, 0.0
        %v1783 = vmax.f32 %v1638, 0.0
        %v1784 = vmax.f32 %v1645, 0.0
        %v1785 = vmax.f32 %v1652, 0.0
        %v1786 = vmax.f32 %v1659, 0.0
        %v1787 = vpack.c.bf16 %v1779, %v1779
        %v1788 = vpack.c.bf16 %v1780, %v1780
        %v1789 = vpack.c.bf16 %v1781, %v1781
        %v1790 = vpack.c.bf16 %v1782, %v1782
        %v1791 = vpack.c.bf16 %v1783, %v1783
        %v1792 = vpack.c.bf16 %v1784, %v1784
        %v1793 = vpack.c.bf16 %v1785, %v1785
        %v1794 = vpack.c.bf16 %v1786, %v1786
        %v1803 = vunpack.c.l.b16 %v1787
        %v1804 = vunpack.c.l.b16 %v1788
        %v1805 = vunpack.c.l.b16 %v1789
        %v1806 = vunpack.c.l.b16 %v1790
        %v1807 = vunpack.c.l.b16 %v1791
        %v1808 = vunpack.c.l.b16 %v1792
        %v1809 = vunpack.c.l.b16 %v1793
        %v1810 = vunpack.c.l.b16 %v1794
        %v1811 = vsel %vm1028, %v1804, %v1803
        %v1812 = vsel %vm1030, %v1805, %v1811
        %v1813 = vsel %vm1032, %v1806, %v1812
        %v1814 = vsel %vm1034, %v1807, %v1813
        %v1815 = vsel %vm1036, %v1808, %v1814
        %v1816 = vsel %vm1038, %v1809, %v1815
        %v1817 = vsel %vm1040, %v1810, %v1816
        %v1818 = vpack.c.b16 %v1817, %v1817
        %v1823 = vunpack.c.l.b16 %v1665
        %v1824 = vunpack.c.l.b16 %v1666
        %v1825 = vunpack.c.l.b16 %v1667
        %v1826 = vunpack.c.l.b16 %v1668
        %v1827 = vpack.c.b16 %v1824, %v1823
        %v1828 = vpack.c.b16 %v1826, %v1825
        %v1832 = vsel %vm630, %v1818, 0
        %1834 = vmatprep.subr.bf16.mxu0 0
        %1835 = vmatpush1.bf16.msra.mxu0 0
        %1836 = vmatprep.subr.bf16.mxu0 0
        %1837 = vmatpush1.bf16.msra.mxu0 0
        %1838 = vmatprep.subr.bf16.mxu0 0
        %1839 = vmatpush1.bf16.msra.mxu0 0
        %1840 = vmatprep.subr.bf16.mxu0 0
        %1841 = vmatpush1.bf16.msra.mxu0 0
        %1842 = vmatprep.subr.bf16.mxu0 0
        %1843 = vmatpush1.bf16.msra.mxu0 0
        %1844 = vmatprep.subr.bf16.mxu0 0
        %1845 = vmatpush1.bf16.msra.mxu0 0
        %1846 = vmatprep.subr.bf16.mxu0 0
        %1847 = vmatpush1.bf16.msra.mxu0 %v1828
        %1848 = vmatprep.subr.bf16.mxu0 0
        %1849 = vmatpush1.bf16.msra.mxu0 %v1827
        %1850 = vmatprep.subr.bf16.mxu0 0
        %1851 = vmatpush2.bf16.msra.mxu0 0
        %1852 = vmatprep.subr.bf16.mxu0 0
        %1853 = vmatpush2.bf16.msra.mxu0 0
        %1854 = vmatprep.subr.bf16.mxu0 0
        %1855 = vmatpush2.bf16.msra.mxu0 0
        %1856 = vmatprep.subr.bf16.mxu0 0
        %1857 = vmatpush2.bf16.msra.mxu0 0
        %1858 = vmatprep.subr.bf16.mxu0 0
        %1859 = vmatpush2.bf16.msra.mxu0 0
        %1860 = vmatprep.subr.bf16.mxu0 0
        %1861 = vmatpush2.bf16.msra.mxu0 0
        %1862 = vmatprep.subr.bf16.mxu0 0
        %1863 = vmatpush2.bf16.msra.mxu0 0
        %1864 = vmatprep.subr.bf16.mxu0 0
        %1865 = vmatpush2.bf16.msra.mxu0 0
        %1866 = vmatprep.mubr.bf16.mxu0 0
        %1867 = vmatmul.mubr.bf16.gmra.mxu0 %v1832
        %v1868 = vpop.f32.mrf.mxu0
        %v1869 = vadd.f32 0.0, %v1868
        %v1870 = vpop.f32.mrf.mxu0
        %v1871 = vpop.f32.mrf.mxu0
        %v1872 = vpop.f32.mrf.mxu0
        %1873 = vdwg.mxu0
        %v1875 = vcombine.high %v1869, %v1869
        %v1877 = vunpack.c.l.s4 1966171168
        %v1878 = vunpack.c.0.s8 %v1877
        %v1879 = vlaneseq
        %v1880 = vshrl.u32 %v1879, 7
        %v1881 = vsub.s32 %v1878, %v1880
        %v1882 = vrot.slane %v1869, %v1881
        %v1884 = vunpack.c.l.s4 1966171168
        %v1885 = vunpack.c.0.s8 %v1884
        %v1886 = vlaneseq
        %v1887 = vshrl.u32 %v1886, 7
        %v1888 = vsub.s32 %v1885, %v1887
        %v1889 = vrot.slane %v1875, %v1888
        %v1890 = vcombine.high %v1882, %v1882
        %v1891 = vcombine.high %v1889, %v1889
        %v1893 = vunpack.c.l.s4 1966171168
        %v1894 = vunpack.c.0.s8 %v1893
        %v1895 = vlaneseq
        %v1896 = vshrl.u32 %v1895, 7
        %v1897 = vsub.s32 %v1894, %v1896
        %v1898 = vrot.slane %v1882, %v1897
        %v1900 = vunpack.c.l.s4 1966171168
        %v1901 = vunpack.c.0.s8 %v1900
        %v1902 = vlaneseq
        %v1903 = vshrl.u32 %v1902, 7
        %v1904 = vsub.s32 %v1901, %v1903
        %v1905 = vrot.slane %v1889, %v1904
        %v1907 = vunpack.c.l.s4 1966171168
        %v1908 = vunpack.c.0.s8 %v1907
        %v1909 = vlaneseq
        %v1910 = vshrl.u32 %v1909, 7
        %v1911 = vsub.s32 %v1908, %v1910
        %v1912 = vrot.slane %v1890, %v1911
        %v1914 = vunpack.c.l.s4 1966171168
        %v1915 = vunpack.c.0.s8 %v1914
        %v1916 = vlaneseq
        %v1917 = vshrl.u32 %v1916, 7
        %v1918 = vsub.s32 %v1915, %v1917
        %v1919 = vrot.slane %v1891, %v1918
        %v1920 = vcombine.high %v1898, %v1898
        %v1921 = vcombine.high %v1905, %v1905
        %v1922 = vcombine.high %v1912, %v1912
        %v1923 = vcombine.high %v1919, %v1919
        %v1924 = vlaneseq
        %v1925 = vshrl.u32 %v1924, 7
        %v1926 = vsub.s32 0, %v1925
        %v1927 = vrot.slane %v1898, %v1926
        %v1928 = vlaneseq
        %v1929 = vshrl.u32 %v1928, 7
        %v1930 = vsub.s32 0, %v1929
        %v1931 = vrot.slane %v1912, %v1930
        %v1932 = vlaneseq
        %v1933 = vshrl.u32 %v1932, 7
        %v1934 = vsub.s32 0, %v1933
        %v1935 = vrot.slane %v1920, %v1934
        %v1936 = vlaneseq
        %v1937 = vshrl.u32 %v1936, 7
        %v1938 = vsub.s32 0, %v1937
        %v1939 = vrot.slane %v1922, %v1938
        %v1940 = vlaneseq
        %v1941 = vshrl.u32 %v1940, 7
        %v1942 = vsub.s32 0, %v1941
        %v1943 = vrot.slane %v1905, %v1942
        %v1944 = vlaneseq
        %v1945 = vshrl.u32 %v1944, 7
        %v1946 = vsub.s32 0, %v1945
        %v1947 = vrot.slane %v1919, %v1946
        %v1948 = vlaneseq
        %v1949 = vshrl.u32 %v1948, 7
        %v1950 = vsub.s32 0, %v1949
        %v1951 = vrot.slane %v1921, %v1950
        %v1952 = vlaneseq
        %v1953 = vshrl.u32 %v1952, 7
        %v1954 = vsub.s32 0, %v1953
        %v1955 = vrot.slane %v1923, %v1954
        %v1964 = vadd.f32 %v1749, %v1927
        %v1965 = vadd.f32 %v1752, %v1931
        %v1966 = vadd.f32 %v1757, %v1935
        %v1967 = vadd.f32 %v1760, %v1939
        %v1968 = vadd.f32 %v1765, %v1943
        %v1969 = vadd.f32 %v1768, %v1947
        %v1970 = vadd.f32 %v1773, %v1951
        %v1971 = vadd.f32 %v1776, %v1955
        %s1972 = scalar_lea.vmem %s4, 2
        %v1973 = vld [vmem:[%s1972] sm:$0x1]
        %v1975 = vlaneseq
        %v1976 = vshrl.u32 %v1975, 7
        %v1977 = vsub.s32 0, %v1976
        %v1978 = vrot.slane %v1973, %v1977
        %v1980 = vadd.f32 %v1964, %v1978
        %v1981 = vadd.f32 %v1965, %v1978
        %v1982 = vadd.f32 %v1966, %v1978
        %v1983 = vadd.f32 %v1967, %v1978
        %v1984 = vadd.f32 %v1968, %v1978
        %v1985 = vadd.f32 %v1969, %v1978
        %v1986 = vadd.f32 %v1970, %v1978
        %v1987 = vadd.f32 %v1971, %v1978
        %v1988 = vmax.f32 %v1980, 0.0
        %v1989 = vmax.f32 %v1981, 0.0
        %v1990 = vmax.f32 %v1982, 0.0
        %v1991 = vmax.f32 %v1983, 0.0
        %v1992 = vmax.f32 %v1984, 0.0
        %v1993 = vmax.f32 %v1985, 0.0
        %v1994 = vmax.f32 %v1986, 0.0
        %v1995 = vmax.f32 %v1987, 0.0
        %s1996 = scalar_lea.vmem %s5, 32
        %v1997 = vld [vmem:[%s1996] sm:$0xf]
        %v1998 = vld [vmem:[%s1996 + $0x4] sm:$0xf]
        %v1999 = vld [vmem:[%s1996 + $0x8] sm:$0xf]
        %v2000 = vld [vmem:[%s1996 + $0xc] sm:$0xf]
        %v2001 = vpack.c.bf16 %v1989, %v1988
        %v2002 = vpack.c.bf16 %v1991, %v1990
        %v2003 = vpack.c.bf16 %v1993, %v1992
        %v2004 = vpack.c.bf16 %v1995, %v1994
        %s2005 = scalar_lea.vmem %s6, 2
        %v2006 = vld [vmem:[%s2005] sm:$0x1]
        %v2008 = vlaneseq
        %v2009 = vshrl.u32 %v2008, 7
        %v2010 = vsub.s32 0, %v2009
        %v2011 = vrot.slane %v2006, %v2010
        %v2017 = vunpack.c.l.b16 %v1997
        %v2018 = vunpack.c.l.b16 %v1998
        %v2019 = vunpack.c.l.b16 %v1999
        %v2020 = vunpack.c.l.b16 %v2000
        %v2021 = vpack.c.b16 %v2018, %v2017
        %v2022 = vpack.c.b16 %v2020, %v2019
        %v2026 = vsel %vm630, %v2001, 0
        %v2029 = vsel %vm630, %v2002, 0
        %v2032 = vsel %vm630, %v2003, 0
        %v2035 = vsel %vm630, %v2004, 0
        %2037 = vmatprep.subr.bf16.mxu0 0
        %2038 = vmatpush1.bf16.msra.mxu0 0
        %2039 = vmatprep.subr.bf16.mxu0 0
        %2040 = vmatpush1.bf16.msra.mxu0 0
        %2041 = vmatprep.subr.bf16.mxu0 0
        %2042 = vmatpush1.bf16.msra.mxu0 0
        %2043 = vmatprep.subr.bf16.mxu0 0
        %2044 = vmatpush1.bf16.msra.mxu0 0
        %2045 = vmatprep.subr.bf16.mxu0 0
        %2046 = vmatpush1.bf16.msra.mxu0 0
        %2047 = vmatprep.subr.bf16.mxu0 0
        %2048 = vmatpush1.bf16.msra.mxu0 0
        %2049 = vmatprep.subr.bf16.mxu0 0
        %2050 = vmatpush1.bf16.msra.mxu0 %v2022
        %2051 = vmatprep.subr.bf16.mxu0 0
        %2052 = vmatpush1.bf16.msra.mxu0 %v2021
        %2053 = vmatprep.subr.bf16.mxu0 0
        %2054 = vmatpush2.bf16.msra.mxu0 0
        %2055 = vmatprep.subr.bf16.mxu0 0
        %2056 = vmatpush2.bf16.msra.mxu0 0
        %2057 = vmatprep.subr.bf16.mxu0 0
        %2058 = vmatpush2.bf16.msra.mxu0 0
        %2059 = vmatprep.subr.bf16.mxu0 0
        %2060 = vmatpush2.bf16.msra.mxu0 0
        %2061 = vmatprep.subr.bf16.mxu0 0
        %2062 = vmatpush2.bf16.msra.mxu0 0
        %2063 = vmatprep.subr.bf16.mxu0 0
        %2064 = vmatpush2.bf16.msra.mxu0 0
        %2065 = vmatprep.subr.bf16.mxu0 0
        %2066 = vmatpush2.bf16.msra.mxu0 0
        %2067 = vmatprep.subr.bf16.mxu0 0
        %2068 = vmatpush2.bf16.msra.mxu0 0
        %2069 = vmatprep.mubr.bf16.mxu0 0
        %2070 = vmatmul.mubr.bf16.gmra.mxu0 %v2026
        %v2071 = vpop.f32.mrf.mxu0
        %v2072 = vadd.f32 %v2011, %v2071
        %v2073 = vpop.f32.mrf.mxu0
        %v2074 = vpop.f32.mrf.mxu0
        %v2075 = vadd.f32 %v2011, %v2074
        %v2076 = vpop.f32.mrf.mxu0
        %2077 = vmatprep.mubr.bf16.mxu0 0
        %2078 = vmatmul.mubr.bf16.gmra.mxu0 %v2029
        %v2079 = vpop.f32.mrf.mxu0
        %v2080 = vadd.f32 %v2011, %v2079
        %v2081 = vpop.f32.mrf.mxu0
        %v2082 = vpop.f32.mrf.mxu0
        %v2083 = vadd.f32 %v2011, %v2082
        %v2084 = vpop.f32.mrf.mxu0
        %2085 = vmatprep.mubr.bf16.mxu0 0
        %2086 = vmatmul.mubr.bf16.gmra.mxu0 %v2032
        %v2087 = vpop.f32.mrf.mxu0
        %v2088 = vadd.f32 %v2011, %v2087
        %v2089 = vpop.f32.mrf.mxu0
        %v2090 = vpop.f32.mrf.mxu0
        %v2091 = vadd.f32 %v2011, %v2090
        %v2092 = vpop.f32.mrf.mxu0
        %2093 = vmatprep.mubr.bf16.mxu0 0
        %2094 = vmatmul.mubr.bf16.gmra.mxu0 %v2035
        %v2095 = vpop.f32.mrf.mxu0
        %v2096 = vadd.f32 %v2011, %v2095
        %v2097 = vpop.f32.mrf.mxu0
        %v2098 = vpop.f32.mrf.mxu0
        %v2099 = vadd.f32 %v2011, %v2098
        %v2100 = vpop.f32.mrf.mxu0
        %2101 = vdwg.mxu0
        %v2102 = vpack.c.bf16 %v1597, %v1596
        %v2103 = vpack.c.bf16 %v1599, %v1598
        %v2104 = vpack.c.bf16 %v1601, %v1600
        %v2105 = vpack.c.bf16 %v1603, %v1602
        %v2106 = vpack.c.bf16 %v1610, %v1610
        %v2107 = vpack.c.bf16 %v1617, %v1617
        %v2108 = vpack.c.bf16 %v1624, %v1624
        %v2109 = vpack.c.bf16 %v1631, %v1631
        %v2110 = vpack.c.bf16 %v1638, %v1638
        %v2111 = vpack.c.bf16 %v1645, %v1645
        %v2112 = vpack.c.bf16 %v1652, %v1652
        %v2113 = vpack.c.bf16 %v1659, %v1659
        %v2122 = vunpack.c.l.b16 %v2106
        %v2123 = vunpack.c.l.b16 %v2107
        %v2124 = vunpack.c.l.b16 %v2108
        %v2125 = vunpack.c.l.b16 %v2109
        %v2126 = vunpack.c.l.b16 %v2110
        %v2127 = vunpack.c.l.b16 %v2111
        %v2128 = vunpack.c.l.b16 %v2112
        %v2129 = vunpack.c.l.b16 %v2113
        %v2130 = vsel %vm1028, %v2123, %v2122
        %v2131 = vsel %vm1030, %v2124, %v2130
        %v2132 = vsel %vm1032, %v2125, %v2131
        %v2133 = vsel %vm1034, %v2126, %v2132
        %v2134 = vsel %vm1036, %v2127, %v2133
        %v2135 = vsel %vm1038, %v2128, %v2134
        %v2136 = vsel %vm1040, %v2129, %v2135
        %v2137 = vpack.c.b16 %v2136, %v2136
        %v2142 = vunpack.c.l.b16 %v1674
        %v2143 = vunpack.c.l.b16 %v1675
        %v2144 = vunpack.c.l.b16 %v1676
        %v2145 = vunpack.c.l.b16 %v1677
        %v2146 = vpack.c.b16 %v2143, %v2142
        %v2147 = vpack.c.b16 %v2145, %v2144
        %v2151 = vsel %vm630, %v2137, 0
        %2153 = vmatprep.subr.bf16.mxu0 0
        %2154 = vmatpush1.bf16.msra.mxu0 0
        %2155 = vmatprep.subr.bf16.mxu0 0
        %2156 = vmatpush1.bf16.msra.mxu0 0
        %2157 = vmatprep.subr.bf16.mxu0 0
        %2158 = vmatpush1.bf16.msra.mxu0 0
        %2159 = vmatprep.subr.bf16.mxu0 0
        %2160 = vmatpush1.bf16.msra.mxu0 0
        %2161 = vmatprep.subr.bf16.mxu0 0
        %2162 = vmatpush1.bf16.msra.mxu0 0
        %2163 = vmatprep.subr.bf16.mxu0 0
        %2164 = vmatpush1.bf16.msra.mxu0 0
        %2165 = vmatprep.subr.bf16.mxu0 0
        %2166 = vmatpush1.bf16.msra.mxu0 %v2147
        %2167 = vmatprep.subr.bf16.mxu0 0
        %2168 = vmatpush1.bf16.msra.mxu0 %v2146
        %2169 = vmatprep.subr.bf16.mxu0 0
        %2170 = vmatpush2.bf16.msra.mxu0 0
        %2171 = vmatprep.subr.bf16.mxu0 0
        %2172 = vmatpush2.bf16.msra.mxu0 0
        %2173 = vmatprep.subr.bf16.mxu0 0
        %2174 = vmatpush2.bf16.msra.mxu0 0
        %2175 = vmatprep.subr.bf16.mxu0 0
        %2176 = vmatpush2.bf16.msra.mxu0 0
        %2177 = vmatprep.subr.bf16.mxu0 0
        %2178 = vmatpush2.bf16.msra.mxu0 0
        %2179 = vmatprep.subr.bf16.mxu0 0
        %2180 = vmatpush2.bf16.msra.mxu0 0
        %2181 = vmatprep.subr.bf16.mxu0 0
        %2182 = vmatpush2.bf16.msra.mxu0 0
        %2183 = vmatprep.subr.bf16.mxu0 0
        %2184 = vmatpush2.bf16.msra.mxu0 0
        %2185 = vmatprep.mubr.bf16.mxu0 0
        %2186 = vmatmul.mubr.bf16.gmra.mxu0 %v2151
        %v2187 = vpop.f32.mrf.mxu0
        %v2188 = vadd.f32 0.0, %v2187
        %v2189 = vpop.f32.mrf.mxu0
        %v2190 = vpop.f32.mrf.mxu0
        %v2191 = vpop.f32.mrf.mxu0
        %2192 = vdwg.mxu0
        %v2197 = vunpack.c.l.b16 %v1670
        %v2198 = vunpack.c.l.b16 %v1671
        %v2199 = vunpack.c.l.b16 %v1672
        %v2200 = vunpack.c.l.b16 %v1673
        %v2201 = vpack.c.b16 %v2198, %v2197
        %v2202 = vpack.c.b16 %v2200, %v2199
        %v2206 = vsel %vm630, %v2102, 0
        %v2209 = vsel %vm630, %v2103, 0
        %v2212 = vsel %vm630, %v2104, 0
        %v2215 = vsel %vm630, %v2105, 0
        %2217 = vmatprep.subr.bf16.mxu0 0
        %2218 = vmatpush1.bf16.msra.mxu0 0
        %2219 = vmatprep.subr.bf16.mxu0 0
        %2220 = vmatpush1.bf16.msra.mxu0 0
        %2221 = vmatprep.subr.bf16.mxu0 0
        %2222 = vmatpush1.bf16.msra.mxu0 0
        %2223 = vmatprep.subr.bf16.mxu0 0
        %2224 = vmatpush1.bf16.msra.mxu0 0
        %2225 = vmatprep.subr.bf16.mxu0 0
        %2226 = vmatpush1.bf16.msra.mxu0 0
        %2227 = vmatprep.subr.bf16.mxu0 0
        %2228 = vmatpush1.bf16.msra.mxu0 0
        %2229 = vmatprep.subr.bf16.mxu0 0
        %2230 = vmatpush1.bf16.msra.mxu0 %v2202
        %2231 = vmatprep.subr.bf16.mxu0 0
        %2232 = vmatpush1.bf16.msra.mxu0 %v2201
        %2233 = vmatprep.subr.bf16.mxu0 0
        %2234 = vmatpush2.bf16.msra.mxu0 0
        %2235 = vmatprep.subr.bf16.mxu0 0
        %2236 = vmatpush2.bf16.msra.mxu0 0
        %2237 = vmatprep.subr.bf16.mxu0 0
        %2238 = vmatpush2.bf16.msra.mxu0 0
        %2239 = vmatprep.subr.bf16.mxu0 0
        %2240 = vmatpush2.bf16.msra.mxu0 0
        %2241 = vmatprep.subr.bf16.mxu0 0
        %2242 = vmatpush2.bf16.msra.mxu0 0
        %2243 = vmatprep.subr.bf16.mxu0 0
        %2244 = vmatpush2.bf16.msra.mxu0 0
        %2245 = vmatprep.subr.bf16.mxu0 0
        %2246 = vmatpush2.bf16.msra.mxu0 0
        %2247 = vmatprep.subr.bf16.mxu0 0
        %2248 = vmatpush2.bf16.msra.mxu0 0
        %2249 = vmatprep.mubr.bf16.mxu0 0
        %2250 = vmatmul.mubr.bf16.gmra.mxu0 %v2206
        %v2251 = vpop.f32.mrf.mxu0
        %v2252 = vadd.f32 %v2072, %v2251
        %v2253 = vpop.f32.mrf.mxu0
        %v2254 = vpop.f32.mrf.mxu0
        %v2255 = vadd.f32 %v2075, %v2254
        %v2256 = vpop.f32.mrf.mxu0
        %2257 = vmatprep.mubr.bf16.mxu0 0
        %2258 = vmatmul.mubr.bf16.gmra.mxu0 %v2209
        %v2259 = vpop.f32.mrf.mxu0
        %v2260 = vadd.f32 %v2080, %v2259
        %v2261 = vpop.f32.mrf.mxu0
        %v2262 = vpop.f32.mrf.mxu0
        %v2263 = vadd.f32 %v2083, %v2262
        %v2264 = vpop.f32.mrf.mxu0
        %2265 = vmatprep.mubr.bf16.mxu0 0
        %2266 = vmatmul.mubr.bf16.gmra.mxu0 %v2212
        %v2267 = vpop.f32.mrf.mxu0
        %v2268 = vadd.f32 %v2088, %v2267
        %v2269 = vpop.f32.mrf.mxu0
        %v2270 = vpop.f32.mrf.mxu0
        %v2271 = vadd.f32 %v2091, %v2270
        %v2272 = vpop.f32.mrf.mxu0
        %2273 = vmatprep.mubr.bf16.mxu0 0
        %2274 = vmatmul.mubr.bf16.gmra.mxu0 %v2215
        %v2275 = vpop.f32.mrf.mxu0
        %v2276 = vadd.f32 %v2096, %v2275
        %v2277 = vpop.f32.mrf.mxu0
        %v2278 = vpop.f32.mrf.mxu0
        %v2279 = vadd.f32 %v2099, %v2278
        %v2280 = vpop.f32.mrf.mxu0
        %2281 = vdwg.mxu0
        %v2283 = vcombine.high %v2188, %v2188
        %v2285 = vunpack.c.l.s4 1966171168
        %v2286 = vunpack.c.0.s8 %v2285
        %v2287 = vlaneseq
        %v2288 = vshrl.u32 %v2287, 7
        %v2289 = vsub.s32 %v2286, %v2288
        %v2290 = vrot.slane %v2188, %v2289
        %v2292 = vunpack.c.l.s4 1966171168
        %v2293 = vunpack.c.0.s8 %v2292
        %v2294 = vlaneseq
        %v2295 = vshrl.u32 %v2294, 7
        %v2296 = vsub.s32 %v2293, %v2295
        %v2297 = vrot.slane %v2283, %v2296
        %v2298 = vcombine.high %v2290, %v2290
        %v2299 = vcombine.high %v2297, %v2297
        %v2301 = vunpack.c.l.s4 1966171168
        %v2302 = vunpack.c.0.s8 %v2301
        %v2303 = vlaneseq
        %v2304 = vshrl.u32 %v2303, 7
        %v2305 = vsub.s32 %v2302, %v2304
        %v2306 = vrot.slane %v2290, %v2305
        %v2308 = vunpack.c.l.s4 1966171168
        %v2309 = vunpack.c.0.s8 %v2308
        %v2310 = vlaneseq
        %v2311 = vshrl.u32 %v2310, 7
        %v2312 = vsub.s32 %v2309, %v2311
        %v2313 = vrot.slane %v2297, %v2312
        %v2315 = vunpack.c.l.s4 1966171168
        %v2316 = vunpack.c.0.s8 %v2315
        %v2317 = vlaneseq
        %v2318 = vshrl.u32 %v2317, 7
        %v2319 = vsub.s32 %v2316, %v2318
        %v2320 = vrot.slane %v2298, %v2319
        %v2322 = vunpack.c.l.s4 1966171168
        %v2323 = vunpack.c.0.s8 %v2322
        %v2324 = vlaneseq
        %v2325 = vshrl.u32 %v2324, 7
        %v2326 = vsub.s32 %v2323, %v2325
        %v2327 = vrot.slane %v2299, %v2326
        %v2328 = vcombine.high %v2306, %v2306
        %v2329 = vcombine.high %v2313, %v2313
        %v2330 = vcombine.high %v2320, %v2320
        %v2331 = vcombine.high %v2327, %v2327
        %v2332 = vlaneseq
        %v2333 = vshrl.u32 %v2332, 7
        %v2334 = vsub.s32 0, %v2333
        %v2335 = vrot.slane %v2306, %v2334
        %v2336 = vlaneseq
        %v2337 = vshrl.u32 %v2336, 7
        %v2338 = vsub.s32 0, %v2337
        %v2339 = vrot.slane %v2320, %v2338
        %v2340 = vlaneseq
        %v2341 = vshrl.u32 %v2340, 7
        %v2342 = vsub.s32 0, %v2341
        %v2343 = vrot.slane %v2328, %v2342
        %v2344 = vlaneseq
        %v2345 = vshrl.u32 %v2344, 7
        %v2346 = vsub.s32 0, %v2345
        %v2347 = vrot.slane %v2330, %v2346
        %v2348 = vlaneseq
        %v2349 = vshrl.u32 %v2348, 7
        %v2350 = vsub.s32 0, %v2349
        %v2351 = vrot.slane %v2313, %v2350
        %v2352 = vlaneseq
        %v2353 = vshrl.u32 %v2352, 7
        %v2354 = vsub.s32 0, %v2353
        %v2355 = vrot.slane %v2327, %v2354
        %v2356 = vlaneseq
        %v2357 = vshrl.u32 %v2356, 7
        %v2358 = vsub.s32 0, %v2357
        %v2359 = vrot.slane %v2329, %v2358
        %v2360 = vlaneseq
        %v2361 = vshrl.u32 %v2360, 7
        %v2362 = vsub.s32 0, %v2361
        %v2363 = vrot.slane %v2331, %v2362
        %v2372 = vadd.f32 %v2252, %v2335
        %v2373 = vadd.f32 %v2255, %v2339
        %v2374 = vadd.f32 %v2260, %v2343
        %v2375 = vadd.f32 %v2263, %v2347
        %v2376 = vadd.f32 %v2268, %v2351
        %v2377 = vadd.f32 %v2271, %v2355
        %v2378 = vadd.f32 %v2276, %v2359
        %v2379 = vadd.f32 %v2279, %v2363
        %v2380 = vsel %vm630, %v2372, -inf
        %v2381 = vrot.slane %v2380, 4
        %v2382 = vmax.f32 %v2380, %v2381
        %v2383 = vrot.slane %v2382, 2
        %v2384 = vmax.f32 %v2382, %v2383
        %v2385 = vrot.slane %v2384, 1
        %v2386 = vmax.f32 %v2384, %v2385
        %v2387 = vsel %vm630, %v2373, -inf
        %v2388 = vrot.slane %v2387, 4
        %v2389 = vmax.f32 %v2387, %v2388
        %v2390 = vrot.slane %v2389, 2
        %v2391 = vmax.f32 %v2389, %v2390
        %v2392 = vrot.slane %v2391, 1
        %v2393 = vmax.f32 %v2391, %v2392
        %v2394 = vsel %vm630, %v2374, -inf
        %v2395 = vrot.slane %v2394, 4
        %v2396 = vmax.f32 %v2394, %v2395
        %v2397 = vrot.slane %v2396, 2
        %v2398 = vmax.f32 %v2396, %v2397
        %v2399 = vrot.slane %v2398, 1
        %v2400 = vmax.f32 %v2398, %v2399
        %v2401 = vsel %vm630, %v2375, -inf
        %v2402 = vrot.slane %v2401, 4
        %v2403 = vmax.f32 %v2401, %v2402
        %v2404 = vrot.slane %v2403, 2
        %v2405 = vmax.f32 %v2403, %v2404
        %v2406 = vrot.slane %v2405, 1
        %v2407 = vmax.f32 %v2405, %v2406
        %v2408 = vsel %vm630, %v2376, -inf
        %v2409 = vrot.slane %v2408, 4
        %v2410 = vmax.f32 %v2408, %v2409
        %v2411 = vrot.slane %v2410, 2
        %v2412 = vmax.f32 %v2410, %v2411
        %v2413 = vrot.slane %v2412, 1
        %v2414 = vmax.f32 %v2412, %v2413
        %v2415 = vsel %vm630, %v2377, -inf
        %v2416 = vrot.slane %v2415, 4
        %v2417 = vmax.f32 %v2415, %v2416
        %v2418 = vrot.slane %v2417, 2
        %v2419 = vmax.f32 %v2417, %v2418
        %v2420 = vrot.slane %v2419, 1
        %v2421 = vmax.f32 %v2419, %v2420
        %v2422 = vsel %vm630, %v2378, -inf
        %v2423 = vrot.slane %v2422, 4
        %v2424 = vmax.f32 %v2422, %v2423
        %v2425 = vrot.slane %v2424, 2
        %v2426 = vmax.f32 %v2424, %v2425
        %v2427 = vrot.slane %v2426, 1
        %v2428 = vmax.f32 %v2426, %v2427
        %v2429 = vsel %vm630, %v2379, -inf
        %v2430 = vrot.slane %v2429, 4
        %v2431 = vmax.f32 %v2429, %v2430
        %v2432 = vrot.slane %v2431, 2
        %v2433 = vmax.f32 %v2431, %v2432
        %v2434 = vrot.slane %v2433, 1
        %v2435 = vmax.f32 %v2433, %v2434
        %s2436 = scalar_lea.vmem %s3, 96
        %v2437 = vld [vmem:[%s2436] sm:$0xf]
        %v2438 = vld [vmem:[%s2436 + $0x4] sm:$0xf]
        %v2439 = vld [vmem:[%s2436 + $0x8] sm:$0xf]
        %v2440 = vld [vmem:[%s2436 + $0xc] sm:$0xf]
        %v2441 = vld [vmem:[%s2436 + $0x10] sm:$0xf]
        %v2442 = vld [vmem:[%s2436 + $0x14] sm:$0xf]
        %v2443 = vld [vmem:[%s2436 + $0x18] sm:$0xf]
        %v2444 = vld [vmem:[%s2436 + $0x1c] sm:$0xf]
        %s2445 = scalar_lea.vmem %s7, 96
        %v2446 = vld [vmem:[%s2445] sm:$0xf]
        %v2447 = vld [vmem:[%s2445 + $0x4] sm:$0xf]
        %v2448 = vld [vmem:[%s2445 + $0x8] sm:$0xf]
        %v2449 = vld [vmem:[%s2445 + $0xc] sm:$0xf]
        %v2450 = vld [vmem:[%s2445 + $0x10] sm:$0xf]
        %v2451 = vld [vmem:[%s2445 + $0x14] sm:$0xf]
        %v2452 = vld [vmem:[%s2445 + $0x18] sm:$0xf]
        %v2453 = vld [vmem:[%s2445 + $0x1c] sm:$0xf]
        %v2454 = vmax.f32 %v2372, 0.0
        %v2455 = vmax.f32 %v2373, 0.0
        %v2456 = vmax.f32 %v2374, 0.0
        %v2457 = vmax.f32 %v2375, 0.0
        %v2458 = vmax.f32 %v2376, 0.0
        %v2459 = vmax.f32 %v2377, 0.0
        %v2460 = vmax.f32 %v2378, 0.0
        %v2461 = vmax.f32 %v2379, 0.0
        %v2462 = vpack.c.bf16 %v2455, %v2454
        %v2463 = vpack.c.bf16 %v2457, %v2456
        %v2464 = vpack.c.bf16 %v2459, %v2458
        %v2465 = vpack.c.bf16 %v2461, %v2460
        %v2470 = vunpack.c.l.b16 %v2437
        %v2471 = vunpack.c.l.b16 %v2438
        %v2472 = vunpack.c.l.b16 %v2439
        %v2473 = vunpack.c.l.b16 %v2440
        %v2474 = vpack.c.b16 %v2471, %v2470
        %v2475 = vpack.c.b16 %v2473, %v2472
        %v2479 = vsel %vm630, %v2462, 0
        %v2482 = vsel %vm630, %v2463, 0
        %v2485 = vsel %vm630, %v2464, 0
        %v2488 = vsel %vm630, %v2465, 0
        %2490 = vmatprep.subr.bf16.mxu0 0
        %2491 = vmatpush1.bf16.msra.mxu0 0
        %2492 = vmatprep.subr.bf16.mxu0 0
        %2493 = vmatpush1.bf16.msra.mxu0 0
        %2494 = vmatprep.subr.bf16.mxu0 0
        %2495 = vmatpush1.bf16.msra.mxu0 0
        %2496 = vmatprep.subr.bf16.mxu0 0
        %2497 = vmatpush1.bf16.msra.mxu0 0
        %2498 = vmatprep.subr.bf16.mxu0 0
        %2499 = vmatpush1.bf16.msra.mxu0 0
        %2500 = vmatprep.subr.bf16.mxu0 0
        %2501 = vmatpush1.bf16.msra.mxu0 0
        %2502 = vmatprep.subr.bf16.mxu0 0
        %2503 = vmatpush1.bf16.msra.mxu0 %v2475
        %2504 = vmatprep.subr.bf16.mxu0 0
        %2505 = vmatpush1.bf16.msra.mxu0 %v2474
        %2506 = vmatprep.subr.bf16.mxu0 0
        %2507 = vmatpush2.bf16.msra.mxu0 0
        %2508 = vmatprep.subr.bf16.mxu0 0
        %2509 = vmatpush2.bf16.msra.mxu0 0
        %2510 = vmatprep.subr.bf16.mxu0 0
        %2511 = vmatpush2.bf16.msra.mxu0 0
        %2512 = vmatprep.subr.bf16.mxu0 0
        %2513 = vmatpush2.bf16.msra.mxu0 0
        %2514 = vmatprep.subr.bf16.mxu0 0
        %2515 = vmatpush2.bf16.msra.mxu0 0
        %2516 = vmatprep.subr.bf16.mxu0 0
        %2517 = vmatpush2.bf16.msra.mxu0 0
        %2518 = vmatprep.subr.bf16.mxu0 0
        %2519 = vmatpush2.bf16.msra.mxu0 0
        %2520 = vmatprep.subr.bf16.mxu0 0
        %2521 = vmatpush2.bf16.msra.mxu0 0
        %2522 = vmatprep.mubr.bf16.mxu0 0
        %2523 = vmatmul.mubr.bf16.gmra.mxu0 %v2479
        %v2524 = vpop.f32.mrf.mxu0
        %v2525 = vadd.f32 0.0, %v2524
        %v2526 = vpop.f32.mrf.mxu0
        %v2527 = vpop.f32.mrf.mxu0
        %v2528 = vadd.f32 0.0, %v2527
        %v2529 = vpop.f32.mrf.mxu0
        %2530 = vmatprep.mubr.bf16.mxu0 0
        %2531 = vmatmul.mubr.bf16.gmra.mxu0 %v2482
        %v2532 = vpop.f32.mrf.mxu0
        %v2533 = vadd.f32 0.0, %v2532
        %v2534 = vpop.f32.mrf.mxu0
        %v2535 = vpop.f32.mrf.mxu0
        %v2536 = vadd.f32 0.0, %v2535
        %v2537 = vpop.f32.mrf.mxu0
        %2538 = vmatprep.mubr.bf16.mxu0 0
        %2539 = vmatmul.mubr.bf16.gmra.mxu0 %v2485
        %v2540 = vpop.f32.mrf.mxu0
        %v2541 = vadd.f32 0.0, %v2540
        %v2542 = vpop.f32.mrf.mxu0
        %v2543 = vpop.f32.mrf.mxu0
        %v2544 = vadd.f32 0.0, %v2543
        %v2545 = vpop.f32.mrf.mxu0
        %2546 = vmatprep.mubr.bf16.mxu0 0
        %2547 = vmatmul.mubr.bf16.gmra.mxu0 %v2488
        %v2548 = vpop.f32.mrf.mxu0
        %v2549 = vadd.f32 0.0, %v2548
        %v2550 = vpop.f32.mrf.mxu0
        %v2551 = vpop.f32.mrf.mxu0
        %v2552 = vadd.f32 0.0, %v2551
        %v2553 = vpop.f32.mrf.mxu0
        %2554 = vdwg.mxu0
        %v2555 = vmax.f32 %v2386, 0.0
        %v2556 = vmax.f32 %v2393, 0.0
        %v2557 = vmax.f32 %v2400, 0.0
        %v2558 = vmax.f32 %v2407, 0.0
        %v2559 = vmax.f32 %v2414, 0.0
        %v2560 = vmax.f32 %v2421, 0.0
        %v2561 = vmax.f32 %v2428, 0.0
        %v2562 = vmax.f32 %v2435, 0.0
        %v2563 = vpack.c.bf16 %v2555, %v2555
        %v2564 = vpack.c.bf16 %v2556, %v2556
        %v2565 = vpack.c.bf16 %v2557, %v2557
        %v2566 = vpack.c.bf16 %v2558, %v2558
        %v2567 = vpack.c.bf16 %v2559, %v2559
        %v2568 = vpack.c.bf16 %v2560, %v2560
        %v2569 = vpack.c.bf16 %v2561, %v2561
        %v2570 = vpack.c.bf16 %v2562, %v2562
        %v2579 = vunpack.c.l.b16 %v2563
        %v2580 = vunpack.c.l.b16 %v2564
        %v2581 = vunpack.c.l.b16 %v2565
        %v2582 = vunpack.c.l.b16 %v2566
        %v2583 = vunpack.c.l.b16 %v2567
        %v2584 = vunpack.c.l.b16 %v2568
        %v2585 = vunpack.c.l.b16 %v2569
        %v2586 = vunpack.c.l.b16 %v2570
        %v2587 = vsel %vm1028, %v2580, %v2579
        %v2588 = vsel %vm1030, %v2581, %v2587
        %v2589 = vsel %vm1032, %v2582, %v2588
        %v2590 = vsel %vm1034, %v2583, %v2589
        %v2591 = vsel %vm1036, %v2584, %v2590
        %v2592 = vsel %vm1038, %v2585, %v2591
        %v2593 = vsel %vm1040, %v2586, %v2592
        %v2594 = vpack.c.b16 %v2593, %v2593
        %v2599 = vunpack.c.l.b16 %v2441
        %v2600 = vunpack.c.l.b16 %v2442
        %v2601 = vunpack.c.l.b16 %v2443
        %v2602 = vunpack.c.l.b16 %v2444
        %v2603 = vpack.c.b16 %v2600, %v2599
        %v2604 = vpack.c.b16 %v2602, %v2601
        %v2608 = vsel %vm630, %v2594, 0
        %2610 = vmatprep.subr.bf16.mxu0 0
        %2611 = vmatpush1.bf16.msra.mxu0 0
        %2612 = vmatprep.subr.bf16.mxu0 0
        %2613 = vmatpush1.bf16.msra.mxu0 0
        %2614 = vmatprep.subr.bf16.mxu0 0
        %2615 = vmatpush1.bf16.msra.mxu0 0
        %2616 = vmatprep.subr.bf16.mxu0 0
        %2617 = vmatpush1.bf16.msra.mxu0 0
        %2618 = vmatprep.subr.bf16.mxu0 0
        %2619 = vmatpush1.bf16.msra.mxu0 0
        %2620 = vmatprep.subr.bf16.mxu0 0
        %2621 = vmatpush1.bf16.msra.mxu0 0
        %2622 = vmatprep.subr.bf16.mxu0 0
        %2623 = vmatpush1.bf16.msra.mxu0 %v2604
        %2624 = vmatprep.subr.bf16.mxu0 0
        %2625 = vmatpush1.bf16.msra.mxu0 %v2603
        %2626 = vmatprep.subr.bf16.mxu0 0
        %2627 = vmatpush2.bf16.msra.mxu0 0
        %2628 = vmatprep.subr.bf16.mxu0 0
        %2629 = vmatpush2.bf16.msra.mxu0 0
        %2630 = vmatprep.subr.bf16.mxu0 0
        %2631 = vmatpush2.bf16.msra.mxu0 0
        %2632 = vmatprep.subr.bf16.mxu0 0
        %2633 = vmatpush2.bf16.msra.mxu0 0
        %2634 = vmatprep.subr.bf16.mxu0 0
        %2635 = vmatpush2.bf16.msra.mxu0 0
        %2636 = vmatprep.subr.bf16.mxu0 0
        %2637 = vmatpush2.bf16.msra.mxu0 0
        %2638 = vmatprep.subr.bf16.mxu0 0
        %2639 = vmatpush2.bf16.msra.mxu0 0
        %2640 = vmatprep.subr.bf16.mxu0 0
        %2641 = vmatpush2.bf16.msra.mxu0 0
        %2642 = vmatprep.mubr.bf16.mxu0 0
        %2643 = vmatmul.mubr.bf16.gmra.mxu0 %v2608
        %v2644 = vpop.f32.mrf.mxu0
        %v2645 = vadd.f32 0.0, %v2644
        %v2646 = vpop.f32.mrf.mxu0
        %v2647 = vpop.f32.mrf.mxu0
        %v2648 = vpop.f32.mrf.mxu0
        %2649 = vdwg.mxu0
        %v2651 = vcombine.high %v2645, %v2645
        %v2653 = vunpack.c.l.s4 1966171168
        %v2654 = vunpack.c.0.s8 %v2653
        %v2655 = vlaneseq
        %v2656 = vshrl.u32 %v2655, 7
        %v2657 = vsub.s32 %v2654, %v2656
        %v2658 = vrot.slane %v2645, %v2657
        %v2660 = vunpack.c.l.s4 1966171168
        %v2661 = vunpack.c.0.s8 %v2660
        %v2662 = vlaneseq
        %v2663 = vshrl.u32 %v2662, 7
        %v2664 = vsub.s32 %v2661, %v2663
        %v2665 = vrot.slane %v2651, %v2664
        %v2666 = vcombine.high %v2658, %v2658
        %v2667 = vcombine.high %v2665, %v2665
        %v2669 = vunpack.c.l.s4 1966171168
        %v2670 = vunpack.c.0.s8 %v2669
        %v2671 = vlaneseq
        %v2672 = vshrl.u32 %v2671, 7
        %v2673 = vsub.s32 %v2670, %v2672
        %v2674 = vrot.slane %v2658, %v2673
        %v2676 = vunpack.c.l.s4 1966171168
        %v2677 = vunpack.c.0.s8 %v2676
        %v2678 = vlaneseq
        %v2679 = vshrl.u32 %v2678, 7
        %v2680 = vsub.s32 %v2677, %v2679
        %v2681 = vrot.slane %v2665, %v2680
        %v2683 = vunpack.c.l.s4 1966171168
        %v2684 = vunpack.c.0.s8 %v2683
        %v2685 = vlaneseq
        %v2686 = vshrl.u32 %v2685, 7
        %v2687 = vsub.s32 %v2684, %v2686
        %v2688 = vrot.slane %v2666, %v2687
        %v2690 = vunpack.c.l.s4 1966171168
        %v2691 = vunpack.c.0.s8 %v2690
        %v2692 = vlaneseq
        %v2693 = vshrl.u32 %v2692, 7
        %v2694 = vsub.s32 %v2691, %v2693
        %v2695 = vrot.slane %v2667, %v2694
        %v2696 = vcombine.high %v2674, %v2674
        %v2697 = vcombine.high %v2681, %v2681
        %v2698 = vcombine.high %v2688, %v2688
        %v2699 = vcombine.high %v2695, %v2695
        %v2700 = vlaneseq
        %v2701 = vshrl.u32 %v2700, 7
        %v2702 = vsub.s32 0, %v2701
        %v2703 = vrot.slane %v2674, %v2702
        %v2704 = vlaneseq
        %v2705 = vshrl.u32 %v2704, 7
        %v2706 = vsub.s32 0, %v2705
        %v2707 = vrot.slane %v2688, %v2706
        %v2708 = vlaneseq
        %v2709 = vshrl.u32 %v2708, 7
        %v2710 = vsub.s32 0, %v2709
        %v2711 = vrot.slane %v2696, %v2710
        %v2712 = vlaneseq
        %v2713 = vshrl.u32 %v2712, 7
        %v2714 = vsub.s32 0, %v2713
        %v2715 = vrot.slane %v2698, %v2714
        %v2716 = vlaneseq
        %v2717 = vshrl.u32 %v2716, 7
        %v2718 = vsub.s32 0, %v2717
        %v2719 = vrot.slane %v2681, %v2718
        %v2720 = vlaneseq
        %v2721 = vshrl.u32 %v2720, 7
        %v2722 = vsub.s32 0, %v2721
        %v2723 = vrot.slane %v2695, %v2722
        %v2724 = vlaneseq
        %v2725 = vshrl.u32 %v2724, 7
        %v2726 = vsub.s32 0, %v2725
        %v2727 = vrot.slane %v2697, %v2726
        %v2728 = vlaneseq
        %v2729 = vshrl.u32 %v2728, 7
        %v2730 = vsub.s32 0, %v2729
        %v2731 = vrot.slane %v2699, %v2730
        %v2740 = vadd.f32 %v2525, %v2703
        %v2741 = vadd.f32 %v2528, %v2707
        %v2742 = vadd.f32 %v2533, %v2711
        %v2743 = vadd.f32 %v2536, %v2715
        %v2744 = vadd.f32 %v2541, %v2719
        %v2745 = vadd.f32 %v2544, %v2723
        %v2746 = vadd.f32 %v2549, %v2727
        %v2747 = vadd.f32 %v2552, %v2731
        %s2748 = scalar_lea.vmem %s4, 3
        %v2749 = vld [vmem:[%s2748] sm:$0x1]
        %v2751 = vlaneseq
        %v2752 = vshrl.u32 %v2751, 7
        %v2753 = vsub.s32 0, %v2752
        %v2754 = vrot.slane %v2749, %v2753
        %v2756 = vadd.f32 %v2740, %v2754
        %v2757 = vadd.f32 %v2741, %v2754
        %v2758 = vadd.f32 %v2742, %v2754
        %v2759 = vadd.f32 %v2743, %v2754
        %v2760 = vadd.f32 %v2744, %v2754
        %v2761 = vadd.f32 %v2745, %v2754
        %v2762 = vadd.f32 %v2746, %v2754
        %v2763 = vadd.f32 %v2747, %v2754
        %v2764 = vmax.f32 %v2756, 0.0
        %v2765 = vmax.f32 %v2757, 0.0
        %v2766 = vmax.f32 %v2758, 0.0
        %v2767 = vmax.f32 %v2759, 0.0
        %v2768 = vmax.f32 %v2760, 0.0
        %v2769 = vmax.f32 %v2761, 0.0
        %v2770 = vmax.f32 %v2762, 0.0
        %v2771 = vmax.f32 %v2763, 0.0
        %s2772 = scalar_lea.vmem %s5, 48
        %v2773 = vld [vmem:[%s2772] sm:$0xf]
        %v2774 = vld [vmem:[%s2772 + $0x4] sm:$0xf]
        %v2775 = vld [vmem:[%s2772 + $0x8] sm:$0xf]
        %v2776 = vld [vmem:[%s2772 + $0xc] sm:$0xf]
        %v2777 = vpack.c.bf16 %v2765, %v2764
        %v2778 = vpack.c.bf16 %v2767, %v2766
        %v2779 = vpack.c.bf16 %v2769, %v2768
        %v2780 = vpack.c.bf16 %v2771, %v2770
        %s2781 = scalar_lea.vmem %s6, 3
        %v2782 = vld [vmem:[%s2781] sm:$0x1]
        %v2784 = vlaneseq
        %v2785 = vshrl.u32 %v2784, 7
        %v2786 = vsub.s32 0, %v2785
        %v2787 = vrot.slane %v2782, %v2786
        %v2793 = vunpack.c.l.b16 %v2773
        %v2794 = vunpack.c.l.b16 %v2774
        %v2795 = vunpack.c.l.b16 %v2775
        %v2796 = vunpack.c.l.b16 %v2776
        %v2797 = vpack.c.b16 %v2794, %v2793
        %v2798 = vpack.c.b16 %v2796, %v2795
        %v2802 = vsel %vm630, %v2777, 0
        %v2805 = vsel %vm630, %v2778, 0
        %v2808 = vsel %vm630, %v2779, 0
        %v2811 = vsel %vm630, %v2780, 0
        %2813 = vmatprep.subr.bf16.mxu0 0
        %2814 = vmatpush1.bf16.msra.mxu0 0
        %2815 = vmatprep.subr.bf16.mxu0 0
        %2816 = vmatpush1.bf16.msra.mxu0 0
        %2817 = vmatprep.subr.bf16.mxu0 0
        %2818 = vmatpush1.bf16.msra.mxu0 0
        %2819 = vmatprep.subr.bf16.mxu0 0
        %2820 = vmatpush1.bf16.msra.mxu0 0
        %2821 = vmatprep.subr.bf16.mxu0 0
        %2822 = vmatpush1.bf16.msra.mxu0 0
        %2823 = vmatprep.subr.bf16.mxu0 0
        %2824 = vmatpush1.bf16.msra.mxu0 0
        %2825 = vmatprep.subr.bf16.mxu0 0
        %2826 = vmatpush1.bf16.msra.mxu0 %v2798
        %2827 = vmatprep.subr.bf16.mxu0 0
        %2828 = vmatpush1.bf16.msra.mxu0 %v2797
        %2829 = vmatprep.subr.bf16.mxu0 0
        %2830 = vmatpush2.bf16.msra.mxu0 0
        %2831 = vmatprep.subr.bf16.mxu0 0
        %2832 = vmatpush2.bf16.msra.mxu0 0
        %2833 = vmatprep.subr.bf16.mxu0 0
        %2834 = vmatpush2.bf16.msra.mxu0 0
        %2835 = vmatprep.subr.bf16.mxu0 0
        %2836 = vmatpush2.bf16.msra.mxu0 0
        %2837 = vmatprep.subr.bf16.mxu0 0
        %2838 = vmatpush2.bf16.msra.mxu0 0
        %2839 = vmatprep.subr.bf16.mxu0 0
        %2840 = vmatpush2.bf16.msra.mxu0 0
        %2841 = vmatprep.subr.bf16.mxu0 0
        %2842 = vmatpush2.bf16.msra.mxu0 0
        %2843 = vmatprep.subr.bf16.mxu0 0
        %2844 = vmatpush2.bf16.msra.mxu0 0
        %2845 = vmatprep.mubr.bf16.mxu0 0
        %2846 = vmatmul.mubr.bf16.gmra.mxu0 %v2802
        %v2847 = vpop.f32.mrf.mxu0
        %v2848 = vadd.f32 %v2787, %v2847
        %v2849 = vpop.f32.mrf.mxu0
        %v2850 = vpop.f32.mrf.mxu0
        %v2851 = vadd.f32 %v2787, %v2850
        %v2852 = vpop.f32.mrf.mxu0
        %2853 = vmatprep.mubr.bf16.mxu0 0
        %2854 = vmatmul.mubr.bf16.gmra.mxu0 %v2805
        %v2855 = vpop.f32.mrf.mxu0
        %v2856 = vadd.f32 %v2787, %v2855
        %v2857 = vpop.f32.mrf.mxu0
        %v2858 = vpop.f32.mrf.mxu0
        %v2859 = vadd.f32 %v2787, %v2858
        %v2860 = vpop.f32.mrf.mxu0
        %2861 = vmatprep.mubr.bf16.mxu0 0
        %2862 = vmatmul.mubr.bf16.gmra.mxu0 %v2808
        %v2863 = vpop.f32.mrf.mxu0
        %v2864 = vadd.f32 %v2787, %v2863
        %v2865 = vpop.f32.mrf.mxu0
        %v2866 = vpop.f32.mrf.mxu0
        %v2867 = vadd.f32 %v2787, %v2866
        %v2868 = vpop.f32.mrf.mxu0
        %2869 = vmatprep.mubr.bf16.mxu0 0
        %2870 = vmatmul.mubr.bf16.gmra.mxu0 %v2811
        %v2871 = vpop.f32.mrf.mxu0
        %v2872 = vadd.f32 %v2787, %v2871
        %v2873 = vpop.f32.mrf.mxu0
        %v2874 = vpop.f32.mrf.mxu0
        %v2875 = vadd.f32 %v2787, %v2874
        %v2876 = vpop.f32.mrf.mxu0
        %2877 = vdwg.mxu0
        %v2878 = vpack.c.bf16 %v2373, %v2372
        %v2879 = vpack.c.bf16 %v2375, %v2374
        %v2880 = vpack.c.bf16 %v2377, %v2376
        %v2881 = vpack.c.bf16 %v2379, %v2378
        %v2882 = vpack.c.bf16 %v2386, %v2386
        %v2883 = vpack.c.bf16 %v2393, %v2393
        %v2884 = vpack.c.bf16 %v2400, %v2400
        %v2885 = vpack.c.bf16 %v2407, %v2407
        %v2886 = vpack.c.bf16 %v2414, %v2414
        %v2887 = vpack.c.bf16 %v2421, %v2421
        %v2888 = vpack.c.bf16 %v2428, %v2428
        %v2889 = vpack.c.bf16 %v2435, %v2435
        %v2898 = vunpack.c.l.b16 %v2882
        %v2899 = vunpack.c.l.b16 %v2883
        %v2900 = vunpack.c.l.b16 %v2884
        %v2901 = vunpack.c.l.b16 %v2885
        %v2902 = vunpack.c.l.b16 %v2886
        %v2903 = vunpack.c.l.b16 %v2887
        %v2904 = vunpack.c.l.b16 %v2888
        %v2905 = vunpack.c.l.b16 %v2889
        %v2906 = vsel %vm1028, %v2899, %v2898
        %v2907 = vsel %vm1030, %v2900, %v2906
        %v2908 = vsel %vm1032, %v2901, %v2907
        %v2909 = vsel %vm1034, %v2902, %v2908
        %v2910 = vsel %vm1036, %v2903, %v2909
        %v2911 = vsel %vm1038, %v2904, %v2910
        %v2912 = vsel %vm1040, %v2905, %v2911
        %v2913 = vpack.c.b16 %v2912, %v2912
        %v2918 = vunpack.c.l.b16 %v2450
        %v2919 = vunpack.c.l.b16 %v2451
        %v2920 = vunpack.c.l.b16 %v2452
        %v2921 = vunpack.c.l.b16 %v2453
        %v2922 = vpack.c.b16 %v2919, %v2918
        %v2923 = vpack.c.b16 %v2921, %v2920
        %v2927 = vsel %vm630, %v2913, 0
        %2929 = vmatprep.subr.bf16.mxu0 0
        %2930 = vmatpush1.bf16.msra.mxu0 0
        %2931 = vmatprep.subr.bf16.mxu0 0
        %2932 = vmatpush1.bf16.msra.mxu0 0
        %2933 = vmatprep.subr.bf16.mxu0 0
        %2934 = vmatpush1.bf16.msra.mxu0 0
        %2935 = vmatprep.subr.bf16.mxu0 0
        %2936 = vmatpush1.bf16.msra.mxu0 0
        %2937 = vmatprep.subr.bf16.mxu0 0
        %2938 = vmatpush1.bf16.msra.mxu0 0
        %2939 = vmatprep.subr.bf16.mxu0 0
        %2940 = vmatpush1.bf16.msra.mxu0 0
        %2941 = vmatprep.subr.bf16.mxu0 0
        %2942 = vmatpush1.bf16.msra.mxu0 %v2923
        %2943 = vmatprep.subr.bf16.mxu0 0
        %2944 = vmatpush1.bf16.msra.mxu0 %v2922
        %2945 = vmatprep.subr.bf16.mxu0 0
        %2946 = vmatpush2.bf16.msra.mxu0 0
        %2947 = vmatprep.subr.bf16.mxu0 0
        %2948 = vmatpush2.bf16.msra.mxu0 0
        %2949 = vmatprep.subr.bf16.mxu0 0
        %2950 = vmatpush2.bf16.msra.mxu0 0
        %2951 = vmatprep.subr.bf16.mxu0 0
        %2952 = vmatpush2.bf16.msra.mxu0 0
        %2953 = vmatprep.subr.bf16.mxu0 0
        %2954 = vmatpush2.bf16.msra.mxu0 0
        %2955 = vmatprep.subr.bf16.mxu0 0
        %2956 = vmatpush2.bf16.msra.mxu0 0
        %2957 = vmatprep.subr.bf16.mxu0 0
        %2958 = vmatpush2.bf16.msra.mxu0 0
        %2959 = vmatprep.subr.bf16.mxu0 0
        %2960 = vmatpush2.bf16.msra.mxu0 0
        %2961 = vmatprep.mubr.bf16.mxu0 0
        %2962 = vmatmul.mubr.bf16.gmra.mxu0 %v2927
        %v2963 = vpop.f32.mrf.mxu0
        %v2964 = vadd.f32 0.0, %v2963
        %v2965 = vpop.f32.mrf.mxu0
        %v2966 = vpop.f32.mrf.mxu0
        %v2967 = vpop.f32.mrf.mxu0
        %2968 = vdwg.mxu0
        %v2973 = vunpack.c.l.b16 %v2446
        %v2974 = vunpack.c.l.b16 %v2447
        %v2975 = vunpack.c.l.b16 %v2448
        %v2976 = vunpack.c.l.b16 %v2449
        %v2977 = vpack.c.b16 %v2974, %v2973
        %v2978 = vpack.c.b16 %v2976, %v2975
        %v2982 = vsel %vm630, %v2878, 0
        %v2985 = vsel %vm630, %v2879, 0
        %v2988 = vsel %vm630, %v2880, 0
        %v2991 = vsel %vm630, %v2881, 0
        %2993 = vmatprep.subr.bf16.mxu0 0
        %2994 = vmatpush1.bf16.msra.mxu0 0
        %2995 = vmatprep.subr.bf16.mxu0 0
        %2996 = vmatpush1.bf16.msra.mxu0 0
        %2997 = vmatprep.subr.bf16.mxu0 0
        %2998 = vmatpush1.bf16.msra.mxu0 0
        %2999 = vmatprep.subr.bf16.mxu0 0
        %3000 = vmatpush1.bf16.msra.mxu0 0
        %3001 = vmatprep.subr.bf16.mxu0 0
        %3002 = vmatpush1.bf16.msra.mxu0 0
        %3003 = vmatprep.subr.bf16.mxu0 0
        %3004 = vmatpush1.bf16.msra.mxu0 0
        %3005 = vmatprep.subr.bf16.mxu0 0
        %3006 = vmatpush1.bf16.msra.mxu0 %v2978
        %3007 = vmatprep.subr.bf16.mxu0 0
        %3008 = vmatpush1.bf16.msra.mxu0 %v2977
        %3009 = vmatprep.subr.bf16.mxu0 0
        %3010 = vmatpush2.bf16.msra.mxu0 0
        %3011 = vmatprep.subr.bf16.mxu0 0
        %3012 = vmatpush2.bf16.msra.mxu0 0
        %3013 = vmatprep.subr.bf16.mxu0 0
        %3014 = vmatpush2.bf16.msra.mxu0 0
        %3015 = vmatprep.subr.bf16.mxu0 0
        %3016 = vmatpush2.bf16.msra.mxu0 0
        %3017 = vmatprep.subr.bf16.mxu0 0
        %3018 = vmatpush2.bf16.msra.mxu0 0
        %3019 = vmatprep.subr.bf16.mxu0 0
        %3020 = vmatpush2.bf16.msra.mxu0 0
        %3021 = vmatprep.subr.bf16.mxu0 0
        %3022 = vmatpush2.bf16.msra.mxu0 0
        %3023 = vmatprep.subr.bf16.mxu0 0
        %3024 = vmatpush2.bf16.msra.mxu0 0
        %3025 = vmatprep.mubr.bf16.mxu0 0
        %3026 = vmatmul.mubr.bf16.gmra.mxu0 %v2982
        %v3027 = vpop.f32.mrf.mxu0
        %v3028 = vadd.f32 %v2848, %v3027
        %v3029 = vpop.f32.mrf.mxu0
        %v3030 = vpop.f32.mrf.mxu0
        %v3031 = vadd.f32 %v2851, %v3030
        %v3032 = vpop.f32.mrf.mxu0
        %3033 = vmatprep.mubr.bf16.mxu0 0
        %3034 = vmatmul.mubr.bf16.gmra.mxu0 %v2985
        %v3035 = vpop.f32.mrf.mxu0
        %v3036 = vadd.f32 %v2856, %v3035
        %v3037 = vpop.f32.mrf.mxu0
        %v3038 = vpop.f32.mrf.mxu0
        %v3039 = vadd.f32 %v2859, %v3038
        %v3040 = vpop.f32.mrf.mxu0
        %3041 = vmatprep.mubr.bf16.mxu0 0
        %3042 = vmatmul.mubr.bf16.gmra.mxu0 %v2988
        %v3043 = vpop.f32.mrf.mxu0
        %v3044 = vadd.f32 %v2864, %v3043
        %v3045 = vpop.f32.mrf.mxu0
        %v3046 = vpop.f32.mrf.mxu0
        %v3047 = vadd.f32 %v2867, %v3046
        %v3048 = vpop.f32.mrf.mxu0
        %3049 = vmatprep.mubr.bf16.mxu0 0
        %3050 = vmatmul.mubr.bf16.gmra.mxu0 %v2991
        %v3051 = vpop.f32.mrf.mxu0
        %v3052 = vadd.f32 %v2872, %v3051
        %v3053 = vpop.f32.mrf.mxu0
        %v3054 = vpop.f32.mrf.mxu0
        %v3055 = vadd.f32 %v2875, %v3054
        %v3056 = vpop.f32.mrf.mxu0
        %3057 = vdwg.mxu0
        %v3059 = vcombine.high %v2964, %v2964
        %v3061 = vunpack.c.l.s4 1966171168
        %v3062 = vunpack.c.0.s8 %v3061
        %v3063 = vlaneseq
        %v3064 = vshrl.u32 %v3063, 7
        %v3065 = vsub.s32 %v3062, %v3064
        %v3066 = vrot.slane %v2964, %v3065
        %v3068 = vunpack.c.l.s4 1966171168
        %v3069 = vunpack.c.0.s8 %v3068
        %v3070 = vlaneseq
        %v3071 = vshrl.u32 %v3070, 7
        %v3072 = vsub.s32 %v3069, %v3071
        %v3073 = vrot.slane %v3059, %v3072
        %v3074 = vcombine.high %v3066, %v3066
        %v3075 = vcombine.high %v3073, %v3073
        %v3077 = vunpack.c.l.s4 1966171168
        %v3078 = vunpack.c.0.s8 %v3077
        %v3079 = vlaneseq
        %v3080 = vshrl.u32 %v3079, 7
        %v3081 = vsub.s32 %v3078, %v3080
        %v3082 = vrot.slane %v3066, %v3081
        %v3084 = vunpack.c.l.s4 1966171168
        %v3085 = vunpack.c.0.s8 %v3084
        %v3086 = vlaneseq
        %v3087 = vshrl.u32 %v3086, 7
        %v3088 = vsub.s32 %v3085, %v3087
        %v3089 = vrot.slane %v3073, %v3088
        %v3091 = vunpack.c.l.s4 1966171168
        %v3092 = vunpack.c.0.s8 %v3091
        %v3093 = vlaneseq
        %v3094 = vshrl.u32 %v3093, 7
        %v3095 = vsub.s32 %v3092, %v3094
        %v3096 = vrot.slane %v3074, %v3095
        %v3098 = vunpack.c.l.s4 1966171168
        %v3099 = vunpack.c.0.s8 %v3098
        %v3100 = vlaneseq
        %v3101 = vshrl.u32 %v3100, 7
        %v3102 = vsub.s32 %v3099, %v3101
        %v3103 = vrot.slane %v3075, %v3102
        %v3104 = vcombine.high %v3082, %v3082
        %v3105 = vcombine.high %v3089, %v3089
        %v3106 = vcombine.high %v3096, %v3096
        %v3107 = vcombine.high %v3103, %v3103
        %v3108 = vlaneseq
        %v3109 = vshrl.u32 %v3108, 7
        %v3110 = vsub.s32 0, %v3109
        %v3111 = vrot.slane %v3082, %v3110
        %v3112 = vlaneseq
        %v3113 = vshrl.u32 %v3112, 7
        %v3114 = vsub.s32 0, %v3113
        %v3115 = vrot.slane %v3096, %v3114
        %v3116 = vlaneseq
        %v3117 = vshrl.u32 %v3116, 7
        %v3118 = vsub.s32 0, %v3117
        %v3119 = vrot.slane %v3104, %v3118
        %v3120 = vlaneseq
        %v3121 = vshrl.u32 %v3120, 7
        %v3122 = vsub.s32 0, %v3121
        %v3123 = vrot.slane %v3106, %v3122
        %v3124 = vlaneseq
        %v3125 = vshrl.u32 %v3124, 7
        %v3126 = vsub.s32 0, %v3125
        %v3127 = vrot.slane %v3089, %v3126
        %v3128 = vlaneseq
        %v3129 = vshrl.u32 %v3128, 7
        %v3130 = vsub.s32 0, %v3129
        %v3131 = vrot.slane %v3103, %v3130
        %v3132 = vlaneseq
        %v3133 = vshrl.u32 %v3132, 7
        %v3134 = vsub.s32 0, %v3133
        %v3135 = vrot.slane %v3105, %v3134
        %v3136 = vlaneseq
        %v3137 = vshrl.u32 %v3136, 7
        %v3138 = vsub.s32 0, %v3137
        %v3139 = vrot.slane %v3107, %v3138
        %v3148 = vadd.f32 %v3028, %v3111
        %v3149 = vadd.f32 %v3031, %v3115
        %v3150 = vadd.f32 %v3036, %v3119
        %v3151 = vadd.f32 %v3039, %v3123
        %v3152 = vadd.f32 %v3044, %v3127
        %v3153 = vadd.f32 %v3047, %v3131
        %v3154 = vadd.f32 %v3052, %v3135
        %v3155 = vadd.f32 %v3055, %v3139
        %v3156 = vsel %vm630, %v3148, -inf
        %v3157 = vrot.slane %v3156, 4
        %v3158 = vmax.f32 %v3156, %v3157
        %v3159 = vrot.slane %v3158, 2
        %v3160 = vmax.f32 %v3158, %v3159
        %v3161 = vrot.slane %v3160, 1
        %v3162 = vmax.f32 %v3160, %v3161
        %v3163 = vsel %vm630, %v3149, -inf
        %v3164 = vrot.slane %v3163, 4
        %v3165 = vmax.f32 %v3163, %v3164
        %v3166 = vrot.slane %v3165, 2
        %v3167 = vmax.f32 %v3165, %v3166
        %v3168 = vrot.slane %v3167, 1
        %v3169 = vmax.f32 %v3167, %v3168
        %v3170 = vsel %vm630, %v3150, -inf
        %v3171 = vrot.slane %v3170, 4
        %v3172 = vmax.f32 %v3170, %v3171
        %v3173 = vrot.slane %v3172, 2
        %v3174 = vmax.f32 %v3172, %v3173
        %v3175 = vrot.slane %v3174, 1
        %v3176 = vmax.f32 %v3174, %v3175
        %v3177 = vsel %vm630, %v3151, -inf
        %v3178 = vrot.slane %v3177, 4
        %v3179 = vmax.f32 %v3177, %v3178
        %v3180 = vrot.slane %v3179, 2
        %v3181 = vmax.f32 %v3179, %v3180
        %v3182 = vrot.slane %v3181, 1
        %v3183 = vmax.f32 %v3181, %v3182
        %v3184 = vsel %vm630, %v3152, -inf
        %v3185 = vrot.slane %v3184, 4
        %v3186 = vmax.f32 %v3184, %v3185
        %v3187 = vrot.slane %v3186, 2
        %v3188 = vmax.f32 %v3186, %v3187
        %v3189 = vrot.slane %v3188, 1
        %v3190 = vmax.f32 %v3188, %v3189
        %v3191 = vsel %vm630, %v3153, -inf
        %v3192 = vrot.slane %v3191, 4
        %v3193 = vmax.f32 %v3191, %v3192
        %v3194 = vrot.slane %v3193, 2
        %v3195 = vmax.f32 %v3193, %v3194
        %v3196 = vrot.slane %v3195, 1
        %v3197 = vmax.f32 %v3195, %v3196
        %v3198 = vsel %vm630, %v3154, -inf
        %v3199 = vrot.slane %v3198, 4
        %v3200 = vmax.f32 %v3198, %v3199
        %v3201 = vrot.slane %v3200, 2
        %v3202 = vmax.f32 %v3200, %v3201
        %v3203 = vrot.slane %v3202, 1
        %v3204 = vmax.f32 %v3202, %v3203
        %v3205 = vsel %vm630, %v3155, -inf
        %v3206 = vrot.slane %v3205, 4
        %v3207 = vmax.f32 %v3205, %v3206
        %v3208 = vrot.slane %v3207, 2
        %v3209 = vmax.f32 %v3207, %v3208
        %v3210 = vrot.slane %v3209, 1
        %v3211 = vmax.f32 %v3209, %v3210
        %v3212 = vmax.f32 %v3162, 0.0
        %v3213 = vmax.f32 %v3169, 0.0
        %v3214 = vmax.f32 %v3176, 0.0
        %v3215 = vmax.f32 %v3183, 0.0
        %v3216 = vmax.f32 %v3190, 0.0
        %v3217 = vmax.f32 %v3197, 0.0
        %v3218 = vmax.f32 %v3204, 0.0
        %v3219 = vmax.f32 %v3211, 0.0
        %v3220 = vld [vmem:[%s8] sm:$0xf]
        %v3221 = vld [vmem:[%s8 + $0x4] sm:$0xf]
        %v3222 = vld [vmem:[%s8 + $0x8] sm:$0xf]
        %v3223 = vld [vmem:[%s8 + $0xc] sm:$0xf]
        %v3224 = vpack.c.bf16 %v3212, %v3212
        %v3225 = vpack.c.bf16 %v3213, %v3213
        %v3226 = vpack.c.bf16 %v3214, %v3214
        %v3227 = vpack.c.bf16 %v3215, %v3215
        %v3228 = vpack.c.bf16 %v3216, %v3216
        %v3229 = vpack.c.bf16 %v3217, %v3217
        %v3230 = vpack.c.bf16 %v3218, %v3218
        %v3231 = vpack.c.bf16 %v3219, %v3219
        %v3232 = vld [vmem:[%s9] sm:$0x1]
        %v3234 = vlaneseq
        %v3235 = vshrl.u32 %v3234, 7
        %v3236 = vsub.s32 0, %v3235
        %v3237 = vrot.slane %v3232, %v3236
        %v3247 = vunpack.c.l.b16 %v3224
        %v3248 = vunpack.c.l.b16 %v3225
        %v3249 = vunpack.c.l.b16 %v3226
        %v3250 = vunpack.c.l.b16 %v3227
        %v3251 = vunpack.c.l.b16 %v3228
        %v3252 = vunpack.c.l.b16 %v3229
        %v3253 = vunpack.c.l.b16 %v3230
        %v3254 = vunpack.c.l.b16 %v3231
        %v3255 = vsel %vm1028, %v3248, %v3247
        %v3256 = vsel %vm1030, %v3249, %v3255
        %v3257 = vsel %vm1032, %v3250, %v3256
        %v3258 = vsel %vm1034, %v3251, %v3257
        %v3259 = vsel %vm1036, %v3252, %v3258
        %v3260 = vsel %vm1038, %v3253, %v3259
        %v3261 = vsel %vm1040, %v3254, %v3260
        %v3262 = vpack.c.b16 %v3261, %v3261
        %v3267 = vunpack.c.l.b16 %v3220
        %v3268 = vunpack.c.l.b16 %v3221
        %v3269 = vunpack.c.l.b16 %v3222
        %v3270 = vunpack.c.l.b16 %v3223
        %v3271 = vpack.c.b16 %v3268, %v3267
        %v3272 = vpack.c.b16 %v3270, %v3269
        %v3276 = vsel %vm630, %v3262, 0
        %3278 = vmatprep.subr.bf16.mxu0 0
        %3279 = vmatpush1.bf16.msra.mxu0 0
        %3280 = vmatprep.subr.bf16.mxu0 0
        %3281 = vmatpush1.bf16.msra.mxu0 0
        %3282 = vmatprep.subr.bf16.mxu0 0
        %3283 = vmatpush1.bf16.msra.mxu0 0
        %3284 = vmatprep.subr.bf16.mxu0 0
        %3285 = vmatpush1.bf16.msra.mxu0 0
        %3286 = vmatprep.subr.bf16.mxu0 0
        %3287 = vmatpush1.bf16.msra.mxu0 0
        %3288 = vmatprep.subr.bf16.mxu0 0
        %3289 = vmatpush1.bf16.msra.mxu0 0
        %3290 = vmatprep.subr.bf16.mxu0 0
        %3291 = vmatpush1.bf16.msra.mxu0 %v3272
        %3292 = vmatprep.subr.bf16.mxu0 0
        %3293 = vmatpush1.bf16.msra.mxu0 %v3271
        %3294 = vmatprep.subr.bf16.mxu0 0
        %3295 = vmatpush2.bf16.msra.mxu0 0
        %3296 = vmatprep.subr.bf16.mxu0 0
        %3297 = vmatpush2.bf16.msra.mxu0 0
        %3298 = vmatprep.subr.bf16.mxu0 0
        %3299 = vmatpush2.bf16.msra.mxu0 0
        %3300 = vmatprep.subr.bf16.mxu0 0
        %3301 = vmatpush2.bf16.msra.mxu0 0
        %3302 = vmatprep.subr.bf16.mxu0 0
        %3303 = vmatpush2.bf16.msra.mxu0 0
        %3304 = vmatprep.subr.bf16.mxu0 0
        %3305 = vmatpush2.bf16.msra.mxu0 0
        %3306 = vmatprep.subr.bf16.mxu0 0
        %3307 = vmatpush2.bf16.msra.mxu0 0
        %3308 = vmatprep.subr.bf16.mxu0 0
        %3309 = vmatpush2.bf16.msra.mxu0 0
        %3310 = vmatprep.mubr.bf16.mxu0 0
        %3311 = vmatmul.mubr.bf16.gmra.mxu0 %v3276
        %v3312 = vpop.f32.mrf.mxu0
        %v3313 = vadd.f32 %v3237, %v3312
        %v3314 = vpop.f32.mrf.mxu0
        %v3315 = vpop.f32.mrf.mxu0
        %v3316 = vpop.f32.mrf.mxu0
        %3317 = vdwg.mxu0
        %vm3318 = vcmask 130048
        %3319 = vst.msk [vmem:[%s353] sm:$0xff] %vm3318, %v3313
        %s3320 = sand.u32 %s247, 1
        %s3321 = scalar_lea.sflag [#allocation3], %s3320
        %s3322 = sand.u32 %s247, 1
        %s3323 = smul.addr %s3322, 8
        %s3324 = scalar_lea.vmem [#allocation2], %s3323
        // Predicated region
        $region61: #{tpu_custom_call.1} parent=59 // pred_check
          %p3325 = pneg %p257
        $region62: #{tpu_custom_call.1} parent=59 // pred_check_branch
          %3327 = sbr.rel (%p3325) target = $region64
        $region63: #{tpu_custom_call.1} parent=59 // pred_region
          %s3329 = ssub.s32 128, 128
          %3330 = vsyncadd %s3321, %s3329
          %s3331 = smul.addr %s24, 128
          %s3332 = scalar_lea.hbm %s10, %s3331
          %s3334 = sshll.u32 %s3324, 4
          %s3335 = int_to_ptr.vmem [resolvable:$true] %s3334
          %3337 = dma.vmem_to_hbm [thread:$0]  %s3335, 128, %s3332, %s3321
        $region64: #{tpu_custom_call.1} parent=59 // pred_fallthru
          _
      $region60: #{tpu_custom_call.1} parent=5 // pred_fallthru
        _
      %p3338 = scmp.le.s32.totalorder 2, %s19
      // Predicated region
      $region65: #{tpu_custom_call.1} parent=5 // pred_check
        %p3339 = pneg %p3338
      $region66: #{tpu_custom_call.1} parent=5 // pred_check_branch
        %3341 = sbr.rel (%p3339) target = $region68
      $region67: #{tpu_custom_call.1} parent=5 // pred_region
        %s3342 = ssub.s32 %s19, 2
        // Predicated region
        $region69: #{tpu_custom_call.1} parent=67 // pred_check
          %p3343 = pneg %p263
        $region70: #{tpu_custom_call.1} parent=67 // pred_check_branch
          %3345 = sbr.rel (%p3343) target = $region72
        $region71: #{tpu_custom_call.1} parent=67 // pred_region
          %s3346 = sand.u32 %s248, 1
          %s3347 = scalar_lea.sflag [#allocation3], %s3346
          %s3348 = sand.u32 %s248, 1
          %s3349 = smul.addr %s3348, 8
          %s3350 = scalar_lea.vmem [#allocation2], %s3349
          %3351 = dma.done %s3347, 128
        $region72: #{tpu_custom_call.1} parent=67 // pred_fallthru
          _
      $region68: #{tpu_custom_call.1} parent=5 // pred_fallthru
        _
    $region6: #{tpu_custom_call.1} parent=1 // loop_footer
      %s23 = sadd.s32 1, %s19
    $region7: #{tpu_custom_call.1} parent=1 // loop_footer_branch
      %18 = sbr.rel target = $region3
    $region8: #{tpu_custom_call.1} parent=1 // loop_exit
      _
    %3352 = vsyncpa [#allocation3], 1
    %s3353 = scalar_lea.sflag [#allocation3], 1
    %3354 = vsyncpa %s3353, 1

</llo_original>
